<compile_context>
chip_gen: v7x
topology: tpu7x:2x2x1
jax: 0.10.0
libtpu: 0.0.40
codegen_flags: <defaults>
</compile_context>

<pallas_src>
import functools
import math

import jax
import jax.numpy as jnp
from jax import lax
from jax.experimental import pallas as pl
from jax.experimental.pallas import tpu as pltpu

_VMEM_LIMIT = 48 * 1024 * 1024    # explicit scoped-VMEM budget (< 64 MiB physical on v7x)
_MATMUL_ROW_TILE = 256            # row tile for LN+matmul kernels (weights + acts stay < ~20 MiB)
_ELEMWISE_ROW_TILE = 512          # row tile for the pure LayerNorm kernel (mem-bound)
_SEQ_TILE = 128                   # q / kv sequence tile for flash attention
_FFN_HIDDEN_TILE = 512            # d_ff tile for the FFN kernel
_GELU_C = math.sqrt(2.0 / math.pi)


# ----------------------------------------------------------------------------
# Pallas kernels
# ----------------------------------------------------------------------------
def layernorm_kernel(x_ref, g_ref, b_ref, o_ref):
    # x_ref: (tn, D) ; g_ref/b_ref: (1, D)
    x = x_ref[...]
    mu = jnp.mean(x, axis=-1, keepdims=True)
    var = jnp.mean((x - mu) ** 2, axis=-1, keepdims=True)
    o_ref[...] = (x - mu) * lax.rsqrt(var + 1e-6) * g_ref[...] + b_ref[...]


def ln_proj_kernel(x_ref, g_ref, b_ref, w_ref, bias_ref, *o_refs, n_splits, emit_norm):
    # Row-tiled LayerNorm + fused projection; splits the (tn, n_splits*Do)
    # result into n_splits bf16 outputs.  Optionally emits the LN output.
    x = x_ref[...]
    mu = jnp.mean(x, axis=-1, keepdims=True)
    var = jnp.mean((x - mu) ** 2, axis=-1, keepdims=True)
    xn = (x - mu) * lax.rsqrt(var + 1e-6) * g_ref[...] + b_ref[...]
    base = 0
    if emit_norm:
        o_refs[0][...] = xn
        base = 1
    y = jnp.dot(xn.astype(jnp.bfloat16), w_ref[...],
                preferred_element_type=jnp.float32) + bias_ref[...]
    do = y.shape[-1] // n_splits
    for i in range(n_splits):
        o_refs[base + i][...] = y[:, i * do:(i + 1) * do].astype(jnp.bfloat16)


def proj_split_kernel(x_ref, w_ref, bias_ref, *o_refs, n_splits):
    # Row-tiled projection (no LayerNorm), split into n_splits bf16 outputs.
    y = jnp.dot(x_ref[...].astype(jnp.bfloat16), w_ref[...],
                preferred_element_type=jnp.float32) + bias_ref[...]
    do = y.shape[-1] // n_splits
    for i in range(n_splits):
        o_refs[i][...] = y[:, i * do:(i + 1) * do].astype(jnp.bfloat16)


def flash_attn_kernel(pad_ref, x_ref, q_ref, k_ref, v_ref, wo_ref, bo_ref,
                      out_ref, m_sc, l_sc, acc_sc, *, heads, causal, kv_len):
    # grid = (B, n_q_tiles, n_kv_tiles); last axis is the online-softmax
    # reduction ("arbitrary").  Epilogue at the last kv tile applies the exact
    # per-head normalization, the Wo projection (bf16 MXU, f32 acc), bias and
    # the residual from x_ref.
    qi = pl.program_id(1)
    ki = pl.program_id(2)

    @pl.when(ki == 0)
    def _init():
        m_sc[...] = jnp.full(m_sc.shape, -jnp.inf, jnp.float32)
        l_sc[...] = jnp.zeros(l_sc.shape, jnp.float32)
        acc_sc[...] = jnp.zeros(acc_sc.shape, jnp.float32)

    q = q_ref[0]                                   # (tq, D) bf16
    k = k_ref[0]                                   # (tk, D) bf16
    v = v_ref[0]                                   # (tk, D) bf16
    tq, D = q.shape
    tk = k.shape[0]
    dh = D // heads
    scale = 1.0 / math.sqrt(dh)

    # Mask built once, shared by all heads: key padding (+ causal, rebuilt
    # in-kernel from iota with global tile offsets -- no (B,T,S) HBM mask).
    col = ki * tk + lax.broadcasted_iota(jnp.int32, (tq, tk), 1)
    masked = jnp.broadcast_to(pad_ref[0] > 0.0, (tq, tk))
    if causal:
        row = qi * tq + lax.broadcasted_iota(jnp.int32, (tq, tk), 0)
        masked = masked | (col > row)
    ragged = (kv_len % tk) != 0                    # static: only for ragged kv edges
    if ragged:
        oob = col >= kv_len
        masked = masked | oob
        v_valid = (ki * tk + lax.broadcasted_iota(jnp.int32, (tk, 1), 0)) < kv_len
        v = jnp.where(v_valid, v, 0)

    # Static per-head loop; running max / denom / context live in VMEM scratch.
    for h in range(heads):
        lo, hi = h * dh, (h + 1) * dh
        s = lax.dot_general(q[:, lo:hi], k[:, lo:hi], (((1,), (1,)), ((), ())),
                            preferred_element_type=jnp.float32) * scale      # (tq, tk)
        s = jnp.where(masked, jnp.float32(-1e18), s)
        m_prev = m_sc[:, h:h + 1]
        m_new = jnp.maximum(m_prev, jnp.max(s, axis=-1, keepdims=True))
        alpha = jnp.exp(m_prev - m_new)
        p = jnp.exp(s - m_new)
        if ragged:
            p = jnp.where(oob, 0.0, p)             # fabricated edge keys never contribute
        l_sc[:, h:h + 1] = alpha * l_sc[:, h:h + 1] + jnp.sum(p, axis=-1, keepdims=True)
        acc_sc[:, lo:hi] = alpha * acc_sc[:, lo:hi] + jnp.dot(
            p.astype(jnp.bfloat16), v[:, lo:hi], preferred_element_type=jnp.float32)
        m_sc[:, h:h + 1] = m_new

    @pl.when(ki == pl.num_programs(2) - 1)
    def _finalize():
        for h in range(heads):
            lo, hi = h * dh, (h + 1) * dh
            acc_sc[:, lo:hi] = acc_sc[:, lo:hi] / l_sc[:, h:h + 1]   # exact normalization
        out = jnp.dot(acc_sc[...].astype(jnp.bfloat16), wo_ref[...],
                      preferred_element_type=jnp.float32) + bo_ref[...]
        out_ref[0] = out + x_ref[0]                                   # residual


def ffn_kernel(x_ref, g_ref, b_ref, w1_ref, b1_ref, w2_ref, b2_ref, o_ref,
               xn_ref, acc_ref):
    # grid = (n_row_tiles, n_hidden_tiles); hidden (d_ff) axis is the
    # reduction.  LN output and the partial second-matmul result live in VMEM
    # scratch so weight residency is bounded by the d_ff tile.
    j = pl.program_id(1)

    @pl.when(j == 0)
    def _init():
        x = x_ref[...]
        mu = jnp.mean(x, axis=-1, keepdims=True)
        var = jnp.mean((x - mu) ** 2, axis=-1, keepdims=True)
        xn_ref[...] = (x - mu) * lax.rsqrt(var + 1e-6) * g_ref[...] + b_ref[...]
        acc_ref[...] = jnp.zeros(acc_ref.shape, jnp.float32)

    h = jnp.dot(xn_ref[...].astype(jnp.bfloat16), w1_ref[...],
                preferred_element_type=jnp.float32) + b1_ref[...]
    # tanh-approx GELU (matches the reference `gelu`), f32 (v5e-safe)
    h = 0.5 * h * (1.0 + jnp.tanh(_GELU_C * (h + 0.044715 * h * h * h)))
    acc_ref[...] += jnp.dot(h.astype(jnp.bfloat16), w2_ref[...],
                            preferred_element_type=jnp.float32)

    @pl.when(j == pl.num_programs(1) - 1)
    def _finalize():
        o_ref[...] = acc_ref[...] + b2_ref[...] + x_ref[...]          # residual


# ----------------------------------------------------------------------------
# Wrappers around pallas_call
# ----------------------------------------------------------------------------
def _row_tile(n, cap):
    return n if n <= cap else cap


def layernorm(x, g, b):
    B, T, D = x.shape
    N = B * T
    tn = _row_tile(N, _ELEMWISE_ROW_TILE)
    out = pl.pallas_call(
        layernorm_kernel,
        out_shape=jax.ShapeDtypeStruct((N, D), jnp.float32),
        grid=(pl.cdiv(N, tn),),
        in_specs=[pl.BlockSpec((tn, D), lambda i: (i, 0)),
                  pl.BlockSpec((1, D), lambda i: (0, 0)),
                  pl.BlockSpec((1, D), lambda i: (0, 0))],
        out_specs=pl.BlockSpec((tn, D), lambda i: (i, 0)),
        compiler_params=pltpu.CompilerParams(
            dimension_semantics=("parallel",), vmem_limit_bytes=_VMEM_LIMIT),
    )(x.reshape(N, D), g, b)
    return out.reshape(B, T, D)


def ln_proj(x2d, g, b, w, bias, *, n_splits, emit_norm):
    """Row-tiled LayerNorm + fused projection; returns (norm?, split_0, ...)."""
    N, D = x2d.shape
    do = w.shape[1] // n_splits
    tn = _row_tile(N, _MATMUL_ROW_TILE)
    out_shape, out_specs = [], []
    if emit_norm:
        out_shape.append(jax.ShapeDtypeStruct((N, D), jnp.float32))
        out_specs.append(pl.BlockSpec((tn, D), lambda i: (i, 0)))
    for _ in range(n_splits):
        out_shape.append(jax.ShapeDtypeStruct((N, do), jnp.bfloat16))
        out_specs.append(pl.BlockSpec((tn, do), lambda i: (i, 0)))
    return pl.pallas_call(
        functools.partial(ln_proj_kernel, n_splits=n_splits, emit_norm=emit_norm),
        out_shape=tuple(out_shape),
        grid=(pl.cdiv(N, tn),),
        in_specs=[pl.BlockSpec((tn, D), lambda i: (i, 0)),
                  pl.BlockSpec((1, D), lambda i: (0, 0)),
                  pl.BlockSpec((1, D), lambda i: (0, 0)),
                  pl.BlockSpec(w.shape, lambda i: (0, 0)),
                  pl.BlockSpec(bias.shape, lambda i: (0, 0))],
        out_specs=tuple(out_specs),
        compiler_params=pltpu.CompilerParams(
            dimension_semantics=("parallel",), vmem_limit_bytes=_VMEM_LIMIT),
    )(x2d, g, b, w, bias)


def proj_split(x2d, w, bias, *, n_splits):
    """Row-tiled projection of the memory bank into bf16 K / V streams."""
    N, D = x2d.shape
    do = w.shape[1] // n_splits
    tn = _row_tile(N, _MATMUL_ROW_TILE)
    return pl.pallas_call(
        functools.partial(proj_split_kernel, n_splits=n_splits),
        out_shape=tuple(jax.ShapeDtypeStruct((N, do), jnp.bfloat16)
                        for _ in range(n_splits)),
        grid=(pl.cdiv(N, tn),),
        in_specs=[pl.BlockSpec((tn, D), lambda i: (i, 0)),
                  pl.BlockSpec(w.shape, lambda i: (0, 0)),
                  pl.BlockSpec(bias.shape, lambda i: (0, 0))],
        out_specs=tuple(pl.BlockSpec((tn, do), lambda i: (i, 0))
                        for _ in range(n_splits)),
        compiler_params=pltpu.CompilerParams(
            dimension_semantics=("parallel",), vmem_limit_bytes=_VMEM_LIMIT),
    )(x2d, w, bias)


def flash_attention(x, q, k, v, pad, wo, bo, *, heads, causal):
    """Flash-style attention + Wo + residual.

    x:   (B, T, D) f32 residual stream (pre-LN layer input / query residual)
    q:   (B, T, D) bf16 projected queries
    k,v: (B, S, D) bf16 projected keys / values
    pad: (B, 1, S) f32 key-padding mask (>0 == masked key)
    """
    B, T, D = x.shape
    S = k.shape[1]
    assert D % heads == 0
    tq = _row_tile(T, _SEQ_TILE)
    tk = _row_tile(S, _SEQ_TILE)
    grid = (B, pl.cdiv(T, tq), pl.cdiv(S, tk))
    kernel = functools.partial(flash_attn_kernel, heads=heads, causal=causal,
                               kv_len=S)
    return pl.pallas_call(
        kernel,
        out_shape=jax.ShapeDtypeStruct((B, T, D), jnp.float32),
        grid=grid,
        in_specs=[pl.BlockSpec((1, 1, tk), lambda b, i, j: (b, 0, j)),
                  pl.BlockSpec((1, tq, D), lambda b, i, j: (b, i, 0)),
                  pl.BlockSpec((1, tq, D), lambda b, i, j: (b, i, 0)),
                  pl.BlockSpec((1, tk, D), lambda b, i, j: (b, j, 0)),
                  pl.BlockSpec((1, tk, D), lambda b, i, j: (b, j, 0)),
                  pl.BlockSpec((D, D), lambda b, i, j: (0, 0)),
                  pl.BlockSpec((1, D), lambda b, i, j: (0, 0))],
        out_specs=pl.BlockSpec((1, tq, D), lambda b, i, j: (b, i, 0)),
        scratch_shapes=[pltpu.VMEM((tq, heads), jnp.float32),   # running max
                        pltpu.VMEM((tq, heads), jnp.float32),   # running denom
                        pltpu.VMEM((tq, D), jnp.float32)],      # context accumulator
        compiler_params=pltpu.CompilerParams(
            dimension_semantics=("parallel", "parallel", "arbitrary"),
            vmem_limit_bytes=_VMEM_LIMIT),
    )(pad, x, q, k, v, wo, bo)


def ffn(x, p):
    B, T, D = x.shape
    F = p["w1"].shape[1]
    N = B * T
    tn = _row_tile(N, _MATMUL_ROW_TILE)
    tf = _row_tile(F, _FFN_HIDDEN_TILE)
    if F % tf != 0:
        tf = F   # TODO(synk): ragged d_ff tiling; realistic d_ff is a multiple of 512
    out = pl.pallas_call(
        ffn_kernel,
        out_shape=jax.ShapeDtypeStruct((N, D), jnp.float32),
        grid=(pl.cdiv(N, tn), F // tf),
        in_specs=[pl.BlockSpec((tn, D), lambda i, j: (i, 0)),
                  pl.BlockSpec((1, D), lambda i, j: (0, 0)),
                  pl.BlockSpec((1, D), lambda i, j: (0, 0)),
                  pl.BlockSpec((D, tf), lambda i, j: (0, j)),
                  pl.BlockSpec((1, tf), lambda i, j: (0, j)),
                  pl.BlockSpec((tf, D), lambda i, j: (j, 0)),
                  pl.BlockSpec((1, D), lambda i, j: (0, 0))],
        out_specs=pl.BlockSpec((tn, D), lambda i, j: (i, 0)),
        scratch_shapes=[pltpu.VMEM((tn, D), jnp.float32),        # LN output
                        pltpu.VMEM((tn, D), jnp.float32)],       # output accumulator
        compiler_params=pltpu.CompilerParams(
            dimension_semantics=("parallel", "arbitrary"),
            vmem_limit_bytes=_VMEM_LIMIT),
    )(x.reshape(N, D), p["ln_g"], p["ln_b"], p["w1"], p["b1"], p["w2"], p["b2"])
    return out.reshape(B, T, D)


# ----------------------------------------------------------------------------
# Parameter init + full forward (glue)
# ----------------------------------------------------------------------------
def make_pe(max_len, dim):
    position = jnp.arange(max_len, dtype=jnp.float32)[:, None]
    div_term = jnp.exp(jnp.arange(0, dim, 2, dtype=jnp.float32)
                       * -(math.log(10000.0) / dim))
    pe = jnp.zeros((max_len, dim), jnp.float32)
    pe = pe.at[:, 0::2].set(jnp.sin(position * div_term))
    pe = pe.at[:, 1::2].set(jnp.cos(position * div_term))
    return pe


def init_params(key, *, vocab, d_model, d_ff, heads, num_layers, padding_idx):
    D = d_model

    def nrm(k, shape, scale=0.02):
        return (scale * jax.random.normal(k, shape)).astype(jnp.float32)

    def bf16(x):
        return x.astype(jnp.bfloat16)          # matmul weights stored in bf16

    keys = jax.random.split(key, 1 + num_layers)
    emb = nrm(keys[0], (vocab, D), 1.0)
    emb = emb.at[padding_idx].set(0.0)          # nn.Embedding padding_idx row = 0

    layers = []
    for i in range(num_layers):
        ks = jax.random.split(keys[1 + i], 10)
        layers.append({
            "ln1_g": jnp.ones((1, D), jnp.float32), "ln1_b": jnp.zeros((1, D), jnp.float32),
            "ln2_g": jnp.ones((1, D), jnp.float32), "ln2_b": jnp.zeros((1, D), jnp.float32),
            "self": {
                "wqkv": bf16(jnp.concatenate(
                    [nrm(ks[0], (D, D)), nrm(ks[1], (D, D)), nrm(ks[2], (D, D))], axis=1)),
                "bqkv": jnp.zeros((1, 3 * D), jnp.float32),
                "wo": bf16(nrm(ks[3], (D, D))), "bo": jnp.zeros((1, D), jnp.float32)},
            "ctx": {
                "wq": bf16(nrm(ks[4], (D, D))), "bq": jnp.zeros((1, D), jnp.float32),
                "wkv": bf16(jnp.concatenate(
                    [nrm(ks[5], (D, D)), nrm(ks[6], (D, D))], axis=1)),
                "bkv": jnp.zeros((1, 2 * D), jnp.float32),
                "wo": bf16(nrm(ks[7], (D, D))), "bo": jnp.zeros((1, D), jnp.float32)},
            "ffn": {
                "ln_g": jnp.ones((1, D), jnp.float32), "ln_b": jnp.zeros((1, D), jnp.float32),
                "w1": bf16(nrm(ks[8], (D, d_ff))), "b1": jnp.zeros((1, d_ff), jnp.float32),
                "w2": bf16(nrm(ks[9], (d_ff, D))), "b2": jnp.zeros((1, D), jnp.float32)},
        })
    return {"emb": emb, "layers": layers,
            "lnf_g": jnp.ones((1, D), jnp.float32),
            "lnf_b": jnp.zeros((1, D), jnp.float32)}


def transformer_decoder_forward(tgt, src, memory_bank, params, *,
                                num_layers, heads, padding_idx=0,
                                return_saved_inputs=True):
    """Mirrors TransformerDecoder.forward (state.cache is None, step=None)."""
    B, T = tgt.shape
    S = src.shape[1]
    D = params["emb"].shape[1]

    # embeddings + positional encoding (dropout = identity)
    emb = params["emb"][tgt]                                   # (B, T, D)
    pe = make_pe(T, D)                                         # (T, D)
    output = emb * math.sqrt(D) + pe[None, :, :]

    # only tiny pad vectors cross HBM; causal mask is rebuilt inside the kernel
    tgt_pad = (tgt == padding_idx).astype(jnp.float32).reshape(B, 1, T)
    src_pad = (src == padding_idx).astype(jnp.float32).reshape(B, 1, S)

    mem2d = memory_bank.reshape(B * S, D)

    saved_inputs = []
    for i in range(num_layers):
        lp = params["layers"][i]
        sp, cp, fp = lp["self"], lp["ctx"], lp["ffn"]

        # --- fused LN1 + QKV projection (bf16 hand-off), norm = all_input ---
        x2d = output.reshape(B * T, D)
        outs = ln_proj(x2d, lp["ln1_g"], lp["ln1_b"], sp["wqkv"], sp["bqkv"],
                       n_splits=3, emit_norm=return_saved_inputs)
        if return_saved_inputs:
            norm2d, q2d, k2d, v2d = outs
            saved_inputs.append(norm2d.reshape(B, T, D))
        else:
            q2d, k2d, v2d = outs

        # --- flash self-attention (causal + tgt key padding) + Wo + residual ---
        query = flash_attention(output,
                                q2d.reshape(B, T, D), k2d.reshape(B, T, D),
                                v2d.reshape(B, T, D), tgt_pad,
                                sp["wo"], sp["bo"], heads=heads, causal=True)

        # --- fused LN2 + Q projection ; memory-bank KV projection ---
        (q_ctx2d,) = ln_proj(query.reshape(B * T, D), lp["ln2_g"], lp["ln2_b"],
                             cp["wq"], cp["bq"], n_splits=1, emit_norm=False)
        km2d, vm2d = proj_split(mem2d, cp["wkv"], cp["bkv"], n_splits=2)

        # --- flash context attention (src key padding) + Wo + residual ---
        mid = flash_attention(query,
                              q_ctx2d.reshape(B, T, D), km2d.reshape(B, S, D),
                              vm2d.reshape(B, S, D), src_pad,
                              cp["wo"], cp["bo"], heads=heads, causal=False)

        # --- fused LN + FFN (+ residual), hidden dim tiled into the grid ---
        output = ffn(mid, fp)

    output = layernorm(output, params["lnf_g"], params["lnf_b"])
    if return_saved_inputs:
        saved = jnp.stack(saved_inputs)                        # (num_layers, B, T, D)
        return output, saved
    return output


# ----------------------------------------------------------------------------
if __name__ == "__main__":
    B, T, S = 2, 8, 16
    D_MODEL, HEADS, D_FF, NUM_LAYERS = 32, 4, 64, 2
    VOCAB, PAD = 50, 0

    key = jax.random.PRNGKey(0)
    k_par, k_tgt, k_src, k_mem = jax.random.split(key, 4)

    params = init_params(k_par, vocab=VOCAB, d_model=D_MODEL, d_ff=D_FF,
                         heads=HEADS, num_layers=NUM_LAYERS, padding_idx=PAD)

    tgt = jax.random.randint(k_tgt, (B, T), 1, VOCAB, dtype=jnp.int32)
    tgt = tgt.at[1, -2:].set(PAD)                              # some target padding
    src = jax.random.randint(k_src, (B, S), 1, VOCAB, dtype=jnp.int32)
    src = src.at[0, -3:].set(PAD)                              # some source padding
    memory_bank = jax.random.normal(k_mem, (B, S, D_MODEL), dtype=jnp.float32)

    fwd = jax.jit(functools.partial(transformer_decoder_forward,
                                    num_layers=NUM_LAYERS, heads=HEADS,
                                    padding_idx=PAD))
    out, saved = fwd(tgt, src, memory_bank, params)

    jax.block_until_ready(out)
    jax.block_until_ready(saved)
    assert out.shape == (B, T, D_MODEL)
    assert saved.shape == (NUM_LAYERS, B, T, D_MODEL)
    assert bool(jnp.all(jnp.isfinite(out)))
    print("KERNEL_OK")
</pallas_src>

<mosaic_0001>
module attributes {stable_mosaic.version = 11 : i64} {
  func.func @ln_proj_kernel(%arg0: i32, %arg1: memref<16x32xf32, #tpu.memory_space<vmem>>, %arg2: memref<1x32xf32, #tpu.memory_space<vmem>>, %arg3: memref<1x32xf32, #tpu.memory_space<vmem>>, %arg4: memref<32x32xbf16, #tpu.memory_space<vmem>>, %arg5: memref<1x32xf32, #tpu.memory_space<vmem>>, %arg6: memref<16x32xbf16, #tpu.memory_space<vmem>>) attributes {dimension_semantics = [#tpu.dimension_semantics<parallel>], iteration_bounds = array<i64: 1>, scalar_prefetch = 0 : i64, scratch_operands = 0 : i64, tpu.core_type = #tpu.core_type<tc>, window_params = [{transform_indices = @transform_0, window_bounds = array<i64: 16, 32>}, {pipeline_mode = #tpu.pipeline_mode<synchronous>, transform_indices = @transform_1, window_bounds = array<i64: 1, 32>}, {pipeline_mode = #tpu.pipeline_mode<synchronous>, transform_indices = @transform_2, window_bounds = array<i64: 1, 32>}, {pipeline_mode = #tpu.pipeline_mode<synchronous>, transform_indices = @transform_3, window_bounds = array<i64: 32, 32>}, {pipeline_mode = #tpu.pipeline_mode<synchronous>, transform_indices = @transform_4, window_bounds = array<i64: 1, 32>}, {transform_indices = @transform_5, window_bounds = array<i64: 16, 32>}]} {
    %c0 = arith.constant 0 : index
    %c0_0 = arith.constant 0 : index
    %0 = vector.load %arg1[%c0, %c0_0] : memref<16x32xf32, #tpu.memory_space<vmem>>, vector<16x32xf32>
    %cst = arith.constant dense<0.000000e+00> : vector<16xf32>
    %1 = vector.multi_reduction <add>, %0, %cst [1] : vector<16x32xf32> to vector<16xf32>
    %2 = vector.shape_cast %1 : vector<16xf32> to vector<16x1xf32>
    %cst_1 = arith.constant 3.200000e+01 : f32
    %3 = vector.broadcast %cst_1 : f32 to vector<16x1xf32>
    %4 = arith.divf %2, %3 : vector<16x1xf32>
    %5 = vector.broadcast %4 : vector<16x1xf32> to vector<16x32xf32>
    %6 = arith.subf %0, %5 : vector<16x32xf32>
    %7 = arith.mulf %6, %6 : vector<16x32xf32>
    %cst_2 = arith.constant dense<0.000000e+00> : vector<16xf32>
    %8 = vector.multi_reduction <add>, %7, %cst_2 [1] : vector<16x32xf32> to vector<16xf32>
    %9 = vector.shape_cast %8 : vector<16xf32> to vector<16x1xf32>
    %cst_3 = arith.constant 3.200000e+01 : f32
    %10 = vector.broadcast %cst_3 : f32 to vector<16x1xf32>
    %11 = arith.divf %9, %10 : vector<16x1xf32>
    %12 = vector.broadcast %4 : vector<16x1xf32> to vector<16x32xf32>
    %13 = arith.subf %0, %12 : vector<16x32xf32>
    %cst_4 = arith.constant 9.99999997E-7 : f32
    %14 = vector.broadcast %cst_4 : f32 to vector<16x1xf32>
    %15 = arith.addf %11, %14 : vector<16x1xf32>
    %16 = math.rsqrt %15 : vector<16x1xf32>
    %17 = vector.broadcast %16 : vector<16x1xf32> to vector<16x32xf32>
    %18 = arith.mulf %13, %17 : vector<16x32xf32>
    %c0_5 = arith.constant 0 : index
    %c0_6 = arith.constant 0 : index
    %19 = vector.load %arg2[%c0_5, %c0_6] : memref<1x32xf32, #tpu.memory_space<vmem>>, vector<1x32xf32>
    %20 = vector.broadcast %19 : vector<1x32xf32> to vector<16x32xf32>
    %21 = arith.mulf %18, %20 : vector<16x32xf32>
    %c0_7 = arith.constant 0 : index
    %c0_8 = arith.constant 0 : index
    %22 = vector.load %arg3[%c0_7, %c0_8] : memref<1x32xf32, #tpu.memory_space<vmem>>, vector<1x32xf32>
    %23 = vector.broadcast %22 : vector<1x32xf32> to vector<16x32xf32>
    %24 = arith.addf %21, %23 : vector<16x32xf32>
    %25 = arith.truncf %24 : vector<16x32xf32> to vector<16x32xbf16>
    %c0_9 = arith.constant 0 : index
    %c0_10 = arith.constant 0 : index
    %26 = vector.load %arg4[%c0_9, %c0_10] : memref<32x32xbf16, #tpu.memory_space<vmem>>, vector<32x32xbf16>
    %cst_11 = arith.constant dense<0.000000e+00> : vector<16x32xf32>
    %27 = tpu.matmul %25, %26, %cst_11 {dimension_numbers = #tpu.dot_dimension_numbers<[1], [0], [0], [1], [0, 0, 1, 1], [], []>} : vector<16x32xbf16>, vector<32x32xbf16>, vector<16x32xf32> -> vector<16x32xf32>
    %c0_12 = arith.constant 0 : index
    %c0_13 = arith.constant 0 : index
    %28 = vector.load %arg5[%c0_12, %c0_13] : memref<1x32xf32, #tpu.memory_space<vmem>>, vector<1x32xf32>
    %29 = vector.broadcast %28 : vector<1x32xf32> to vector<16x32xf32>
    %30 = arith.addf %27, %29 : vector<16x32xf32>
    %31 = arith.truncf %30 : vector<16x32xf32> to vector<16x32xbf16>
    %c0_14 = arith.constant 0 : index
    %c0_15 = arith.constant 0 : index
    %32 = vector.load %arg6[%c0_14, %c0_15] : memref<16x32xbf16, #tpu.memory_space<vmem>>, vector<16x32xbf16>
    tpu.vector_store %arg6[%c0_14, %c0_15], %31 {strides = array<i32>} : memref<16x32xbf16, #tpu.memory_space<vmem>>, vector<16x32xbf16>,
    return
  }
  func.func @transform_0(%arg0: i32) -> (i32, i32) {
    %c0_i32 = arith.constant 0 : i32
    %c0_i32_0 = arith.constant 0 : i32
    return %arg0, %c0_i32 : i32, i32
  }
  func.func @transform_1(%arg0: i32) -> (i32, i32) {
    %c0_i32 = arith.constant 0 : i32
    %c0_i32_0 = arith.constant 0 : i32
    %c0_i32_1 = arith.constant 0 : i32
    return %c0_i32, %c0_i32_0 : i32, i32
  }
  func.func @transform_2(%arg0: i32) -> (i32, i32) {
    %c0_i32 = arith.constant 0 : i32
    %c0_i32_0 = arith.constant 0 : i32
    %c0_i32_1 = arith.constant 0 : i32
    return %c0_i32, %c0_i32_0 : i32, i32
  }
  func.func @transform_3(%arg0: i32) -> (i32, i32) {
    %c0_i32 = arith.constant 0 : i32
    %c0_i32_0 = arith.constant 0 : i32
    %c0_i32_1 = arith.constant 0 : i32
    return %c0_i32, %c0_i32_0 : i32, i32
  }
  func.func @transform_4(%arg0: i32) -> (i32, i32) {
    %c0_i32 = arith.constant 0 : i32
    %c0_i32_0 = arith.constant 0 : i32
    %c0_i32_1 = arith.constant 0 : i32
    return %c0_i32, %c0_i32_0 : i32, i32
  }
  func.func @transform_5(%arg0: i32) -> (i32, i32) {
    %c0_i32 = arith.constant 0 : i32
    %c0_i32_0 = arith.constant 0 : i32
    return %arg0, %c0_i32 : i32, i32
  }
}

module attributes {stable_mosaic.version = 11 : i64} {
  func.func @ln_proj_kernel(%arg0: i32, %arg1: memref<16x32xf32, #tpu.memory_space<vmem>>, %arg2: memref<1x32xf32, #tpu.memory_space<vmem>>, %arg3: memref<1x32xf32, #tpu.memory_space<vmem>>, %arg4: memref<32x96xbf16, #tpu.memory_space<vmem>>, %arg5: memref<1x96xf32, #tpu.memory_space<vmem>>, %arg6: memref<16x32xf32, #tpu.memory_space<vmem>>, %arg7: memref<16x32xbf16, #tpu.memory_space<vmem>>, %arg8: memref<16x32xbf16, #tpu.memory_space<vmem>>, %arg9: memref<16x32xbf16, #tpu.memory_space<vmem>>) attributes {dimension_semantics = [#tpu.dimension_semantics<parallel>], iteration_bounds = array<i64: 1>, scalar_prefetch = 0 : i64, scratch_operands = 0 : i64, tpu.core_type = #tpu.core_type<tc>, window_params = [{transform_indices = @transform_0, window_bounds = array<i64: 16, 32>}, {pipeline_mode = #tpu.pipeline_mode<synchronous>, transform_indices = @transform_1, window_bounds = array<i64: 1, 32>}, {pipeline_mode = #tpu.pipeline_mode<synchronous>, transform_indices = @transform_2, window_bounds = array<i64: 1, 32>}, {pipeline_mode = #tpu.pipeline_mode<synchronous>, transform_indices = @transform_3, window_bounds = array<i64: 32, 96>}, {pipeline_mode = #tpu.pipeline_mode<synchronous>, transform_indices = @transform_4, window_bounds = array<i64: 1, 96>}, {transform_indices = @transform_5, window_bounds = array<i64: 16, 32>}, {transform_indices = @transform_6, window_bounds = array<i64: 16, 32>}, {transform_indices = @transform_7, window_bounds = array<i64: 16, 32>}, {transform_indices = @transform_8, window_bounds = array<i64: 16, 32>}]} {
    %c0 = arith.constant 0 : index
    %c0_0 = arith.constant 0 : index
    %0 = vector.load %arg1[%c0, %c0_0] : memref<16x32xf32, #tpu.memory_space<vmem>>, vector<16x32xf32>
    %cst = arith.constant dense<0.000000e+00> : vector<16xf32>
    %1 = vector.multi_reduction <add>, %0, %cst [1] : vector<16x32xf32> to vector<16xf32>
    %2 = vector.shape_cast %1 : vector<16xf32> to vector<16x1xf32>
    %cst_1 = arith.constant 3.200000e+01 : f32
    %3 = vector.broadcast %cst_1 : f32 to vector<16x1xf32>
    %4 = arith.divf %2, %3 : vector<16x1xf32>
    %5 = vector.broadcast %4 : vector<16x1xf32> to vector<16x32xf32>
    %6 = arith.subf %0, %5 : vector<16x32xf32>
    %7 = arith.mulf %6, %6 : vector<16x32xf32>
    %cst_2 = arith.constant dense<0.000000e+00> : vector<16xf32>
    %8 = vector.multi_reduction <add>, %7, %cst_2 [1] : vector<16x32xf32> to vector<16xf32>
    %9 = vector.shape_cast %8 : vector<16xf32> to vector<16x1xf32>
    %cst_3 = arith.constant 3.200000e+01 : f32
    %10 = vector.broadcast %cst_3 : f32 to vector<16x1xf32>
    %11 = arith.divf %9, %10 : vector<16x1xf32>
    %12 = vector.broadcast %4 : vector<16x1xf32> to vector<16x32xf32>
    %13 = arith.subf %0, %12 : vector<16x32xf32>
    %cst_4 = arith.constant 9.99999997E-7 : f32
    %14 = vector.broadcast %cst_4 : f32 to vector<16x1xf32>
    %15 = arith.addf %11, %14 : vector<16x1xf32>
    %16 = math.rsqrt %15 : vector<16x1xf32>
    %17 = vector.broadcast %16 : vector<16x1xf32> to vector<16x32xf32>
    %18 = arith.mulf %13, %17 : vector<16x32xf32>
    %c0_5 = arith.constant 0 : index
    %c0_6 = arith.constant 0 : index
    %19 = vector.load %arg2[%c0_5, %c0_6] : memref<1x32xf32, #tpu.memory_space<vmem>>, vector<1x32xf32>
    %20 = vector.broadcast %19 : vector<1x32xf32> to vector<16x32xf32>
    %21 = arith.mulf %18, %20 : vector<16x32xf32>
    %c0_7 = arith.constant 0 : index
    %c0_8 = arith.constant 0 : index
    %22 = vector.load %arg3[%c0_7, %c0_8] : memref<1x32xf32, #tpu.memory_space<vmem>>, vector<1x32xf32>
    %23 = vector.broadcast %22 : vector<1x32xf32> to vector<16x32xf32>
    %24 = arith.addf %21, %23 : vector<16x32xf32>
    %c0_9 = arith.constant 0 : index
    %c0_10 = arith.constant 0 : index
    %25 = vector.load %arg6[%c0_9, %c0_10] : memref<16x32xf32, #tpu.memory_space<vmem>>, vector<16x32xf32>
    tpu.vector_store %arg6[%c0_9, %c0_10], %24 {strides = array<i32>} : memref<16x32xf32, #tpu.memory_space<vmem>>, vector<16x32xf32>,
    %26 = arith.truncf %24 : vector<16x32xf32> to vector<16x32xbf16>
    %c0_11 = arith.constant 0 : index
    %c0_12 = arith.constant 0 : index
    %27 = vector.load %arg4[%c0_11, %c0_12] : memref<32x96xbf16, #tpu.memory_space<vmem>>, vector<32x96xbf16>
    %cst_13 = arith.constant dense<0.000000e+00> : vector<16x96xf32>
    %28 = tpu.matmul %26, %27, %cst_13 {dimension_numbers = #tpu.dot_dimension_numbers<[1], [0], [0], [1], [0, 0, 1, 1], [], []>} : vector<16x32xbf16>, vector<32x96xbf16>, vector<16x96xf32> -> vector<16x96xf32>
    %c0_14 = arith.constant 0 : index
    %c0_15 = arith.constant 0 : index
    %29 = vector.load %arg5[%c0_14, %c0_15] : memref<1x96xf32, #tpu.memory_space<vmem>>, vector<1x96xf32>
    %30 = vector.broadcast %29 : vector<1x96xf32> to vector<16x96xf32>
    %31 = arith.addf %28, %30 : vector<16x96xf32>
    %32 = vector.extract_strided_slice %31 {offsets = [0, 0], sizes = [16, 32], strides = [1, 1]} : vector<16x96xf32> to vector<16x32xf32>
    %33 = arith.truncf %32 : vector<16x32xf32> to vector<16x32xbf16>
    %c0_16 = arith.constant 0 : index
    %c0_17 = arith.constant 0 : index
    %34 = vector.load %arg7[%c0_16, %c0_17] : memref<16x32xbf16, #tpu.memory_space<vmem>>, vector<16x32xbf16>
    tpu.vector_store %arg7[%c0_16, %c0_17], %33 {strides = array<i32>} : memref<16x32xbf16, #tpu.memory_space<vmem>>, vector<16x32xbf16>,
    %35 = vector.extract_strided_slice %31 {offsets = [0, 32], sizes = [16, 32], strides = [1, 1]} : vector<16x96xf32> to vector<16x32xf32>
    %36 = arith.truncf %35 : vector<16x32xf32> to vector<16x32xbf16>
    %c0_18 = arith.constant 0 : index
    %c0_19 = arith.constant 0 : index
    %37 = vector.load %arg8[%c0_18, %c0_19] : memref<16x32xbf16, #tpu.memory_space<vmem>>, vector<16x32xbf16>
    tpu.vector_store %arg8[%c0_18, %c0_19], %36 {strides = array<i32>} : memref<16x32xbf16, #tpu.memory_space<vmem>>, vector<16x32xbf16>,
    %38 = vector.extract_strided_slice %31 {offsets = [0, 64], sizes = [16, 32], strides = [1, 1]} : vector<16x96xf32> to vector<16x32xf32>
    %39 = arith.truncf %38 : vector<16x32xf32> to vector<16x32xbf16>
    %c0_20 = arith.constant 0 : index
    %c0_21 = arith.constant 0 : index
    %40 = vector.load %arg9[%c0_20, %c0_21] : memref<16x32xbf16, #tpu.memory_space<vmem>>, vector<16x32xbf16>
    tpu.vector_store %arg9[%c0_20, %c0_21], %39 {strides = array<i32>} : memref<16x32xbf16, #tpu.memory_space<vmem>>, vector<16x32xbf16>,
    return
  }
  func.func @transform_0(%arg0: i32) -> (i32, i32) {
    %c0_i32 = arith.constant 0 : i32
    %c0_i32_0 = arith.constant 0 : i32
    return %arg0, %c0_i32 : i32, i32
  }
  func.func @transform_1(%arg0: i32) -> (i32, i32) {
    %c0_i32 = arith.constant 0 : i32
    %c0_i32_0 = arith.constant 0 : i32
    %c0_i32_1 = arith.constant 0 : i32
    return %c0_i32, %c0_i32_0 : i32, i32
  }
  func.func @transform_2(%arg0: i32) -> (i32, i32) {
    %c0_i32 = arith.constant 0 : i32
    %c0_i32_0 = arith.constant 0 : i32
    %c0_i32_1 = arith.constant 0 : i32
    return %c0_i32, %c0_i32_0 : i32, i32
  }
  func.func @transform_3(%arg0: i32) -> (i32, i32) {
    %c0_i32 = arith.constant 0 : i32
    %c0_i32_0 = arith.constant 0 : i32
    %c0_i32_1 = arith.constant 0 : i32
    return %c0_i32, %c0_i32_0 : i32, i32
  }
  func.func @transform_4(%arg0: i32) -> (i32, i32) {
    %c0_i32 = arith.constant 0 : i32
    %c0_i32_0 = arith.constant 0 : i32
    %c0_i32_1 = arith.constant 0 : i32
    return %c0_i32, %c0_i32_0 : i32, i32
  }
  func.func @transform_5(%arg0: i32) -> (i32, i32) {
    %c0_i32 = arith.constant 0 : i32
    %c0_i32_0 = arith.constant 0 : i32
    return %arg0, %c0_i32 : i32, i32
  }
  func.func @transform_6(%arg0: i32) -> (i32, i32) {
    %c0_i32 = arith.constant 0 : i32
    %c0_i32_0 = arith.constant 0 : i32
    return %arg0, %c0_i32 : i32, i32
  }
  func.func @transform_7(%arg0: i32) -> (i32, i32) {
    %c0_i32 = arith.constant 0 : i32
    %c0_i32_0 = arith.constant 0 : i32
    return %arg0, %c0_i32 : i32, i32
  }
  func.func @transform_8(%arg0: i32) -> (i32, i32) {
    %c0_i32 = arith.constant 0 : i32
    %c0_i32_0 = arith.constant 0 : i32
    return %arg0, %c0_i32 : i32, i32
  }
}

module attributes {stable_mosaic.version = 11 : i64} {
  func.func @flash_attn_kernel(%arg0: i32, %arg1: i32, %arg2: i32, %arg3: memref<1x1x8xf32, #tpu.memory_space<vmem>>, %arg4: memref<1x8x32xf32, #tpu.memory_space<vmem>>, %arg5: memref<1x8x32xbf16, #tpu.memory_space<vmem>>, %arg6: memref<1x8x32xbf16, #tpu.memory_space<vmem>>, %arg7: memref<1x8x32xbf16, #tpu.memory_space<vmem>>, %arg8: memref<32x32xbf16, #tpu.memory_space<vmem>>, %arg9: memref<1x32xf32, #tpu.memory_space<vmem>>, %arg10: memref<1x8x32xf32, #tpu.memory_space<vmem>>, %arg11: memref<8x4xf32, #tpu.memory_space<vmem>>, %arg12: memref<8x4xf32, #tpu.memory_space<vmem>>, %arg13: memref<8x32xf32, #tpu.memory_space<vmem>>) attributes {dimension_semantics = [#tpu.dimension_semantics<parallel>, #tpu.dimension_semantics<parallel>, #tpu.dimension_semantics<arbitrary>], iteration_bounds = array<i64: 2, 1, 1>, scalar_prefetch = 0 : i64, scratch_operands = 3 : i64, tpu.core_type = #tpu.core_type<tc>, window_params = [{transform_indices = @transform_0, window_bounds = array<i64: 1, 1, 8>}, {transform_indices = @transform_1, window_bounds = array<i64: 1, 8, 32>}, {transform_indices = @transform_2, window_bounds = array<i64: 1, 8, 32>}, {transform_indices = @transform_3, window_bounds = array<i64: 1, 8, 32>}, {transform_indices = @transform_4, window_bounds = array<i64: 1, 8, 32>}, {pipeline_mode = #tpu.pipeline_mode<synchronous>, transform_indices = @transform_5, window_bounds = array<i64: 32, 32>}, {pipeline_mode = #tpu.pipeline_mode<synchronous>, transform_indices = @transform_6, window_bounds = array<i64: 1, 32>}, {transform_indices = @transform_7, window_bounds = array<i64: 1, 8, 32>}]} {
    %c0_i32 = arith.constant 0 : i32
    %0 = arith.cmpi eq, %arg2, %c0_i32 : i32
    %1 = arith.extui %0 : i1 to i32
    %c0_i32_0 = arith.constant 0 : i32
    %2 = arith.cmpi ne, %1, %c0_i32_0 : i32
    scf.if %2 {
      %cst_81 = arith.constant 0xFF800000 : f32
      %152 = vector.broadcast %cst_81 : f32 to vector<8x4xf32>
      %c0_82 = arith.constant 0 : index
      %c0_83 = arith.constant 0 : index
      %153 = vector.load %arg11[%c0_82, %c0_83] : memref<8x4xf32, #tpu.memory_space<vmem>>, vector<8x4xf32>
      tpu.vector_store %arg11[%c0_82, %c0_83], %152 {strides = array<i32>} : memref<8x4xf32, #tpu.memory_space<vmem>>, vector<8x4xf32>,
      %cst_84 = arith.constant 0.000000e+00 : f32
      %154 = vector.broadcast %cst_84 : f32 to vector<8x4xf32>
      %c0_85 = arith.constant 0 : index
      %c0_86 = arith.constant 0 : index
      %155 = vector.load %arg12[%c0_85, %c0_86] : memref<8x4xf32, #tpu.memory_space<vmem>>, vector<8x4xf32>
      tpu.vector_store %arg12[%c0_85, %c0_86], %154 {strides = array<i32>} : memref<8x4xf32, #tpu.memory_space<vmem>>, vector<8x4xf32>,
      %cst_87 = arith.constant 0.000000e+00 : f32
      %156 = vector.broadcast %cst_87 : f32 to vector<8x32xf32>
      %c0_88 = arith.constant 0 : index
      %c0_89 = arith.constant 0 : index
      %157 = vector.load %arg13[%c0_88, %c0_89] : memref<8x32xf32, #tpu.memory_space<vmem>>, vector<8x32xf32>
      tpu.vector_store %arg13[%c0_88, %c0_89], %156 {strides = array<i32>} : memref<8x32xf32, #tpu.memory_space<vmem>>, vector<8x32xf32>,
    } else {
    }
    %c0 = arith.constant 0 : index
    %c0_1 = arith.constant 0 : index
    %c0_2 = arith.constant 0 : index
    %3 = vector.load %arg5[%c0, %c0_1, %c0_2] : memref<1x8x32xbf16, #tpu.memory_space<vmem>>, vector<1x8x32xbf16>
    %4 = vector.shape_cast %3 : vector<1x8x32xbf16> to vector<8x32xbf16>
    %c0_3 = arith.constant 0 : index
    %c0_4 = arith.constant 0 : index
    %c0_5 = arith.constant 0 : index
    %5 = vector.load %arg6[%c0_3, %c0_4, %c0_5] : memref<1x8x32xbf16, #tpu.memory_space<vmem>>, vector<1x8x32xbf16>
    %6 = vector.shape_cast %5 : vector<1x8x32xbf16> to vector<8x32xbf16>
    %c0_6 = arith.constant 0 : index
    %c0_7 = arith.constant 0 : index
    %c0_8 = arith.constant 0 : index
    %7 = vector.load %arg7[%c0_6, %c0_7, %c0_8] : memref<1x8x32xbf16, #tpu.memory_space<vmem>>, vector<1x8x32xbf16>
    %8 = vector.shape_cast %7 : vector<1x8x32xbf16> to vector<8x32xbf16>
    %c8_i32 = arith.constant 8 : i32
    %9 = arith.muli %arg2, %c8_i32 : i32
    %10 = tpu.iota {dimensions = array<i32: 1>} : vector<8x8xi32>
    %11 = vector.broadcast %9 : i32 to vector<8x8xi32>
    %12 = arith.addi %11, %10 : vector<8x8xi32>
    %c0_9 = arith.constant 0 : index
    %c0_10 = arith.constant 0 : index
    %c0_11 = arith.constant 0 : index
    %13 = vector.load %arg3[%c0_9, %c0_10, %c0_11] : memref<1x1x8xf32, #tpu.memory_space<vmem>>, vector<1x1x8xf32>
    %14 = vector.shape_cast %13 : vector<1x1x8xf32> to vector<1x8xf32>
    %cst = arith.constant 0.000000e+00 : f32
    %15 = vector.broadcast %cst : f32 to vector<1x8xf32>
    %16 = arith.cmpf ogt, %14, %15 : vector<1x8xf32>
    %17 = vector.shape_cast %16 : vector<1x8xi1> to vector<1x8xi1>
    %18 = vector.broadcast %17 : vector<1x8xi1> to vector<8x8xi1>
    %c8_i32_12 = arith.constant 8 : i32
    %19 = arith.muli %arg1, %c8_i32_12 : i32
    %20 = tpu.iota {dimensions = array<i32: 0>} : vector<8x8xi32>
    %21 = vector.broadcast %19 : i32 to vector<8x8xi32>
    %22 = arith.addi %21, %20 : vector<8x8xi32>
    %23 = arith.cmpi sgt, %12, %22 : vector<8x8xi32>
    %24 = arith.ori %18, %23 : vector<8x8xi1>
    %25 = vector.extract_strided_slice %4 {offsets = [0, 0], sizes = [8, 8], strides = [1, 1]} : vector<8x32xbf16> to vector<8x8xbf16>
    %26 = vector.extract_strided_slice %6 {offsets = [0, 0], sizes = [8, 8], strides = [1, 1]} : vector<8x32xbf16> to vector<8x8xbf16>
    %cst_13 = arith.constant dense<0.000000e+00> : vector<8x8xf32>
    %27 = tpu.matmul %25, %26, %cst_13 {dimension_numbers = #tpu.dot_dimension_numbers<[1], [1], [0], [0], [0, 0, 1, 0], [], []>} : vector<8x8xbf16>, vector<8x8xbf16>, vector<8x8xf32> -> vector<8x8xf32>
    %cst_14 = arith.constant 0.353553385 : f32
    %28 = vector.broadcast %cst_14 : f32 to vector<8x8xf32>
    %29 = arith.mulf %27, %28 : vector<8x8xf32>
    %cst_15 = arith.constant -9.99999984E+17 : f32
    %30 = vector.broadcast %cst_15 : f32 to vector<8x8xf32>
    %31 = arith.select %24, %30, %29 : vector<8x8xi1>, vector<8x8xf32>
    %c0_16 = arith.constant 0 : index
    %c0_17 = arith.constant 0 : index
    %32 = vector.load %arg11[%c0_16, %c0_17] : memref<8x4xf32, #tpu.memory_space<vmem>>, vector<8x1xf32>
    %cst_18 = arith.constant dense<0xFF800000> : vector<8xf32>
    %33 = vector.multi_reduction <maximumf>, %31, %cst_18 [1] : vector<8x8xf32> to vector<8xf32>
    %34 = vector.shape_cast %33 : vector<8xf32> to vector<8x1xf32>
    %35 = arith.maximumf %32, %34 : vector<8x1xf32>
    %36 = arith.subf %32, %35 : vector<8x1xf32>
    %37 = math.exp %36 : vector<8x1xf32>
    %38 = vector.broadcast %35 : vector<8x1xf32> to vector<8x8xf32>
    %39 = arith.subf %31, %38 : vector<8x8xf32>
    %40 = math.exp %39 : vector<8x8xf32>
    %c0_19 = arith.constant 0 : index
    %c0_20 = arith.constant 0 : index
    %41 = vector.load %arg12[%c0_19, %c0_20] : memref<8x4xf32, #tpu.memory_space<vmem>>, vector<8x1xf32>
    %42 = arith.mulf %37, %41 : vector<8x1xf32>
    %cst_21 = arith.constant dense<0.000000e+00> : vector<8xf32>
    %43 = vector.multi_reduction <add>, %40, %cst_21 [1] : vector<8x8xf32> to vector<8xf32>
    %44 = vector.shape_cast %43 : vector<8xf32> to vector<8x1xf32>
    %45 = arith.addf %42, %44 : vector<8x1xf32>
    %c0_22 = arith.constant 0 : index
    %c0_23 = arith.constant 0 : index
    %46 = vector.load %arg12[%c0_22, %c0_23] : memref<8x4xf32, #tpu.memory_space<vmem>>, vector<8x1xf32>
    tpu.vector_store %arg12[%c0_22, %c0_23], %45 {strides = array<i32>} : memref<8x4xf32, #tpu.memory_space<vmem>>, vector<8x1xf32>,
    %c0_24 = arith.constant 0 : index
    %c0_25 = arith.constant 0 : index
    %47 = vector.load %arg13[%c0_24, %c0_25] : memref<8x32xf32, #tpu.memory_space<vmem>>, vector<8x8xf32>
    %48 = vector.broadcast %37 : vector<8x1xf32> to vector<8x8xf32>
    %49 = arith.mulf %48, %47 : vector<8x8xf32>
    %50 = arith.truncf %40 : vector<8x8xf32> to vector<8x8xbf16>
    %51 = vector.extract_strided_slice %8 {offsets = [0, 0], sizes = [8, 8], strides = [1, 1]} : vector<8x32xbf16> to vector<8x8xbf16>
    %cst_26 = arith.constant dense<0.000000e+00> : vector<8x8xf32>
    %52 = tpu.matmul %50, %51, %cst_26 {dimension_numbers = #tpu.dot_dimension_numbers<[1], [0], [0], [1], [0, 0, 1, 1], [], []>} : vector<8x8xbf16>, vector<8x8xbf16>, vector<8x8xf32> -> vector<8x8xf32>
    %53 = arith.addf %49, %52 : vector<8x8xf32>
    %c0_27 = arith.constant 0 : index
    %c0_28 = arith.constant 0 : index
    %54 = vector.load %arg13[%c0_27, %c0_28] : memref<8x32xf32, #tpu.memory_space<vmem>>, vector<8x8xf32>
    tpu.vector_store %arg13[%c0_27, %c0_28], %53 {strides = array<i32>} : memref<8x32xf32, #tpu.memory_space<vmem>>, vector<8x8xf32>,
    %c0_29 = arith.constant 0 : index
    %c0_30 = arith.constant 0 : index
    %55 = vector.load %arg11[%c0_29, %c0_30] : memref<8x4xf32, #tpu.memory_space<vmem>>, vector<8x1xf32>
    tpu.vector_store %arg11[%c0_29, %c0_30], %35 {strides = array<i32>} : memref<8x4xf32, #tpu.memory_space<vmem>>, vector<8x1xf32>,
    %56 = vector.extract_strided_slice %4 {offsets = [0, 8], sizes = [8, 8], strides = [1, 1]} : vector<8x32xbf16> to vector<8x8xbf16>
    %57 = vector.extract_strided_slice %6 {offsets = [0, 8], sizes = [8, 8], strides = [1, 1]} : vector<8x32xbf16> to vector<8x8xbf16>
    %cst_31 = arith.constant dense<0.000000e+00> : vector<8x8xf32>
    %58 = tpu.matmul %56, %57, %cst_31 {dimension_numbers = #tpu.dot_dimension_numbers<[1], [1], [0], [0], [0, 0, 1, 0], [], []>} : vector<8x8xbf16>, vector<8x8xbf16>, vector<8x8xf32> -> vector<8x8xf32>
    %cst_32 = arith.constant 0.353553385 : f32
    %59 = vector.broadcast %cst_32 : f32 to vector<8x8xf32>
    %60 = arith.mulf %58, %59 : vector<8x8xf32>
    %cst_33 = arith.constant -9.99999984E+17 : f32
    %61 = vector.broadcast %cst_33 : f32 to vector<8x8xf32>
    %62 = arith.select %24, %61, %60 : vector<8x8xi1>, vector<8x8xf32>
    %c0_34 = arith.constant 0 : index
    %c1 = arith.constant 1 : index
    %63 = vector.load %arg11[%c0_34, %c1] : memref<8x4xf32, #tpu.memory_space<vmem>>, vector<8x1xf32>
    %cst_35 = arith.constant dense<0xFF800000> : vector<8xf32>
    %64 = vector.multi_reduction <maximumf>, %62, %cst_35 [1] : vector<8x8xf32> to vector<8xf32>
    %65 = vector.shape_cast %64 : vector<8xf32> to vector<8x1xf32>
    %66 = arith.maximumf %63, %65 : vector<8x1xf32>
    %67 = arith.subf %63, %66 : vector<8x1xf32>
    %68 = math.exp %67 : vector<8x1xf32>
    %69 = vector.broadcast %66 : vector<8x1xf32> to vector<8x8xf32>
    %70 = arith.subf %62, %69 : vector<8x8xf32>
    %71 = math.exp %70 : vector<8x8xf32>
    %c0_36 = arith.constant 0 : index
    %c1_37 = arith.constant 1 : index
    %72 = vector.load %arg12[%c0_36, %c1_37] : memref<8x4xf32, #tpu.memory_space<vmem>>, vector<8x1xf32>
    %73 = arith.mulf %68, %72 : vector<8x1xf32>
    %cst_38 = arith.constant dense<0.000000e+00> : vector<8xf32>
    %74 = vector.multi_reduction <add>, %71, %cst_38 [1] : vector<8x8xf32> to vector<8xf32>
    %75 = vector.shape_cast %74 : vector<8xf32> to vector<8x1xf32>
    %76 = arith.addf %73, %75 : vector<8x1xf32>
    %c0_39 = arith.constant 0 : index
    %c1_40 = arith.constant 1 : index
    %77 = vector.load %arg12[%c0_39, %c1_40] : memref<8x4xf32, #tpu.memory_space<vmem>>, vector<8x1xf32>
    tpu.vector_store %arg12[%c0_39, %c1_40], %76 {strides = array<i32>} : memref<8x4xf32, #tpu.memory_space<vmem>>, vector<8x1xf32>,
    %c0_41 = arith.constant 0 : index
    %c8 = arith.constant 8 : index
    %78 = vector.load %arg13[%c0_41, %c8] : memref<8x32xf32, #tpu.memory_space<vmem>>, vector<8x8xf32>
    %79 = vector.broadcast %68 : vector<8x1xf32> to vector<8x8xf32>
    %80 = arith.mulf %79, %78 : vector<8x8xf32>
    %81 = arith.truncf %71 : vector<8x8xf32> to vector<8x8xbf16>
    %82 = vector.extract_strided_slice %8 {offsets = [0, 8], sizes = [8, 8], strides = [1, 1]} : vector<8x32xbf16> to vector<8x8xbf16>
    %cst_42 = arith.constant dense<0.000000e+00> : vector<8x8xf32>
    %83 = tpu.matmul %81, %82, %cst_42 {dimension_numbers = #tpu.dot_dimension_numbers<[1], [0], [0], [1], [0, 0, 1, 1], [], []>} : vector<8x8xbf16>, vector<8x8xbf16>, vector<8x8xf32> -> vector<8x8xf32>
    %84 = arith.addf %80, %83 : vector<8x8xf32>
    %c0_43 = arith.constant 0 : index
    %c8_44 = arith.constant 8 : index
    %85 = vector.load %arg13[%c0_43, %c8_44] : memref<8x32xf32, #tpu.memory_space<vmem>>, vector<8x8xf32>
    tpu.vector_store %arg13[%c0_43, %c8_44], %84 {strides = array<i32>} : memref<8x32xf32, #tpu.memory_space<vmem>>, vector<8x8xf32>,
    %c0_45 = arith.constant 0 : index
    %c1_46 = arith.constant 1 : index
    %86 = vector.load %arg11[%c0_45, %c1_46] : memref<8x4xf32, #tpu.memory_space<vmem>>, vector<8x1xf32>
    tpu.vector_store %arg11[%c0_45, %c1_46], %66 {strides = array<i32>} : memref<8x4xf32, #tpu.memory_space<vmem>>, vector<8x1xf32>,
    %87 = vector.extract_strided_slice %4 {offsets = [0, 16], sizes = [8, 8], strides = [1, 1]} : vector<8x32xbf16> to vector<8x8xbf16>
    %88 = vector.extract_strided_slice %6 {offsets = [0, 16], sizes = [8, 8], strides = [1, 1]} : vector<8x32xbf16> to vector<8x8xbf16>
    %cst_47 = arith.constant dense<0.000000e+00> : vector<8x8xf32>
    %89 = tpu.matmul %87, %88, %cst_47 {dimension_numbers = #tpu.dot_dimension_numbers<[1], [1], [0], [0], [0, 0, 1, 0], [], []>} : vector<8x8xbf16>, vector<8x8xbf16>, vector<8x8xf32> -> vector<8x8xf32>
    %cst_48 = arith.constant 0.353553385 : f32
    %90 = vector.broadcast %cst_48 : f32 to vector<8x8xf32>
    %91 = arith.mulf %89, %90 : vector<8x8xf32>
    %cst_49 = arith.constant -9.99999984E+17 : f32
    %92 = vector.broadcast %cst_49 : f32 to vector<8x8xf32>
    %93 = arith.select %24, %92, %91 : vector<8x8xi1>, vector<8x8xf32>
    %c0_50 = arith.constant 0 : index
    %c2 = arith.constant 2 : index
    %94 = vector.load %arg11[%c0_50, %c2] : memref<8x4xf32, #tpu.memory_space<vmem>>, vector<8x1xf32>
    %cst_51 = arith.constant dense<0xFF800000> : vector<8xf32>
    %95 = vector.multi_reduction <maximumf>, %93, %cst_51 [1] : vector<8x8xf32> to vector<8xf32>
    %96 = vector.shape_cast %95 : vector<8xf32> to vector<8x1xf32>
    %97 = arith.maximumf %94, %96 : vector<8x1xf32>
    %98 = arith.subf %94, %97 : vector<8x1xf32>
    %99 = math.exp %98 : vector<8x1xf32>
    %100 = vector.broadcast %97 : vector<8x1xf32> to vector<8x8xf32>
    %101 = arith.subf %93, %100 : vector<8x8xf32>
    %102 = math.exp %101 : vector<8x8xf32>
    %c0_52 = arith.constant 0 : index
    %c2_53 = arith.constant 2 : index
    %103 = vector.load %arg12[%c0_52, %c2_53] : memref<8x4xf32, #tpu.memory_space<vmem>>, vector<8x1xf32>
    %104 = arith.mulf %99, %103 : vector<8x1xf32>
    %cst_54 = arith.constant dense<0.000000e+00> : vector<8xf32>
    %105 = vector.multi_reduction <add>, %102, %cst_54 [1] : vector<8x8xf32> to vector<8xf32>
    %106 = vector.shape_cast %105 : vector<8xf32> to vector<8x1xf32>
    %107 = arith.addf %104, %106 : vector<8x1xf32>
    %c0_55 = arith.constant 0 : index
    %c2_56 = arith.constant 2 : index
    %108 = vector.load %arg12[%c0_55, %c2_56] : memref<8x4xf32, #tpu.memory_space<vmem>>, vector<8x1xf32>
    tpu.vector_store %arg12[%c0_55, %c2_56], %107 {strides = array<i32>} : memref<8x4xf32, #tpu.memory_space<vmem>>, vector<8x1xf32>,
    %c0_57 = arith.constant 0 : index
    %c16 = arith.constant 16 : index
    %109 = vector.load %arg13[%c0_57, %c16] : memref<8x32xf32, #tpu.memory_space<vmem>>, vector<8x8xf32>
    %110 = vector.broadcast %99 : vector<8x1xf32> to vector<8x8xf32>
    %111 = arith.mulf %110, %109 : vector<8x8xf32>
    %112 = arith.truncf %102 : vector<8x8xf32> to vector<8x8xbf16>
    %113 = vector.extract_strided_slice %8 {offsets = [0, 16], sizes = [8, 8], strides = [1, 1]} : vector<8x32xbf16> to vector<8x8xbf16>
    %cst_58 = arith.constant dense<0.000000e+00> : vector<8x8xf32>
    %114 = tpu.matmul %112, %113, %cst_58 {dimension_numbers = #tpu.dot_dimension_numbers<[1], [0], [0], [1], [0, 0, 1, 1], [], []>} : vector<8x8xbf16>, vector<8x8xbf16>, vector<8x8xf32> -> vector<8x8xf32>
    %115 = arith.addf %111, %114 : vector<8x8xf32>
    %c0_59 = arith.constant 0 : index
    %c16_60 = arith.constant 16 : index
    %116 = vector.load %arg13[%c0_59, %c16_60] : memref<8x32xf32, #tpu.memory_space<vmem>>, vector<8x8xf32>
    tpu.vector_store %arg13[%c0_59, %c16_60], %115 {strides = array<i32>} : memref<8x32xf32, #tpu.memory_space<vmem>>, vector<8x8xf32>,
    %c0_61 = arith.constant 0 : index
    %c2_62 = arith.constant 2 : index
    %117 = vector.load %arg11[%c0_61, %c2_62] : memref<8x4xf32, #tpu.memory_space<vmem>>, vector<8x1xf32>
    tpu.vector_store %arg11[%c0_61, %c2_62], %97 {strides = array<i32>} : memref<8x4xf32, #tpu.memory_space<vmem>>, vector<8x1xf32>,
    %118 = vector.extract_strided_slice %4 {offsets = [0, 24], sizes = [8, 8], strides = [1, 1]} : vector<8x32xbf16> to vector<8x8xbf16>
    %119 = vector.extract_strided_slice %6 {offsets = [0, 24], sizes = [8, 8], strides = [1, 1]} : vector<8x32xbf16> to vector<8x8xbf16>
    %cst_63 = arith.constant dense<0.000000e+00> : vector<8x8xf32>
    %120 = tpu.matmul %118, %119, %cst_63 {dimension_numbers = #tpu.dot_dimension_numbers<[1], [1], [0], [0], [0, 0, 1, 0], [], []>} : vector<8x8xbf16>, vector<8x8xbf16>, vector<8x8xf32> -> vector<8x8xf32>
    %cst_64 = arith.constant 0.353553385 : f32
    %121 = vector.broadcast %cst_64 : f32 to vector<8x8xf32>
    %122 = arith.mulf %120, %121 : vector<8x8xf32>
    %cst_65 = arith.constant -9.99999984E+17 : f32
    %123 = vector.broadcast %cst_65 : f32 to vector<8x8xf32>
    %124 = arith.select %24, %123, %122 : vector<8x8xi1>, vector<8x8xf32>
    %c0_66 = arith.constant 0 : index
    %c3 = arith.constant 3 : index
    %125 = vector.load %arg11[%c0_66, %c3] : memref<8x4xf32, #tpu.memory_space<vmem>>, vector<8x1xf32>
    %cst_67 = arith.constant dense<0xFF800000> : vector<8xf32>
    %126 = vector.multi_reduction <maximumf>, %124, %cst_67 [1] : vector<8x8xf32> to vector<8xf32>
    %127 = vector.shape_cast %126 : vector<8xf32> to vector<8x1xf32>
    %128 = arith.maximumf %125, %127 : vector<8x1xf32>
    %129 = arith.subf %125, %128 : vector<8x1xf32>
    %130 = math.exp %129 : vector<8x1xf32>
    %131 = vector.broadcast %128 : vector<8x1xf32> to vector<8x8xf32>
    %132 = arith.subf %124, %131 : vector<8x8xf32>
    %133 = math.exp %132 : vector<8x8xf32>
    %c0_68 = arith.constant 0 : index
    %c3_69 = arith.constant 3 : index
    %134 = vector.load %arg12[%c0_68, %c3_69] : memref<8x4xf32, #tpu.memory_space<vmem>>, vector<8x1xf32>
    %135 = arith.mulf %130, %134 : vector<8x1xf32>
    %cst_70 = arith.constant dense<0.000000e+00> : vector<8xf32>
    %136 = vector.multi_reduction <add>, %133, %cst_70 [1] : vector<8x8xf32> to vector<8xf32>
    %137 = vector.shape_cast %136 : vector<8xf32> to vector<8x1xf32>
    %138 = arith.addf %135, %137 : vector<8x1xf32>
    %c0_71 = arith.constant 0 : index
    %c3_72 = arith.constant 3 : index
    %139 = vector.load %arg12[%c0_71, %c3_72] : memref<8x4xf32, #tpu.memory_space<vmem>>, vector<8x1xf32>
    tpu.vector_store %arg12[%c0_71, %c3_72], %138 {strides = array<i32>} : memref<8x4xf32, #tpu.memory_space<vmem>>, vector<8x1xf32>,
    %c0_73 = arith.constant 0 : index
    %c24 = arith.constant 24 : index
    %140 = vector.load %arg13[%c0_73, %c24] : memref<8x32xf32, #tpu.memory_space<vmem>>, vector<8x8xf32>
    %141 = vector.broadcast %130 : vector<8x1xf32> to vector<8x8xf32>
    %142 = arith.mulf %141, %140 : vector<8x8xf32>
    %143 = arith.truncf %133 : vector<8x8xf32> to vector<8x8xbf16>
    %144 = vector.extract_strided_slice %8 {offsets = [0, 24], sizes = [8, 8], strides = [1, 1]} : vector<8x32xbf16> to vector<8x8xbf16>
    %cst_74 = arith.constant dense<0.000000e+00> : vector<8x8xf32>
    %145 = tpu.matmul %143, %144, %cst_74 {dimension_numbers = #tpu.dot_dimension_numbers<[1], [0], [0], [1], [0, 0, 1, 1], [], []>} : vector<8x8xbf16>, vector<8x8xbf16>, vector<8x8xf32> -> vector<8x8xf32>
    %146 = arith.addf %142, %145 : vector<8x8xf32>
    %c0_75 = arith.constant 0 : index
    %c24_76 = arith.constant 24 : index
    %147 = vector.load %arg13[%c0_75, %c24_76] : memref<8x32xf32, #tpu.memory_space<vmem>>, vector<8x8xf32>
    tpu.vector_store %arg13[%c0_75, %c24_76], %146 {strides = array<i32>} : memref<8x32xf32, #tpu.memory_space<vmem>>, vector<8x8xf32>,
    %c0_77 = arith.constant 0 : index
    %c3_78 = arith.constant 3 : index
    %148 = vector.load %arg11[%c0_77, %c3_78] : memref<8x4xf32, #tpu.memory_space<vmem>>, vector<8x1xf32>
    tpu.vector_store %arg11[%c0_77, %c3_78], %128 {strides = array<i32>} : memref<8x4xf32, #tpu.memory_space<vmem>>, vector<8x1xf32>,
    %c0_i32_79 = arith.constant 0 : i32
    %149 = arith.cmpi eq, %arg2, %c0_i32_79 : i32
    %150 = arith.extui %149 : i1 to i32
    %c0_i32_80 = arith.constant 0 : i32
    %151 = arith.cmpi ne, %150, %c0_i32_80 : i32
    scf.if %151 {
      %c0_81 = arith.constant 0 : index
      %c0_82 = arith.constant 0 : index
      %152 = vector.load %arg13[%c0_81, %c0_82] : memref<8x32xf32, #tpu.memory_space<vmem>>, vector<8x8xf32>
      %c0_83 = arith.constant 0 : index
      %c0_84 = arith.constant 0 : index
      %153 = vector.load %arg12[%c0_83, %c0_84] : memref<8x4xf32, #tpu.memory_space<vmem>>, vector<8x1xf32>
      %154 = vector.broadcast %153 : vector<8x1xf32> to vector<8x8xf32>
      %155 = arith.divf %152, %154 : vector<8x8xf32>
      %c0_85 = arith.constant 0 : index
      %c0_86 = arith.constant 0 : index
      %156 = vector.load %arg13[%c0_85, %c0_86] : memref<8x32xf32, #tpu.memory_space<vmem>>, vector<8x8xf32>
      tpu.vector_store %arg13[%c0_85, %c0_86], %155 {strides = array<i32>} : memref<8x32xf32, #tpu.memory_space<vmem>>, vector<8x8xf32>,
      %c0_87 = arith.constant 0 : index
      %c8_88 = arith.constant 8 : index
      %157 = vector.load %arg13[%c0_87, %c8_88] : memref<8x32xf32, #tpu.memory_space<vmem>>, vector<8x8xf32>
      %c0_89 = arith.constant 0 : index
      %c1_90 = arith.constant 1 : index
      %158 = vector.load %arg12[%c0_89, %c1_90] : memref<8x4xf32, #tpu.memory_space<vmem>>, vector<8x1xf32>
      %159 = vector.broadcast %158 : vector<8x1xf32> to vector<8x8xf32>
      %160 = arith.divf %157, %159 : vector<8x8xf32>
      %c0_91 = arith.constant 0 : index
      %c8_92 = arith.constant 8 : index
      %161 = vector.load %arg13[%c0_91, %c8_92] : memref<8x32xf32, #tpu.memory_space<vmem>>, vector<8x8xf32>
      tpu.vector_store %arg13[%c0_91, %c8_92], %160 {strides = array<i32>} : memref<8x32xf32, #tpu.memory_space<vmem>>, vector<8x8xf32>,
      %c0_93 = arith.constant 0 : index
      %c16_94 = arith.constant 16 : index
      %162 = vector.load %arg13[%c0_93, %c16_94] : memref<8x32xf32, #tpu.memory_space<vmem>>, vector<8x8xf32>
      %c0_95 = arith.constant 0 : index
      %c2_96 = arith.constant 2 : index
      %163 = vector.load %arg12[%c0_95, %c2_96] : memref<8x4xf32, #tpu.memory_space<vmem>>, vector<8x1xf32>
      %164 = vector.broadcast %163 : vector<8x1xf32> to vector<8x8xf32>
      %165 = arith.divf %162, %164 : vector<8x8xf32>
      %c0_97 = arith.constant 0 : index
      %c16_98 = arith.constant 16 : index
      %166 = vector.load %arg13[%c0_97, %c16_98] : memref<8x32xf32, #tpu.memory_space<vmem>>, vector<8x8xf32>
      tpu.vector_store %arg13[%c0_97, %c16_98], %165 {strides = array<i32>} : memref<8x32xf32, #tpu.memory_space<vmem>>, vector<8x8xf32>,
      %c0_99 = arith.constant 0 : index
      %c24_100 = arith.constant 24 : index
      %167 = vector.load %arg13[%c0_99, %c24_100] : memref<8x32xf32, #tpu.memory_space<vmem>>, vector<8x8xf32>
      %c0_101 = arith.constant 0 : index
      %c3_102 = arith.constant 3 : index
      %168 = vector.load %arg12[%c0_101, %c3_102] : memref<8x4xf32, #tpu.memory_space<vmem>>, vector<8x1xf32>
      %169 = vector.broadcast %168 : vector<8x1xf32> to vector<8x8xf32>
      %170 = arith.divf %167, %169 : vector<8x8xf32>
      %c0_103 = arith.constant 0 : index
      %c24_104 = arith.constant 24 : index
      %171 = vector.load %arg13[%c0_103, %c24_104] : memref<8x32xf32, #tpu.memory_space<vmem>>, vector<8x8xf32>
      tpu.vector_store %arg13[%c0_103, %c24_104], %170 {strides = array<i32>} : memref<8x32xf32, #tpu.memory_space<vmem>>, vector<8x8xf32>,
      %c0_105 = arith.constant 0 : index
      %c0_106 = arith.constant 0 : index
      %172 = vector.load %arg13[%c0_105, %c0_106] : memref<8x32xf32, #tpu.memory_space<vmem>>, vector<8x32xf32>
      %173 = arith.truncf %172 : vector<8x32xf32> to vector<8x32xbf16>
      %c0_107 = arith.constant 0 : index
      %c0_108 = arith.constant 0 : index
      %174 = vector.load %arg8[%c0_107, %c0_108] : memref<32x32xbf16, #tpu.memory_space<vmem>>, vector<32x32xbf16>
      %cst_109 = arith.constant dense<0.000000e+00> : vector<8x32xf32>
      %175 = tpu.matmul %173, %174, %cst_109 {dimension_numbers = #tpu.dot_dimension_numbers<[1], [0], [0], [1], [0, 0, 1, 1], [], []>} : vector<8x32xbf16>, vector<32x32xbf16>, vector<8x32xf32> -> vector<8x32xf32>
      %c0_110 = arith.constant 0 : index
      %c0_111 = arith.constant 0 : index
      %176 = vector.load %arg9[%c0_110, %c0_111] : memref<1x32xf32, #tpu.memory_space<vmem>>, vector<1x32xf32>
      %177 = vector.broadcast %176 : vector<1x32xf32> to vector<8x32xf32>
      %178 = arith.addf %175, %177 : vector<8x32xf32>
      %c0_112 = arith.constant 0 : index
      %c0_113 = arith.constant 0 : index
      %c0_114 = arith.constant 0 : index
      %179 = vector.load %arg4[%c0_112, %c0_113, %c0_114] : memref<1x8x32xf32, #tpu.memory_space<vmem>>, vector<1x8x32xf32>
      %180 = vector.shape_cast %179 : vector<1x8x32xf32> to vector<8x32xf32>
      %181 = arith.addf %178, %180 : vector<8x32xf32>
      %c0_115 = arith.constant 0 : index
      %c0_116 = arith.constant 0 : index
      %c0_117 = arith.constant 0 : index
      %182 = vector.load %arg10[%c0_115, %c0_116, %c0_117] : memref<1x8x32xf32, #tpu.memory_space<vmem>>, vector<1x8x32xf32>
      %183 = vector.shape_cast %182 : vector<1x8x32xf32> to vector<8x32xf32>
      %184 = vector.shape_cast %181 : vector<8x32xf32> to vector<1x8x32xf32>
      tpu.vector_store %arg10[%c0_115, %c0_116, %c0_117], %184 {strides = array<i32>} : memref<1x8x32xf32, #tpu.memory_space<vmem>>, vector<1x8x32xf32>,
    } else {
    }
    return
  }
  func.func @transform_0(%arg0: i32, %arg1: i32, %arg2: i32) -> (i32, i32, i32) {
    %c0_i32 = arith.constant 0 : i32
    %c0_i32_0 = arith.constant 0 : i32
    return %arg0, %c0_i32, %arg2 : i32, i32, i32
  }
  func.func @transform_1(%arg0: i32, %arg1: i32, %arg2: i32) -> (i32, i32, i32) {
    %c0_i32 = arith.constant 0 : i32
    %c0_i32_0 = arith.constant 0 : i32
    return %arg0, %arg1, %c0_i32 : i32, i32, i32
  }
  func.func @transform_2(%arg0: i32, %arg1: i32, %arg2: i32) -> (i32, i32, i32) {
    %c0_i32 = arith.constant 0 : i32
    %c0_i32_0 = arith.constant 0 : i32
    return %arg0, %arg1, %c0_i32 : i32, i32, i32
  }
  func.func @transform_3(%arg0: i32, %arg1: i32, %arg2: i32) -> (i32, i32, i32) {
    %c0_i32 = arith.constant 0 : i32
    %c0_i32_0 = arith.constant 0 : i32
    return %arg0, %arg2, %c0_i32 : i32, i32, i32
  }
  func.func @transform_4(%arg0: i32, %arg1: i32, %arg2: i32) -> (i32, i32, i32) {
    %c0_i32 = arith.constant 0 : i32
    %c0_i32_0 = arith.constant 0 : i32
    return %arg0, %arg2, %c0_i32 : i32, i32, i32
  }
  func.func @transform_5(%arg0: i32, %arg1: i32, %arg2: i32) -> (i32, i32) {
    %c0_i32 = arith.constant 0 : i32
    %c0_i32_0 = arith.constant 0 : i32
    %c0_i32_1 = arith.constant 0 : i32
    return %c0_i32, %c0_i32_0 : i32, i32
  }
  func.func @transform_6(%arg0: i32, %arg1: i32, %arg2: i32) -> (i32, i32) {
    %c0_i32 = arith.constant 0 : i32
    %c0_i32_0 = arith.constant 0 : i32
    %c0_i32_1 = arith.constant 0 : i32
    return %c0_i32, %c0_i32_0 : i32, i32
  }
  func.func @transform_7(%arg0: i32, %arg1: i32, %arg2: i32) -> (i32, i32, i32) {
    %c0_i32 = arith.constant 0 : i32
    %c0_i32_0 = arith.constant 0 : i32
    return %arg0, %arg1, %c0_i32 : i32, i32, i32
  }
}

module attributes {stable_mosaic.version = 11 : i64} {
  func.func @proj_split_kernel(%arg0: i32, %arg1: memref<32x32xf32, #tpu.memory_space<vmem>>, %arg2: memref<32x64xbf16, #tpu.memory_space<vmem>>, %arg3: memref<1x64xf32, #tpu.memory_space<vmem>>, %arg4: memref<32x32xbf16, #tpu.memory_space<vmem>>, %arg5: memref<32x32xbf16, #tpu.memory_space<vmem>>) attributes {dimension_semantics = [#tpu.dimension_semantics<parallel>], iteration_bounds = array<i64: 1>, scalar_prefetch = 0 : i64, scratch_operands = 0 : i64, tpu.core_type = #tpu.core_type<tc>, window_params = [{transform_indices = @transform_0, window_bounds = array<i64: 32, 32>}, {pipeline_mode = #tpu.pipeline_mode<synchronous>, transform_indices = @transform_1, window_bounds = array<i64: 32, 64>}, {pipeline_mode = #tpu.pipeline_mode<synchronous>, transform_indices = @transform_2, window_bounds = array<i64: 1, 64>}, {transform_indices = @transform_3, window_bounds = array<i64: 32, 32>}, {transform_indices = @transform_4, window_bounds = array<i64: 32, 32>}]} {
    %c0 = arith.constant 0 : index
    %c0_0 = arith.constant 0 : index
    %0 = vector.load %arg1[%c0, %c0_0] : memref<32x32xf32, #tpu.memory_space<vmem>>, vector<32x32xf32>
    %1 = arith.truncf %0 : vector<32x32xf32> to vector<32x32xbf16>
    %c0_1 = arith.constant 0 : index
    %c0_2 = arith.constant 0 : index
    %2 = vector.load %arg2[%c0_1, %c0_2] : memref<32x64xbf16, #tpu.memory_space<vmem>>, vector<32x64xbf16>
    %cst = arith.constant dense<0.000000e+00> : vector<32x64xf32>
    %3 = tpu.matmul %1, %2, %cst {dimension_numbers = #tpu.dot_dimension_numbers<[1], [0], [0], [1], [0, 0, 1, 1], [], []>} : vector<32x32xbf16>, vector<32x64xbf16>, vector<32x64xf32> -> vector<32x64xf32>
    %c0_3 = arith.constant 0 : index
    %c0_4 = arith.constant 0 : index
    %4 = vector.load %arg3[%c0_3, %c0_4] : memref<1x64xf32, #tpu.memory_space<vmem>>, vector<1x64xf32>
    %5 = vector.broadcast %4 : vector<1x64xf32> to vector<32x64xf32>
    %6 = arith.addf %3, %5 : vector<32x64xf32>
    %7 = vector.extract_strided_slice %6 {offsets = [0, 0], sizes = [32, 32], strides = [1, 1]} : vector<32x64xf32> to vector<32x32xf32>
    %8 = arith.truncf %7 : vector<32x32xf32> to vector<32x32xbf16>
    %c0_5 = arith.constant 0 : index
    %c0_6 = arith.constant 0 : index
    %9 = vector.load %arg4[%c0_5, %c0_6] : memref<32x32xbf16, #tpu.memory_space<vmem>>, vector<32x32xbf16>
    tpu.vector_store %arg4[%c0_5, %c0_6], %8 {strides = array<i32>} : memref<32x32xbf16, #tpu.memory_space<vmem>>, vector<32x32xbf16>,
    %10 = vector.extract_strided_slice %6 {offsets = [0, 32], sizes = [32, 32], strides = [1, 1]} : vector<32x64xf32> to vector<32x32xf32>
    %11 = arith.truncf %10 : vector<32x32xf32> to vector<32x32xbf16>
    %c0_7 = arith.constant 0 : index
    %c0_8 = arith.constant 0 : index
    %12 = vector.load %arg5[%c0_7, %c0_8] : memref<32x32xbf16, #tpu.memory_space<vmem>>, vector<32x32xbf16>
    tpu.vector_store %arg5[%c0_7, %c0_8], %11 {strides = array<i32>} : memref<32x32xbf16, #tpu.memory_space<vmem>>, vector<32x32xbf16>,
    return
  }
  func.func @transform_0(%arg0: i32) -> (i32, i32) {
    %c0_i32 = arith.constant 0 : i32
    %c0_i32_0 = arith.constant 0 : i32
    return %arg0, %c0_i32 : i32, i32
  }
  func.func @transform_1(%arg0: i32) -> (i32, i32) {
    %c0_i32 = arith.constant 0 : i32
    %c0_i32_0 = arith.constant 0 : i32
    %c0_i32_1 = arith.constant 0 : i32
    return %c0_i32, %c0_i32_0 : i32, i32
  }
  func.func @transform_2(%arg0: i32) -> (i32, i32) {
    %c0_i32 = arith.constant 0 : i32
    %c0_i32_0 = arith.constant 0 : i32
    %c0_i32_1 = arith.constant 0 : i32
    return %c0_i32, %c0_i32_0 : i32, i32
  }
  func.func @transform_3(%arg0: i32) -> (i32, i32) {
    %c0_i32 = arith.constant 0 : i32
    %c0_i32_0 = arith.constant 0 : i32
    return %arg0, %c0_i32 : i32, i32
  }
  func.func @transform_4(%arg0: i32) -> (i32, i32) {
    %c0_i32 = arith.constant 0 : i32
    %c0_i32_0 = arith.constant 0 : i32
    return %arg0, %c0_i32 : i32, i32
  }
}

module attributes {stable_mosaic.version = 11 : i64} {
  func.func @ffn_kernel(%arg0: i32, %arg1: i32, %arg2: memref<16x32xf32, #tpu.memory_space<vmem>>, %arg3: memref<1x32xf32, #tpu.memory_space<vmem>>, %arg4: memref<1x32xf32, #tpu.memory_space<vmem>>, %arg5: memref<32x64xbf16, #tpu.memory_space<vmem>>, %arg6: memref<1x64xf32, #tpu.memory_space<vmem>>, %arg7: memref<64x32xbf16, #tpu.memory_space<vmem>>, %arg8: memref<1x32xf32, #tpu.memory_space<vmem>>, %arg9: memref<16x32xf32, #tpu.memory_space<vmem>>, %arg10: memref<16x32xf32, #tpu.memory_space<vmem>>, %arg11: memref<16x32xf32, #tpu.memory_space<vmem>>) attributes {dimension_semantics = [#tpu.dimension_semantics<parallel>, #tpu.dimension_semantics<arbitrary>], iteration_bounds = array<i64: 1, 1>, scalar_prefetch = 0 : i64, scratch_operands = 2 : i64, tpu.core_type = #tpu.core_type<tc>, window_params = [{transform_indices = @transform_0, window_bounds = array<i64: 16, 32>}, {pipeline_mode = #tpu.pipeline_mode<synchronous>, transform_indices = @transform_1, window_bounds = array<i64: 1, 32>}, {pipeline_mode = #tpu.pipeline_mode<synchronous>, transform_indices = @transform_2, window_bounds = array<i64: 1, 32>}, {transform_indices = @transform_3, window_bounds = array<i64: 32, 64>}, {transform_indices = @transform_4, window_bounds = array<i64: 1, 64>}, {transform_indices = @transform_5, window_bounds = array<i64: 64, 32>}, {pipeline_mode = #tpu.pipeline_mode<synchronous>, transform_indices = @transform_6, window_bounds = array<i64: 1, 32>}, {transform_indices = @transform_7, window_bounds = array<i64: 16, 32>}]} {
    %c0_i32 = arith.constant 0 : i32
    %0 = arith.cmpi eq, %arg1, %c0_i32 : i32
    %1 = arith.extui %0 : i1 to i32
    %c0_i32_0 = arith.constant 0 : i32
    %2 = arith.cmpi ne, %1, %c0_i32_0 : i32
    scf.if %2 {
      %c0_19 = arith.constant 0 : index
      %c0_20 = arith.constant 0 : index
      %32 = vector.load %arg2[%c0_19, %c0_20] : memref<16x32xf32, #tpu.memory_space<vmem>>, vector<16x32xf32>
      %cst_21 = arith.constant dense<0.000000e+00> : vector<16xf32>
      %33 = vector.multi_reduction <add>, %32, %cst_21 [1] : vector<16x32xf32> to vector<16xf32>
      %34 = vector.shape_cast %33 : vector<16xf32> to vector<16x1xf32>
      %cst_22 = arith.constant 3.200000e+01 : f32
      %35 = vector.broadcast %cst_22 : f32 to vector<16x1xf32>
      %36 = arith.divf %34, %35 : vector<16x1xf32>
      %37 = vector.broadcast %36 : vector<16x1xf32> to vector<16x32xf32>
      %38 = arith.subf %32, %37 : vector<16x32xf32>
      %39 = arith.mulf %38, %38 : vector<16x32xf32>
      %cst_23 = arith.constant dense<0.000000e+00> : vector<16xf32>
      %40 = vector.multi_reduction <add>, %39, %cst_23 [1] : vector<16x32xf32> to vector<16xf32>
      %41 = vector.shape_cast %40 : vector<16xf32> to vector<16x1xf32>
      %cst_24 = arith.constant 3.200000e+01 : f32
      %42 = vector.broadcast %cst_24 : f32 to vector<16x1xf32>
      %43 = arith.divf %41, %42 : vector<16x1xf32>
      %44 = vector.broadcast %36 : vector<16x1xf32> to vector<16x32xf32>
      %45 = arith.subf %32, %44 : vector<16x32xf32>
      %cst_25 = arith.constant 9.99999997E-7 : f32
      %46 = vector.broadcast %cst_25 : f32 to vector<16x1xf32>
      %47 = arith.addf %43, %46 : vector<16x1xf32>
      %48 = math.rsqrt %47 : vector<16x1xf32>
      %49 = vector.broadcast %48 : vector<16x1xf32> to vector<16x32xf32>
      %50 = arith.mulf %45, %49 : vector<16x32xf32>
      %c0_26 = arith.constant 0 : index
      %c0_27 = arith.constant 0 : index
      %51 = vector.load %arg3[%c0_26, %c0_27] : memref<1x32xf32, #tpu.memory_space<vmem>>, vector<1x32xf32>
      %52 = vector.broadcast %51 : vector<1x32xf32> to vector<16x32xf32>
      %53 = arith.mulf %50, %52 : vector<16x32xf32>
      %c0_28 = arith.constant 0 : index
      %c0_29 = arith.constant 0 : index
      %54 = vector.load %arg4[%c0_28, %c0_29] : memref<1x32xf32, #tpu.memory_space<vmem>>, vector<1x32xf32>
      %55 = vector.broadcast %54 : vector<1x32xf32> to vector<16x32xf32>
      %56 = arith.addf %53, %55 : vector<16x32xf32>
      %c0_30 = arith.constant 0 : index
      %c0_31 = arith.constant 0 : index
      %57 = vector.load %arg10[%c0_30, %c0_31] : memref<16x32xf32, #tpu.memory_space<vmem>>, vector<16x32xf32>
      tpu.vector_store %arg10[%c0_30, %c0_31], %56 {strides = array<i32>} : memref<16x32xf32, #tpu.memory_space<vmem>>, vector<16x32xf32>,
      %cst_32 = arith.constant 0.000000e+00 : f32
      %58 = vector.broadcast %cst_32 : f32 to vector<16x32xf32>
      %c0_33 = arith.constant 0 : index
      %c0_34 = arith.constant 0 : index
      %59 = vector.load %arg11[%c0_33, %c0_34] : memref<16x32xf32, #tpu.memory_space<vmem>>, vector<16x32xf32>
      tpu.vector_store %arg11[%c0_33, %c0_34], %58 {strides = array<i32>} : memref<16x32xf32, #tpu.memory_space<vmem>>, vector<16x32xf32>,
    } else {
    }
    %c0 = arith.constant 0 : index
    %c0_1 = arith.constant 0 : index
    %3 = vector.load %arg10[%c0, %c0_1] : memref<16x32xf32, #tpu.memory_space<vmem>>, vector<16x32xf32>
    %4 = arith.truncf %3 : vector<16x32xf32> to vector<16x32xbf16>
    %c0_2 = arith.constant 0 : index
    %c0_3 = arith.constant 0 : index
    %5 = vector.load %arg5[%c0_2, %c0_3] : memref<32x64xbf16, #tpu.memory_space<vmem>>, vector<32x64xbf16>
    %cst = arith.constant dense<0.000000e+00> : vector<16x64xf32>
    %6 = tpu.matmul %4, %5, %cst {dimension_numbers = #tpu.dot_dimension_numbers<[1], [0], [0], [1], [0, 0, 1, 1], [], []>} : vector<16x32xbf16>, vector<32x64xbf16>, vector<16x64xf32> -> vector<16x64xf32>
    %c0_4 = arith.constant 0 : index
    %c0_5 = arith.constant 0 : index
    %7 = vector.load %arg6[%c0_4, %c0_5] : memref<1x64xf32, #tpu.memory_space<vmem>>, vector<1x64xf32>
    %8 = vector.broadcast %7 : vector<1x64xf32> to vector<16x64xf32>
    %9 = arith.addf %6, %8 : vector<16x64xf32>
    %cst_6 = arith.constant 5.000000e-01 : f32
    %10 = vector.broadcast %cst_6 : f32 to vector<16x64xf32>
    %11 = arith.mulf %10, %9 : vector<16x64xf32>
    %cst_7 = arith.constant 4.471500e-02 : f32
    %12 = vector.broadcast %cst_7 : f32 to vector<16x64xf32>
    %13 = arith.mulf %12, %9 : vector<16x64xf32>
    %14 = arith.mulf %13, %9 : vector<16x64xf32>
    %15 = arith.mulf %14, %9 : vector<16x64xf32>
    %16 = arith.addf %9, %15 : vector<16x64xf32>
    %cst_8 = arith.constant 0.797884583 : f32
    %17 = vector.broadcast %cst_8 : f32 to vector<16x64xf32>
    %18 = arith.mulf %17, %16 : vector<16x64xf32>
    %19 = math.tanh %18 : vector<16x64xf32>
    %cst_9 = arith.constant 1.000000e+00 : f32
    %20 = vector.broadcast %cst_9 : f32 to vector<16x64xf32>
    %21 = arith.addf %20, %19 : vector<16x64xf32>
    %22 = arith.mulf %11, %21 : vector<16x64xf32>
    %c0_10 = arith.constant 0 : index
    %c0_11 = arith.constant 0 : index
    %23 = vector.load %arg11[%c0_10, %c0_11] : memref<16x32xf32, #tpu.memory_space<vmem>>, vector<16x32xf32>
    %24 = arith.truncf %22 : vector<16x64xf32> to vector<16x64xbf16>
    %c0_12 = arith.constant 0 : index
    %c0_13 = arith.constant 0 : index
    %25 = vector.load %arg7[%c0_12, %c0_13] : memref<64x32xbf16, #tpu.memory_space<vmem>>, vector<64x32xbf16>
    %cst_14 = arith.constant dense<0.000000e+00> : vector<16x32xf32>
    %26 = tpu.matmul %24, %25, %cst_14 {dimension_numbers = #tpu.dot_dimension_numbers<[1], [0], [0], [1], [0, 0, 1, 1], [], []>} : vector<16x64xbf16>, vector<64x32xbf16>, vector<16x32xf32> -> vector<16x32xf32>
    %27 = arith.addf %23, %26 : vector<16x32xf32>
    %c0_15 = arith.constant 0 : index
    %c0_16 = arith.constant 0 : index
    %28 = vector.load %arg11[%c0_15, %c0_16] : memref<16x32xf32, #tpu.memory_space<vmem>>, vector<16x32xf32>
    tpu.vector_store %arg11[%c0_15, %c0_16], %27 {strides = array<i32>} : memref<16x32xf32, #tpu.memory_space<vmem>>, vector<16x32xf32>,
    %c0_i32_17 = arith.constant 0 : i32
    %29 = arith.cmpi eq, %arg1, %c0_i32_17 : i32
    %30 = arith.extui %29 : i1 to i32
    %c0_i32_18 = arith.constant 0 : i32
    %31 = arith.cmpi ne, %30, %c0_i32_18 : i32
    scf.if %31 {
      %c0_19 = arith.constant 0 : index
      %c0_20 = arith.constant 0 : index
      %32 = vector.load %arg11[%c0_19, %c0_20] : memref<16x32xf32, #tpu.memory_space<vmem>>, vector<16x32xf32>
      %c0_21 = arith.constant 0 : index
      %c0_22 = arith.constant 0 : index
      %33 = vector.load %arg8[%c0_21, %c0_22] : memref<1x32xf32, #tpu.memory_space<vmem>>, vector<1x32xf32>
      %34 = vector.broadcast %33 : vector<1x32xf32> to vector<16x32xf32>
      %35 = arith.addf %32, %34 : vector<16x32xf32>
      %c0_23 = arith.constant 0 : index
      %c0_24 = arith.constant 0 : index
      %36 = vector.load %arg2[%c0_23, %c0_24] : memref<16x32xf32, #tpu.memory_space<vmem>>, vector<16x32xf32>
      %37 = arith.addf %35, %36 : vector<16x32xf32>
      %c0_25 = arith.constant 0 : index
      %c0_26 = arith.constant 0 : index
      %38 = vector.load %arg9[%c0_25, %c0_26] : memref<16x32xf32, #tpu.memory_space<vmem>>, vector<16x32xf32>
      tpu.vector_store %arg9[%c0_25, %c0_26], %37 {strides = array<i32>} : memref<16x32xf32, #tpu.memory_space<vmem>>, vector<16x32xf32>,
    } else {
    }
    return
  }
  func.func @transform_0(%arg0: i32, %arg1: i32) -> (i32, i32) {
    %c0_i32 = arith.constant 0 : i32
    %c0_i32_0 = arith.constant 0 : i32
    return %arg0, %c0_i32 : i32, i32
  }
  func.func @transform_1(%arg0: i32, %arg1: i32) -> (i32, i32) {
    %c0_i32 = arith.constant 0 : i32
    %c0_i32_0 = arith.constant 0 : i32
    %c0_i32_1 = arith.constant 0 : i32
    return %c0_i32, %c0_i32_0 : i32, i32
  }
  func.func @transform_2(%arg0: i32, %arg1: i32) -> (i32, i32) {
    %c0_i32 = arith.constant 0 : i32
    %c0_i32_0 = arith.constant 0 : i32
    %c0_i32_1 = arith.constant 0 : i32
    return %c0_i32, %c0_i32_0 : i32, i32
  }
  func.func @transform_3(%arg0: i32, %arg1: i32) -> (i32, i32) {
    %c0_i32 = arith.constant 0 : i32
    %c0_i32_0 = arith.constant 0 : i32
    return %c0_i32, %arg1 : i32, i32
  }
  func.func @transform_4(%arg0: i32, %arg1: i32) -> (i32, i32) {
    %c0_i32 = arith.constant 0 : i32
    %c0_i32_0 = arith.constant 0 : i32
    return %c0_i32, %arg1 : i32, i32
  }
  func.func @transform_5(%arg0: i32, %arg1: i32) -> (i32, i32) {
    %c0_i32 = arith.constant 0 : i32
    %c0_i32_0 = arith.constant 0 : i32
    return %arg1, %c0_i32 : i32, i32
  }
  func.func @transform_6(%arg0: i32, %arg1: i32) -> (i32, i32) {
    %c0_i32 = arith.constant 0 : i32
    %c0_i32_0 = arith.constant 0 : i32
    %c0_i32_1 = arith.constant 0 : i32
    return %c0_i32, %c0_i32_0 : i32, i32
  }
  func.func @transform_7(%arg0: i32, %arg1: i32) -> (i32, i32) {
    %c0_i32 = arith.constant 0 : i32
    %c0_i32_0 = arith.constant 0 : i32
    return %arg0, %c0_i32 : i32, i32
  }
}

module attributes {stable_mosaic.version = 11 : i64} {
  func.func @flash_attn_kernel(%arg0: i32, %arg1: i32, %arg2: i32, %arg3: memref<1x1x16xf32, #tpu.memory_space<vmem>>, %arg4: memref<1x8x32xf32, #tpu.memory_space<vmem>>, %arg5: memref<1x8x32xbf16, #tpu.memory_space<vmem>>, %arg6: memref<1x16x32xbf16, #tpu.memory_space<vmem>>, %arg7: memref<1x16x32xbf16, #tpu.memory_space<vmem>>, %arg8: memref<32x32xbf16, #tpu.memory_space<vmem>>, %arg9: memref<1x32xf32, #tpu.memory_space<vmem>>, %arg10: memref<1x8x32xf32, #tpu.memory_space<vmem>>, %arg11: memref<8x4xf32, #tpu.memory_space<vmem>>, %arg12: memref<8x4xf32, #tpu.memory_space<vmem>>, %arg13: memref<8x32xf32, #tpu.memory_space<vmem>>) attributes {dimension_semantics = [#tpu.dimension_semantics<parallel>, #tpu.dimension_semantics<parallel>, #tpu.dimension_semantics<arbitrary>], iteration_bounds = array<i64: 2, 1, 1>, scalar_prefetch = 0 : i64, scratch_operands = 3 : i64, tpu.core_type = #tpu.core_type<tc>, window_params = [{transform_indices = @transform_0, window_bounds = array<i64: 1, 1, 16>}, {transform_indices = @transform_1, window_bounds = array<i64: 1, 8, 32>}, {transform_indices = @transform_2, window_bounds = array<i64: 1, 8, 32>}, {transform_indices = @transform_3, window_bounds = array<i64: 1, 16, 32>}, {transform_indices = @transform_4, window_bounds = array<i64: 1, 16, 32>}, {pipeline_mode = #tpu.pipeline_mode<synchronous>, transform_indices = @transform_5, window_bounds = array<i64: 32, 32>}, {pipeline_mode = #tpu.pipeline_mode<synchronous>, transform_indices = @transform_6, window_bounds = array<i64: 1, 32>}, {transform_indices = @transform_7, window_bounds = array<i64: 1, 8, 32>}]} {
    %c0_i32 = arith.constant 0 : i32
    %0 = arith.cmpi eq, %arg2, %c0_i32 : i32
    %1 = arith.extui %0 : i1 to i32
    %c0_i32_0 = arith.constant 0 : i32
    %2 = arith.cmpi ne, %1, %c0_i32_0 : i32
    scf.if %2 {
      %cst_80 = arith.constant 0xFF800000 : f32
      %142 = vector.broadcast %cst_80 : f32 to vector<8x4xf32>
      %c0_81 = arith.constant 0 : index
      %c0_82 = arith.constant 0 : index
      %143 = vector.load %arg11[%c0_81, %c0_82] : memref<8x4xf32, #tpu.memory_space<vmem>>, vector<8x4xf32>
      tpu.vector_store %arg11[%c0_81, %c0_82], %142 {strides = array<i32>} : memref<8x4xf32, #tpu.memory_space<vmem>>, vector<8x4xf32>,
      %cst_83 = arith.constant 0.000000e+00 : f32
      %144 = vector.broadcast %cst_83 : f32 to vector<8x4xf32>
      %c0_84 = arith.constant 0 : index
      %c0_85 = arith.constant 0 : index
      %145 = vector.load %arg12[%c0_84, %c0_85] : memref<8x4xf32, #tpu.memory_space<vmem>>, vector<8x4xf32>
      tpu.vector_store %arg12[%c0_84, %c0_85], %144 {strides = array<i32>} : memref<8x4xf32, #tpu.memory_space<vmem>>, vector<8x4xf32>,
      %cst_86 = arith.constant 0.000000e+00 : f32
      %146 = vector.broadcast %cst_86 : f32 to vector<8x32xf32>
      %c0_87 = arith.constant 0 : index
      %c0_88 = arith.constant 0 : index
      %147 = vector.load %arg13[%c0_87, %c0_88] : memref<8x32xf32, #tpu.memory_space<vmem>>, vector<8x32xf32>
      tpu.vector_store %arg13[%c0_87, %c0_88], %146 {strides = array<i32>} : memref<8x32xf32, #tpu.memory_space<vmem>>, vector<8x32xf32>,
    } else {
    }
    %c0 = arith.constant 0 : index
    %c0_1 = arith.constant 0 : index
    %c0_2 = arith.constant 0 : index
    %3 = vector.load %arg5[%c0, %c0_1, %c0_2] : memref<1x8x32xbf16, #tpu.memory_space<vmem>>, vector<1x8x32xbf16>
    %4 = vector.shape_cast %3 : vector<1x8x32xbf16> to vector<8x32xbf16>
    %c0_3 = arith.constant 0 : index
    %c0_4 = arith.constant 0 : index
    %c0_5 = arith.constant 0 : index
    %5 = vector.load %arg6[%c0_3, %c0_4, %c0_5] : memref<1x16x32xbf16, #tpu.memory_space<vmem>>, vector<1x16x32xbf16>
    %6 = vector.shape_cast %5 : vector<1x16x32xbf16> to vector<16x32xbf16>
    %c0_6 = arith.constant 0 : index
    %c0_7 = arith.constant 0 : index
    %c0_8 = arith.constant 0 : index
    %7 = vector.load %arg7[%c0_6, %c0_7, %c0_8] : memref<1x16x32xbf16, #tpu.memory_space<vmem>>, vector<1x16x32xbf16>
    %8 = vector.shape_cast %7 : vector<1x16x32xbf16> to vector<16x32xbf16>
    %c0_9 = arith.constant 0 : index
    %c0_10 = arith.constant 0 : index
    %c0_11 = arith.constant 0 : index
    %9 = vector.load %arg3[%c0_9, %c0_10, %c0_11] : memref<1x1x16xf32, #tpu.memory_space<vmem>>, vector<1x1x16xf32>
    %10 = vector.shape_cast %9 : vector<1x1x16xf32> to vector<1x16xf32>
    %cst = arith.constant 0.000000e+00 : f32
    %11 = vector.broadcast %cst : f32 to vector<1x16xf32>
    %12 = arith.cmpf ogt, %10, %11 : vector<1x16xf32>
    %13 = vector.shape_cast %12 : vector<1x16xi1> to vector<1x16xi1>
    %14 = vector.broadcast %13 : vector<1x16xi1> to vector<8x16xi1>
    %15 = vector.extract_strided_slice %4 {offsets = [0, 0], sizes = [8, 8], strides = [1, 1]} : vector<8x32xbf16> to vector<8x8xbf16>
    %16 = vector.extract_strided_slice %6 {offsets = [0, 0], sizes = [16, 8], strides = [1, 1]} : vector<16x32xbf16> to vector<16x8xbf16>
    %cst_12 = arith.constant dense<0.000000e+00> : vector<8x16xf32>
    %17 = tpu.matmul %15, %16, %cst_12 {dimension_numbers = #tpu.dot_dimension_numbers<[1], [1], [0], [0], [0, 0, 1, 0], [], []>} : vector<8x8xbf16>, vector<16x8xbf16>, vector<8x16xf32> -> vector<8x16xf32>
    %cst_13 = arith.constant 0.353553385 : f32
    %18 = vector.broadcast %cst_13 : f32 to vector<8x16xf32>
    %19 = arith.mulf %17, %18 : vector<8x16xf32>
    %cst_14 = arith.constant -9.99999984E+17 : f32
    %20 = vector.broadcast %cst_14 : f32 to vector<8x16xf32>
    %21 = arith.select %14, %20, %19 : vector<8x16xi1>, vector<8x16xf32>
    %c0_15 = arith.constant 0 : index
    %c0_16 = arith.constant 0 : index
    %22 = vector.load %arg11[%c0_15, %c0_16] : memref<8x4xf32, #tpu.memory_space<vmem>>, vector<8x1xf32>
    %cst_17 = arith.constant dense<0xFF800000> : vector<8xf32>
    %23 = vector.multi_reduction <maximumf>, %21, %cst_17 [1] : vector<8x16xf32> to vector<8xf32>
    %24 = vector.shape_cast %23 : vector<8xf32> to vector<8x1xf32>
    %25 = arith.maximumf %22, %24 : vector<8x1xf32>
    %26 = arith.subf %22, %25 : vector<8x1xf32>
    %27 = math.exp %26 : vector<8x1xf32>
    %28 = vector.broadcast %25 : vector<8x1xf32> to vector<8x16xf32>
    %29 = arith.subf %21, %28 : vector<8x16xf32>
    %30 = math.exp %29 : vector<8x16xf32>
    %c0_18 = arith.constant 0 : index
    %c0_19 = arith.constant 0 : index
    %31 = vector.load %arg12[%c0_18, %c0_19] : memref<8x4xf32, #tpu.memory_space<vmem>>, vector<8x1xf32>
    %32 = arith.mulf %27, %31 : vector<8x1xf32>
    %cst_20 = arith.constant dense<0.000000e+00> : vector<8xf32>
    %33 = vector.multi_reduction <add>, %30, %cst_20 [1] : vector<8x16xf32> to vector<8xf32>
    %34 = vector.shape_cast %33 : vector<8xf32> to vector<8x1xf32>
    %35 = arith.addf %32, %34 : vector<8x1xf32>
    %c0_21 = arith.constant 0 : index
    %c0_22 = arith.constant 0 : index
    %36 = vector.load %arg12[%c0_21, %c0_22] : memref<8x4xf32, #tpu.memory_space<vmem>>, vector<8x1xf32>
    tpu.vector_store %arg12[%c0_21, %c0_22], %35 {strides = array<i32>} : memref<8x4xf32, #tpu.memory_space<vmem>>, vector<8x1xf32>,
    %c0_23 = arith.constant 0 : index
    %c0_24 = arith.constant 0 : index
    %37 = vector.load %arg13[%c0_23, %c0_24] : memref<8x32xf32, #tpu.memory_space<vmem>>, vector<8x8xf32>
    %38 = vector.broadcast %27 : vector<8x1xf32> to vector<8x8xf32>
    %39 = arith.mulf %38, %37 : vector<8x8xf32>
    %40 = arith.truncf %30 : vector<8x16xf32> to vector<8x16xbf16>
    %41 = vector.extract_strided_slice %8 {offsets = [0, 0], sizes = [16, 8], strides = [1, 1]} : vector<16x32xbf16> to vector<16x8xbf16>
    %cst_25 = arith.constant dense<0.000000e+00> : vector<8x8xf32>
    %42 = tpu.matmul %40, %41, %cst_25 {dimension_numbers = #tpu.dot_dimension_numbers<[1], [0], [0], [1], [0, 0, 1, 1], [], []>} : vector<8x16xbf16>, vector<16x8xbf16>, vector<8x8xf32> -> vector<8x8xf32>
    %43 = arith.addf %39, %42 : vector<8x8xf32>
    %c0_26 = arith.constant 0 : index
    %c0_27 = arith.constant 0 : index
    %44 = vector.load %arg13[%c0_26, %c0_27] : memref<8x32xf32, #tpu.memory_space<vmem>>, vector<8x8xf32>
    tpu.vector_store %arg13[%c0_26, %c0_27], %43 {strides = array<i32>} : memref<8x32xf32, #tpu.memory_space<vmem>>, vector<8x8xf32>,
    %c0_28 = arith.constant 0 : index
    %c0_29 = arith.constant 0 : index
    %45 = vector.load %arg11[%c0_28, %c0_29] : memref<8x4xf32, #tpu.memory_space<vmem>>, vector<8x1xf32>
    tpu.vector_store %arg11[%c0_28, %c0_29], %25 {strides = array<i32>} : memref<8x4xf32, #tpu.memory_space<vmem>>, vector<8x1xf32>,
    %46 = vector.extract_strided_slice %4 {offsets = [0, 8], sizes = [8, 8], strides = [1, 1]} : vector<8x32xbf16> to vector<8x8xbf16>
    %47 = vector.extract_strided_slice %6 {offsets = [0, 8], sizes = [16, 8], strides = [1, 1]} : vector<16x32xbf16> to vector<16x8xbf16>
    %cst_30 = arith.constant dense<0.000000e+00> : vector<8x16xf32>
    %48 = tpu.matmul %46, %47, %cst_30 {dimension_numbers = #tpu.dot_dimension_numbers<[1], [1], [0], [0], [0, 0, 1, 0], [], []>} : vector<8x8xbf16>, vector<16x8xbf16>, vector<8x16xf32> -> vector<8x16xf32>
    %cst_31 = arith.constant 0.353553385 : f32
    %49 = vector.broadcast %cst_31 : f32 to vector<8x16xf32>
    %50 = arith.mulf %48, %49 : vector<8x16xf32>
    %cst_32 = arith.constant -9.99999984E+17 : f32
    %51 = vector.broadcast %cst_32 : f32 to vector<8x16xf32>
    %52 = arith.select %14, %51, %50 : vector<8x16xi1>, vector<8x16xf32>
    %c0_33 = arith.constant 0 : index
    %c1 = arith.constant 1 : index
    %53 = vector.load %arg11[%c0_33, %c1] : memref<8x4xf32, #tpu.memory_space<vmem>>, vector<8x1xf32>
    %cst_34 = arith.constant dense<0xFF800000> : vector<8xf32>
    %54 = vector.multi_reduction <maximumf>, %52, %cst_34 [1] : vector<8x16xf32> to vector<8xf32>
    %55 = vector.shape_cast %54 : vector<8xf32> to vector<8x1xf32>
    %56 = arith.maximumf %53, %55 : vector<8x1xf32>
    %57 = arith.subf %53, %56 : vector<8x1xf32>
    %58 = math.exp %57 : vector<8x1xf32>
    %59 = vector.broadcast %56 : vector<8x1xf32> to vector<8x16xf32>
    %60 = arith.subf %52, %59 : vector<8x16xf32>
    %61 = math.exp %60 : vector<8x16xf32>
    %c0_35 = arith.constant 0 : index
    %c1_36 = arith.constant 1 : index
    %62 = vector.load %arg12[%c0_35, %c1_36] : memref<8x4xf32, #tpu.memory_space<vmem>>, vector<8x1xf32>
    %63 = arith.mulf %58, %62 : vector<8x1xf32>
    %cst_37 = arith.constant dense<0.000000e+00> : vector<8xf32>
    %64 = vector.multi_reduction <add>, %61, %cst_37 [1] : vector<8x16xf32> to vector<8xf32>
    %65 = vector.shape_cast %64 : vector<8xf32> to vector<8x1xf32>
    %66 = arith.addf %63, %65 : vector<8x1xf32>
    %c0_38 = arith.constant 0 : index
    %c1_39 = arith.constant 1 : index
    %67 = vector.load %arg12[%c0_38, %c1_39] : memref<8x4xf32, #tpu.memory_space<vmem>>, vector<8x1xf32>
    tpu.vector_store %arg12[%c0_38, %c1_39], %66 {strides = array<i32>} : memref<8x4xf32, #tpu.memory_space<vmem>>, vector<8x1xf32>,
    %c0_40 = arith.constant 0 : index
    %c8 = arith.constant 8 : index
    %68 = vector.load %arg13[%c0_40, %c8] : memref<8x32xf32, #tpu.memory_space<vmem>>, vector<8x8xf32>
    %69 = vector.broadcast %58 : vector<8x1xf32> to vector<8x8xf32>
    %70 = arith.mulf %69, %68 : vector<8x8xf32>
    %71 = arith.truncf %61 : vector<8x16xf32> to vector<8x16xbf16>
    %72 = vector.extract_strided_slice %8 {offsets = [0, 8], sizes = [16, 8], strides = [1, 1]} : vector<16x32xbf16> to vector<16x8xbf16>
    %cst_41 = arith.constant dense<0.000000e+00> : vector<8x8xf32>
    %73 = tpu.matmul %71, %72, %cst_41 {dimension_numbers = #tpu.dot_dimension_numbers<[1], [0], [0], [1], [0, 0, 1, 1], [], []>} : vector<8x16xbf16>, vector<16x8xbf16>, vector<8x8xf32> -> vector<8x8xf32>
    %74 = arith.addf %70, %73 : vector<8x8xf32>
    %c0_42 = arith.constant 0 : index
    %c8_43 = arith.constant 8 : index
    %75 = vector.load %arg13[%c0_42, %c8_43] : memref<8x32xf32, #tpu.memory_space<vmem>>, vector<8x8xf32>
    tpu.vector_store %arg13[%c0_42, %c8_43], %74 {strides = array<i32>} : memref<8x32xf32, #tpu.memory_space<vmem>>, vector<8x8xf32>,
    %c0_44 = arith.constant 0 : index
    %c1_45 = arith.constant 1 : index
    %76 = vector.load %arg11[%c0_44, %c1_45] : memref<8x4xf32, #tpu.memory_space<vmem>>, vector<8x1xf32>
    tpu.vector_store %arg11[%c0_44, %c1_45], %56 {strides = array<i32>} : memref<8x4xf32, #tpu.memory_space<vmem>>, vector<8x1xf32>,
    %77 = vector.extract_strided_slice %4 {offsets = [0, 16], sizes = [8, 8], strides = [1, 1]} : vector<8x32xbf16> to vector<8x8xbf16>
    %78 = vector.extract_strided_slice %6 {offsets = [0, 16], sizes = [16, 8], strides = [1, 1]} : vector<16x32xbf16> to vector<16x8xbf16>
    %cst_46 = arith.constant dense<0.000000e+00> : vector<8x16xf32>
    %79 = tpu.matmul %77, %78, %cst_46 {dimension_numbers = #tpu.dot_dimension_numbers<[1], [1], [0], [0], [0, 0, 1, 0], [], []>} : vector<8x8xbf16>, vector<16x8xbf16>, vector<8x16xf32> -> vector<8x16xf32>
    %cst_47 = arith.constant 0.353553385 : f32
    %80 = vector.broadcast %cst_47 : f32 to vector<8x16xf32>
    %81 = arith.mulf %79, %80 : vector<8x16xf32>
    %cst_48 = arith.constant -9.99999984E+17 : f32
    %82 = vector.broadcast %cst_48 : f32 to vector<8x16xf32>
    %83 = arith.select %14, %82, %81 : vector<8x16xi1>, vector<8x16xf32>
    %c0_49 = arith.constant 0 : index
    %c2 = arith.constant 2 : index
    %84 = vector.load %arg11[%c0_49, %c2] : memref<8x4xf32, #tpu.memory_space<vmem>>, vector<8x1xf32>
    %cst_50 = arith.constant dense<0xFF800000> : vector<8xf32>
    %85 = vector.multi_reduction <maximumf>, %83, %cst_50 [1] : vector<8x16xf32> to vector<8xf32>
    %86 = vector.shape_cast %85 : vector<8xf32> to vector<8x1xf32>
    %87 = arith.maximumf %84, %86 : vector<8x1xf32>
    %88 = arith.subf %84, %87 : vector<8x1xf32>
    %89 = math.exp %88 : vector<8x1xf32>
    %90 = vector.broadcast %87 : vector<8x1xf32> to vector<8x16xf32>
    %91 = arith.subf %83, %90 : vector<8x16xf32>
    %92 = math.exp %91 : vector<8x16xf32>
    %c0_51 = arith.constant 0 : index
    %c2_52 = arith.constant 2 : index
    %93 = vector.load %arg12[%c0_51, %c2_52] : memref<8x4xf32, #tpu.memory_space<vmem>>, vector<8x1xf32>
    %94 = arith.mulf %89, %93 : vector<8x1xf32>
    %cst_53 = arith.constant dense<0.000000e+00> : vector<8xf32>
    %95 = vector.multi_reduction <add>, %92, %cst_53 [1] : vector<8x16xf32> to vector<8xf32>
    %96 = vector.shape_cast %95 : vector<8xf32> to vector<8x1xf32>
    %97 = arith.addf %94, %96 : vector<8x1xf32>
    %c0_54 = arith.constant 0 : index
    %c2_55 = arith.constant 2 : index
    %98 = vector.load %arg12[%c0_54, %c2_55] : memref<8x4xf32, #tpu.memory_space<vmem>>, vector<8x1xf32>
    tpu.vector_store %arg12[%c0_54, %c2_55], %97 {strides = array<i32>} : memref<8x4xf32, #tpu.memory_space<vmem>>, vector<8x1xf32>,
    %c0_56 = arith.constant 0 : index
    %c16 = arith.constant 16 : index
    %99 = vector.load %arg13[%c0_56, %c16] : memref<8x32xf32, #tpu.memory_space<vmem>>, vector<8x8xf32>
    %100 = vector.broadcast %89 : vector<8x1xf32> to vector<8x8xf32>
    %101 = arith.mulf %100, %99 : vector<8x8xf32>
    %102 = arith.truncf %92 : vector<8x16xf32> to vector<8x16xbf16>
    %103 = vector.extract_strided_slice %8 {offsets = [0, 16], sizes = [16, 8], strides = [1, 1]} : vector<16x32xbf16> to vector<16x8xbf16>
    %cst_57 = arith.constant dense<0.000000e+00> : vector<8x8xf32>
    %104 = tpu.matmul %102, %103, %cst_57 {dimension_numbers = #tpu.dot_dimension_numbers<[1], [0], [0], [1], [0, 0, 1, 1], [], []>} : vector<8x16xbf16>, vector<16x8xbf16>, vector<8x8xf32> -> vector<8x8xf32>
    %105 = arith.addf %101, %104 : vector<8x8xf32>
    %c0_58 = arith.constant 0 : index
    %c16_59 = arith.constant 16 : index
    %106 = vector.load %arg13[%c0_58, %c16_59] : memref<8x32xf32, #tpu.memory_space<vmem>>, vector<8x8xf32>
    tpu.vector_store %arg13[%c0_58, %c16_59], %105 {strides = array<i32>} : memref<8x32xf32, #tpu.memory_space<vmem>>, vector<8x8xf32>,
    %c0_60 = arith.constant 0 : index
    %c2_61 = arith.constant 2 : index
    %107 = vector.load %arg11[%c0_60, %c2_61] : memref<8x4xf32, #tpu.memory_space<vmem>>, vector<8x1xf32>
    tpu.vector_store %arg11[%c0_60, %c2_61], %87 {strides = array<i32>} : memref<8x4xf32, #tpu.memory_space<vmem>>, vector<8x1xf32>,
    %108 = vector.extract_strided_slice %4 {offsets = [0, 24], sizes = [8, 8], strides = [1, 1]} : vector<8x32xbf16> to vector<8x8xbf16>
    %109 = vector.extract_strided_slice %6 {offsets = [0, 24], sizes = [16, 8], strides = [1, 1]} : vector<16x32xbf16> to vector<16x8xbf16>
    %cst_62 = arith.constant dense<0.000000e+00> : vector<8x16xf32>
    %110 = tpu.matmul %108, %109, %cst_62 {dimension_numbers = #tpu.dot_dimension_numbers<[1], [1], [0], [0], [0, 0, 1, 0], [], []>} : vector<8x8xbf16>, vector<16x8xbf16>, vector<8x16xf32> -> vector<8x16xf32>
    %cst_63 = arith.constant 0.353553385 : f32
    %111 = vector.broadcast %cst_63 : f32 to vector<8x16xf32>
    %112 = arith.mulf %110, %111 : vector<8x16xf32>
    %cst_64 = arith.constant -9.99999984E+17 : f32
    %113 = vector.broadcast %cst_64 : f32 to vector<8x16xf32>
    %114 = arith.select %14, %113, %112 : vector<8x16xi1>, vector<8x16xf32>
    %c0_65 = arith.constant 0 : index
    %c3 = arith.constant 3 : index
    %115 = vector.load %arg11[%c0_65, %c3] : memref<8x4xf32, #tpu.memory_space<vmem>>, vector<8x1xf32>
    %cst_66 = arith.constant dense<0xFF800000> : vector<8xf32>
    %116 = vector.multi_reduction <maximumf>, %114, %cst_66 [1] : vector<8x16xf32> to vector<8xf32>
    %117 = vector.shape_cast %116 : vector<8xf32> to vector<8x1xf32>
    %118 = arith.maximumf %115, %117 : vector<8x1xf32>
    %119 = arith.subf %115, %118 : vector<8x1xf32>
    %120 = math.exp %119 : vector<8x1xf32>
    %121 = vector.broadcast %118 : vector<8x1xf32> to vector<8x16xf32>
    %122 = arith.subf %114, %121 : vector<8x16xf32>
    %123 = math.exp %122 : vector<8x16xf32>
    %c0_67 = arith.constant 0 : index
    %c3_68 = arith.constant 3 : index
    %124 = vector.load %arg12[%c0_67, %c3_68] : memref<8x4xf32, #tpu.memory_space<vmem>>, vector<8x1xf32>
    %125 = arith.mulf %120, %124 : vector<8x1xf32>
    %cst_69 = arith.constant dense<0.000000e+00> : vector<8xf32>
    %126 = vector.multi_reduction <add>, %123, %cst_69 [1] : vector<8x16xf32> to vector<8xf32>
    %127 = vector.shape_cast %126 : vector<8xf32> to vector<8x1xf32>
    %128 = arith.addf %125, %127 : vector<8x1xf32>
    %c0_70 = arith.constant 0 : index
    %c3_71 = arith.constant 3 : index
    %129 = vector.load %arg12[%c0_70, %c3_71] : memref<8x4xf32, #tpu.memory_space<vmem>>, vector<8x1xf32>
    tpu.vector_store %arg12[%c0_70, %c3_71], %128 {strides = array<i32>} : memref<8x4xf32, #tpu.memory_space<vmem>>, vector<8x1xf32>,
    %c0_72 = arith.constant 0 : index
    %c24 = arith.constant 24 : index
    %130 = vector.load %arg13[%c0_72, %c24] : memref<8x32xf32, #tpu.memory_space<vmem>>, vector<8x8xf32>
    %131 = vector.broadcast %120 : vector<8x1xf32> to vector<8x8xf32>
    %132 = arith.mulf %131, %130 : vector<8x8xf32>
    %133 = arith.truncf %123 : vector<8x16xf32> to vector<8x16xbf16>
    %134 = vector.extract_strided_slice %8 {offsets = [0, 24], sizes = [16, 8], strides = [1, 1]} : vector<16x32xbf16> to vector<16x8xbf16>
    %cst_73 = arith.constant dense<0.000000e+00> : vector<8x8xf32>
    %135 = tpu.matmul %133, %134, %cst_73 {dimension_numbers = #tpu.dot_dimension_numbers<[1], [0], [0], [1], [0, 0, 1, 1], [], []>} : vector<8x16xbf16>, vector<16x8xbf16>, vector<8x8xf32> -> vector<8x8xf32>
    %136 = arith.addf %132, %135 : vector<8x8xf32>
    %c0_74 = arith.constant 0 : index
    %c24_75 = arith.constant 24 : index
    %137 = vector.load %arg13[%c0_74, %c24_75] : memref<8x32xf32, #tpu.memory_space<vmem>>, vector<8x8xf32>
    tpu.vector_store %arg13[%c0_74, %c24_75], %136 {strides = array<i32>} : memref<8x32xf32, #tpu.memory_space<vmem>>, vector<8x8xf32>,
    %c0_76 = arith.constant 0 : index
    %c3_77 = arith.constant 3 : index
    %138 = vector.load %arg11[%c0_76, %c3_77] : memref<8x4xf32, #tpu.memory_space<vmem>>, vector<8x1xf32>
    tpu.vector_store %arg11[%c0_76, %c3_77], %118 {strides = array<i32>} : memref<8x4xf32, #tpu.memory_space<vmem>>, vector<8x1xf32>,
    %c0_i32_78 = arith.constant 0 : i32
    %139 = arith.cmpi eq, %arg2, %c0_i32_78 : i32
    %140 = arith.extui %139 : i1 to i32
    %c0_i32_79 = arith.constant 0 : i32
    %141 = arith.cmpi ne, %140, %c0_i32_79 : i32
    scf.if %141 {
      %c0_80 = arith.constant 0 : index
      %c0_81 = arith.constant 0 : index
      %142 = vector.load %arg13[%c0_80, %c0_81] : memref<8x32xf32, #tpu.memory_space<vmem>>, vector<8x8xf32>
      %c0_82 = arith.constant 0 : index
      %c0_83 = arith.constant 0 : index
      %143 = vector.load %arg12[%c0_82, %c0_83] : memref<8x4xf32, #tpu.memory_space<vmem>>, vector<8x1xf32>
      %144 = vector.broadcast %143 : vector<8x1xf32> to vector<8x8xf32>
      %145 = arith.divf %142, %144 : vector<8x8xf32>
      %c0_84 = arith.constant 0 : index
      %c0_85 = arith.constant 0 : index
      %146 = vector.load %arg13[%c0_84, %c0_85] : memref<8x32xf32, #tpu.memory_space<vmem>>, vector<8x8xf32>
      tpu.vector_store %arg13[%c0_84, %c0_85], %145 {strides = array<i32>} : memref<8x32xf32, #tpu.memory_space<vmem>>, vector<8x8xf32>,
      %c0_86 = arith.constant 0 : index
      %c8_87 = arith.constant 8 : index
      %147 = vector.load %arg13[%c0_86, %c8_87] : memref<8x32xf32, #tpu.memory_space<vmem>>, vector<8x8xf32>
      %c0_88 = arith.constant 0 : index
      %c1_89 = arith.constant 1 : index
      %148 = vector.load %arg12[%c0_88, %c1_89] : memref<8x4xf32, #tpu.memory_space<vmem>>, vector<8x1xf32>
      %149 = vector.broadcast %148 : vector<8x1xf32> to vector<8x8xf32>
      %150 = arith.divf %147, %149 : vector<8x8xf32>
      %c0_90 = arith.constant 0 : index
      %c8_91 = arith.constant 8 : index
      %151 = vector.load %arg13[%c0_90, %c8_91] : memref<8x32xf32, #tpu.memory_space<vmem>>, vector<8x8xf32>
      tpu.vector_store %arg13[%c0_90, %c8_91], %150 {strides = array<i32>} : memref<8x32xf32, #tpu.memory_space<vmem>>, vector<8x8xf32>,
      %c0_92 = arith.constant 0 : index
      %c16_93 = arith.constant 16 : index
      %152 = vector.load %arg13[%c0_92, %c16_93] : memref<8x32xf32, #tpu.memory_space<vmem>>, vector<8x8xf32>
      %c0_94 = arith.constant 0 : index
      %c2_95 = arith.constant 2 : index
      %153 = vector.load %arg12[%c0_94, %c2_95] : memref<8x4xf32, #tpu.memory_space<vmem>>, vector<8x1xf32>
      %154 = vector.broadcast %153 : vector<8x1xf32> to vector<8x8xf32>
      %155 = arith.divf %152, %154 : vector<8x8xf32>
      %c0_96 = arith.constant 0 : index
      %c16_97 = arith.constant 16 : index
      %156 = vector.load %arg13[%c0_96, %c16_97] : memref<8x32xf32, #tpu.memory_space<vmem>>, vector<8x8xf32>
      tpu.vector_store %arg13[%c0_96, %c16_97], %155 {strides = array<i32>} : memref<8x32xf32, #tpu.memory_space<vmem>>, vector<8x8xf32>,
      %c0_98 = arith.constant 0 : index
      %c24_99 = arith.constant 24 : index
      %157 = vector.load %arg13[%c0_98, %c24_99] : memref<8x32xf32, #tpu.memory_space<vmem>>, vector<8x8xf32>
      %c0_100 = arith.constant 0 : index
      %c3_101 = arith.constant 3 : index
      %158 = vector.load %arg12[%c0_100, %c3_101] : memref<8x4xf32, #tpu.memory_space<vmem>>, vector<8x1xf32>
      %159 = vector.broadcast %158 : vector<8x1xf32> to vector<8x8xf32>
      %160 = arith.divf %157, %159 : vector<8x8xf32>
      %c0_102 = arith.constant 0 : index
      %c24_103 = arith.constant 24 : index
      %161 = vector.load %arg13[%c0_102, %c24_103] : memref<8x32xf32, #tpu.memory_space<vmem>>, vector<8x8xf32>
      tpu.vector_store %arg13[%c0_102, %c24_103], %160 {strides = array<i32>} : memref<8x32xf32, #tpu.memory_space<vmem>>, vector<8x8xf32>,
      %c0_104 = arith.constant 0 : index
      %c0_105 = arith.constant 0 : index
      %162 = vector.load %arg13[%c0_104, %c0_105] : memref<8x32xf32, #tpu.memory_space<vmem>>, vector<8x32xf32>
      %163 = arith.truncf %162 : vector<8x32xf32> to vector<8x32xbf16>
      %c0_106 = arith.constant 0 : index
      %c0_107 = arith.constant 0 : index
      %164 = vector.load %arg8[%c0_106, %c0_107] : memref<32x32xbf16, #tpu.memory_space<vmem>>, vector<32x32xbf16>
      %cst_108 = arith.constant dense<0.000000e+00> : vector<8x32xf32>
      %165 = tpu.matmul %163, %164, %cst_108 {dimension_numbers = #tpu.dot_dimension_numbers<[1], [0], [0], [1], [0, 0, 1, 1], [], []>} : vector<8x32xbf16>, vector<32x32xbf16>, vector<8x32xf32> -> vector<8x32xf32>
      %c0_109 = arith.constant 0 : index
      %c0_110 = arith.constant 0 : index
      %166 = vector.load %arg9[%c0_109, %c0_110] : memref<1x32xf32, #tpu.memory_space<vmem>>, vector<1x32xf32>
      %167 = vector.broadcast %166 : vector<1x32xf32> to vector<8x32xf32>
      %168 = arith.addf %165, %167 : vector<8x32xf32>
      %c0_111 = arith.constant 0 : index
      %c0_112 = arith.constant 0 : index
      %c0_113 = arith.constant 0 : index
      %169 = vector.load %arg4[%c0_111, %c0_112, %c0_113] : memref<1x8x32xf32, #tpu.memory_space<vmem>>, vector<1x8x32xf32>
      %170 = vector.shape_cast %169 : vector<1x8x32xf32> to vector<8x32xf32>
      %171 = arith.addf %168, %170 : vector<8x32xf32>
      %c0_114 = arith.constant 0 : index
      %c0_115 = arith.constant 0 : index
      %c0_116 = arith.constant 0 : index
      %172 = vector.load %arg10[%c0_114, %c0_115, %c0_116] : memref<1x8x32xf32, #tpu.memory_space<vmem>>, vector<1x8x32xf32>
      %173 = vector.shape_cast %172 : vector<1x8x32xf32> to vector<8x32xf32>
      %174 = vector.shape_cast %171 : vector<8x32xf32> to vector<1x8x32xf32>
      tpu.vector_store %arg10[%c0_114, %c0_115, %c0_116], %174 {strides = array<i32>} : memref<1x8x32xf32, #tpu.memory_space<vmem>>, vector<1x8x32xf32>,
    } else {
    }
    return
  }
  func.func @transform_0(%arg0: i32, %arg1: i32, %arg2: i32) -> (i32, i32, i32) {
    %c0_i32 = arith.constant 0 : i32
    %c0_i32_0 = arith.constant 0 : i32
    return %arg0, %c0_i32, %arg2 : i32, i32, i32
  }
  func.func @transform_1(%arg0: i32, %arg1: i32, %arg2: i32) -> (i32, i32, i32) {
    %c0_i32 = arith.constant 0 : i32
    %c0_i32_0 = arith.constant 0 : i32
    return %arg0, %arg1, %c0_i32 : i32, i32, i32
  }
  func.func @transform_2(%arg0: i32, %arg1: i32, %arg2: i32) -> (i32, i32, i32) {
    %c0_i32 = arith.constant 0 : i32
    %c0_i32_0 = arith.constant 0 : i32
    return %arg0, %arg1, %c0_i32 : i32, i32, i32
  }
  func.func @transform_3(%arg0: i32, %arg1: i32, %arg2: i32) -> (i32, i32, i32) {
    %c0_i32 = arith.constant 0 : i32
    %c0_i32_0 = arith.constant 0 : i32
    return %arg0, %arg2, %c0_i32 : i32, i32, i32
  }
  func.func @transform_4(%arg0: i32, %arg1: i32, %arg2: i32) -> (i32, i32, i32) {
    %c0_i32 = arith.constant 0 : i32
    %c0_i32_0 = arith.constant 0 : i32
    return %arg0, %arg2, %c0_i32 : i32, i32, i32
  }
  func.func @transform_5(%arg0: i32, %arg1: i32, %arg2: i32) -> (i32, i32) {
    %c0_i32 = arith.constant 0 : i32
    %c0_i32_0 = arith.constant 0 : i32
    %c0_i32_1 = arith.constant 0 : i32
    return %c0_i32, %c0_i32_0 : i32, i32
  }
  func.func @transform_6(%arg0: i32, %arg1: i32, %arg2: i32) -> (i32, i32) {
    %c0_i32 = arith.constant 0 : i32
    %c0_i32_0 = arith.constant 0 : i32
    %c0_i32_1 = arith.constant 0 : i32
    return %c0_i32, %c0_i32_0 : i32, i32
  }
  func.func @transform_7(%arg0: i32, %arg1: i32, %arg2: i32) -> (i32, i32, i32) {
    %c0_i32 = arith.constant 0 : i32
    %c0_i32_0 = arith.constant 0 : i32
    return %arg0, %arg1, %c0_i32 : i32, i32, i32
  }
}

module attributes {stable_mosaic.version = 11 : i64} {
  func.func @layernorm_kernel(%arg0: i32, %arg1: memref<16x32xf32, #tpu.memory_space<vmem>>, %arg2: memref<1x32xf32, #tpu.memory_space<vmem>>, %arg3: memref<1x32xf32, #tpu.memory_space<vmem>>, %arg4: memref<16x32xf32, #tpu.memory_space<vmem>>) attributes {dimension_semantics = [#tpu.dimension_semantics<parallel>], iteration_bounds = array<i64: 1>, scalar_prefetch = 0 : i64, scratch_operands = 0 : i64, tpu.core_type = #tpu.core_type<tc>, window_params = [{transform_indices = @transform_0, window_bounds = array<i64: 16, 32>}, {pipeline_mode = #tpu.pipeline_mode<synchronous>, transform_indices = @transform_1, window_bounds = array<i64: 1, 32>}, {pipeline_mode = #tpu.pipeline_mode<synchronous>, transform_indices = @transform_2, window_bounds = array<i64: 1, 32>}, {transform_indices = @transform_3, window_bounds = array<i64: 16, 32>}]} {
    %c0 = arith.constant 0 : index
    %c0_0 = arith.constant 0 : index
    %0 = vector.load %arg1[%c0, %c0_0] : memref<16x32xf32, #tpu.memory_space<vmem>>, vector<16x32xf32>
    %cst = arith.constant dense<0.000000e+00> : vector<16xf32>
    %1 = vector.multi_reduction <add>, %0, %cst [1] : vector<16x32xf32> to vector<16xf32>
    %2 = vector.shape_cast %1 : vector<16xf32> to vector<16x1xf32>
    %cst_1 = arith.constant 3.200000e+01 : f32
    %3 = vector.broadcast %cst_1 : f32 to vector<16x1xf32>
    %4 = arith.divf %2, %3 : vector<16x1xf32>
    %5 = vector.broadcast %4 : vector<16x1xf32> to vector<16x32xf32>
    %6 = arith.subf %0, %5 : vector<16x32xf32>
    %7 = arith.mulf %6, %6 : vector<16x32xf32>
    %cst_2 = arith.constant dense<0.000000e+00> : vector<16xf32>
    %8 = vector.multi_reduction <add>, %7, %cst_2 [1] : vector<16x32xf32> to vector<16xf32>
    %9 = vector.shape_cast %8 : vector<16xf32> to vector<16x1xf32>
    %cst_3 = arith.constant 3.200000e+01 : f32
    %10 = vector.broadcast %cst_3 : f32 to vector<16x1xf32>
    %11 = arith.divf %9, %10 : vector<16x1xf32>
    %12 = vector.broadcast %4 : vector<16x1xf32> to vector<16x32xf32>
    %13 = arith.subf %0, %12 : vector<16x32xf32>
    %cst_4 = arith.constant 9.99999997E-7 : f32
    %14 = vector.broadcast %cst_4 : f32 to vector<16x1xf32>
    %15 = arith.addf %11, %14 : vector<16x1xf32>
    %16 = math.rsqrt %15 : vector<16x1xf32>
    %17 = vector.broadcast %16 : vector<16x1xf32> to vector<16x32xf32>
    %18 = arith.mulf %13, %17 : vector<16x32xf32>
    %c0_5 = arith.constant 0 : index
    %c0_6 = arith.constant 0 : index
    %19 = vector.load %arg2[%c0_5, %c0_6] : memref<1x32xf32, #tpu.memory_space<vmem>>, vector<1x32xf32>
    %20 = vector.broadcast %19 : vector<1x32xf32> to vector<16x32xf32>
    %21 = arith.mulf %18, %20 : vector<16x32xf32>
    %c0_7 = arith.constant 0 : index
    %c0_8 = arith.constant 0 : index
    %22 = vector.load %arg3[%c0_7, %c0_8] : memref<1x32xf32, #tpu.memory_space<vmem>>, vector<1x32xf32>
    %23 = vector.broadcast %22 : vector<1x32xf32> to vector<16x32xf32>
    %24 = arith.addf %21, %23 : vector<16x32xf32>
    %c0_9 = arith.constant 0 : index
    %c0_10 = arith.constant 0 : index
    %25 = vector.load %arg4[%c0_9, %c0_10] : memref<16x32xf32, #tpu.memory_space<vmem>>, vector<16x32xf32>
    tpu.vector_store %arg4[%c0_9, %c0_10], %24 {strides = array<i32>} : memref<16x32xf32, #tpu.memory_space<vmem>>, vector<16x32xf32>,
    return
  }
  func.func @transform_0(%arg0: i32) -> (i32, i32) {
    %c0_i32 = arith.constant 0 : i32
    %c0_i32_0 = arith.constant 0 : i32
    return %arg0, %c0_i32 : i32, i32
  }
  func.func @transform_1(%arg0: i32) -> (i32, i32) {
    %c0_i32 = arith.constant 0 : i32
    %c0_i32_0 = arith.constant 0 : i32
    %c0_i32_1 = arith.constant 0 : i32
    return %c0_i32, %c0_i32_0 : i32, i32
  }
  func.func @transform_2(%arg0: i32) -> (i32, i32) {
    %c0_i32 = arith.constant 0 : i32
    %c0_i32_0 = arith.constant 0 : i32
    %c0_i32_1 = arith.constant 0 : i32
    return %c0_i32, %c0_i32_0 : i32, i32
  }
  func.func @transform_3(%arg0: i32) -> (i32, i32) {
    %c0_i32 = arith.constant 0 : i32
    %c0_i32_0 = arith.constant 0 : i32
    return %arg0, %c0_i32 : i32, i32
  }
}

</mosaic_0001>

<llo_original>
// kernel: transformer_decoder_forward.15
$region0: #{transformer_decoder_forward.15}
  #allocation0 [shape = 'u32[]', space=smem, size = 0x4, offset = 0x4, fixed_abs, tag = 'smem constant byte address 0x4 - core index']
  #allocation1 [shape = 'u32[144,128]{1,0:T(1,128)}', space=vmem, size = 0x12000, scoped, tag = 'internal scratch']
  %s0 = inlined_call_operand.vmem [shape: f32[16,32], index: 0, kind: input, shape index: {}]
  %s1 = inlined_call_operand.vmem [shape: f32[1,32], index: 1, kind: input, shape index: {}]
  %s2 = inlined_call_operand.vmem [shape: f32[1,32], index: 2, kind: input, shape index: {}]
  %s3 = inlined_call_operand.vmem [shape: bf16[32,32], index: 3, kind: input, shape index: {}]
  %s4 = inlined_call_operand.vmem [shape: f32[1,32], index: 4, kind: input, shape index: {}]
  %s5 = inlined_call_operand.vmem [shape: bf16[16,32], index: 5, kind: output, shape index: {}]
  %s6 = sld [smem:[#allocation0]]
  $region30: #{transformer_decoder_forward.15} parent=0
    _
  %s8 = ssub.s32 1, %s6
  %s9 = scalar_select 0, %s8, %s6
  // Predicated region
  $region2: #{transformer_decoder_forward.15} parent=0 // pred_check
    _
  $region3: #{transformer_decoder_forward.15} parent=0 // pred_check_branch
    %11 = sbr.rel (0) target = $region5
  $region4: #{transformer_decoder_forward.15} parent=0 // pred_region
    _
  $region5: #{transformer_decoder_forward.15} parent=0 // pred_fallthru
    _
  // Predicated region
  $region6: #{transformer_decoder_forward.15} parent=0 // pred_check
    _
  $region7: #{transformer_decoder_forward.15} parent=0 // pred_check_branch
    %13 = sbr.rel (0) target = $region9
  $region8: #{transformer_decoder_forward.15} parent=0 // pred_region
    _
  $region9: #{transformer_decoder_forward.15} parent=0 // pred_fallthru
    _
  // Predicated region
  $region10: #{transformer_decoder_forward.15} parent=0 // pred_check
    _
  $region11: #{transformer_decoder_forward.15} parent=0 // pred_check_branch
    %15 = sbr.rel (0) target = $region13
  $region12: #{transformer_decoder_forward.15} parent=0 // pred_region
    _
  $region13: #{transformer_decoder_forward.15} parent=0 // pred_fallthru
    _
  // Predicated region
  $region14: #{transformer_decoder_forward.15} parent=0 // pred_check
    _
  $region15: #{transformer_decoder_forward.15} parent=0 // pred_check_branch
    %17 = sbr.rel (0) target = $region17
  $region16: #{transformer_decoder_forward.15} parent=0 // pred_region
    _
  $region17: #{transformer_decoder_forward.15} parent=0 // pred_fallthru
    _
  // Predicated region
  $region18: #{transformer_decoder_forward.15} parent=0 // pred_check
    _
  $region19: #{transformer_decoder_forward.15} parent=0 // pred_check_branch
    %19 = sbr.rel (0) target = $region21
  $region20: #{transformer_decoder_forward.15} parent=0 // pred_region
    _
  $region21: #{transformer_decoder_forward.15} parent=0 // pred_fallthru
    _
  %v21 = vld [vmem:[%s0] sm:$0xff]
  %v22 = vld [vmem:[%s0 + $0x8] sm:$0xff]
  %vm23 = vcmask 261120
  %v24 = vsel %vm23, %v21, 0.0
  %25 = vadd.xlane.f32.xlu0 %v24
  %v26 = vpop.xlane.xlu0 %25
  %v27 = vsel %vm23, %v22, 0.0
  %28 = vadd.xlane.f32.xlu0 %v27
  %v29 = vpop.xlane.xlu0 %28
  %v30 = vrcp.pop 32.0
  %v31 = vmul.f32 %v26, %v30
  %v32 = vmul.f32 %v29, %v30
  %v33 = vsub.f32 %v21, %v31
  %v34 = vsub.f32 %v22, %v32
  %v35 = vmul.f32 %v33, %v33
  %v36 = vmul.f32 %v34, %v34
  %v37 = vsel %vm23, %v35, 0.0
  %38 = vadd.xlane.f32.xlu0 %v37
  %v39 = vpop.xlane.xlu0 %38
  %v40 = vsel %vm23, %v36, 0.0
  %41 = vadd.xlane.f32.xlu0 %v40
  %v42 = vpop.xlane.xlu0 %41
  %v43 = vmul.f32 %v39, %v30
  %v44 = vmul.f32 %v42, %v30
  %v45 = vadd.f32 %v43, 1e-06
  %v46 = vadd.f32 %v44, 1e-06
  %v47 = vrsqrt.pop %v45
  %v48 = vrsqrt.pop %v46
  %v49 = vmul.f32 %v33, %v47
  %v50 = vmul.f32 %v34, %v48
  %v51 = vld [vmem:[%s1] sm:$0x1]
  %v53 = vlaneseq
  %v54 = vshrl.u32 %v53, 7
  %v55 = vsub.s32 0, %v54
  %v56 = vrot.slane %v51, %v55
  %v58 = vmul.f32 %v49, %v56
  %v59 = vmul.f32 %v50, %v56
  %v60 = vld [vmem:[%s2] sm:$0x1]
  %v62 = vlaneseq
  %v63 = vshrl.u32 %v62, 7
  %v64 = vsub.s32 0, %v63
  %v65 = vrot.slane %v60, %v64
  %v67 = vadd.f32 %v58, %v65
  %v68 = vadd.f32 %v59, %v65
  %v69 = vpack.c.bf16 %v68, %v67
  %v70 = vld [vmem:[%s3] sm:$0xf]
  %v71 = vld [vmem:[%s3 + $0x4] sm:$0xf]
  %v72 = vld [vmem:[%s3 + $0x8] sm:$0xf]
  %v73 = vld [vmem:[%s3 + $0xc] sm:$0xf]
  %v74 = vld [vmem:[%s4] sm:$0x1]
  %v76 = vlaneseq
  %v77 = vshrl.u32 %v76, 7
  %v78 = vsub.s32 0, %v77
  %v79 = vrot.slane %v74, %v78
  %v85 = vunpack.c.l.b16 %v70
  %v86 = vunpack.c.l.b16 %v71
  %v87 = vunpack.c.l.b16 %v72
  %v88 = vunpack.c.l.b16 %v73
  %v89 = vpack.c.b16 %v86, %v85
  %v90 = vpack.c.b16 %v88, %v87
  %v94 = vsel %vm23, %v69, 0
  %96 = vmatprep.subr.bf16.mxu0 0
  %97 = vmatpush1.bf16.msra.mxu0 %v89
  %98 = vmatprep.subr.bf16.mxu0 0
  %99 = vmatpush1.bf16.msra.mxu0 %v90
  %100 = vmatprep.subr.bf16.mxu0 0
  %101 = vmatpush1.bf16.msra.mxu0 0
  %102 = vmatprep.subr.bf16.mxu0 0
  %103 = vmatpush1.bf16.msra.mxu0 0
  %104 = vmatprep.subr.bf16.mxu0 0
  %105 = vmatpush1.bf16.msra.mxu0 0
  %106 = vmatprep.subr.bf16.mxu0 0
  %107 = vmatpush1.bf16.msra.mxu0 0
  %108 = vmatprep.subr.bf16.mxu0 0
  %109 = vmatpush1.bf16.msra.mxu0 0
  %110 = vmatprep.subr.bf16.mxu0 0
  %111 = vmatpush1.bf16.msra.mxu0 0
  %112 = vmatprep.subr.bf16.mxu0 0
  %113 = vmatpush1.bf16.msra.mxu0 0
  %114 = vmatprep.subr.bf16.mxu0 0
  %115 = vmatpush1.bf16.msra.mxu0 0
  %116 = vmatprep.subr.bf16.mxu0 0
  %117 = vmatpush1.bf16.msra.mxu0 0
  %118 = vmatprep.subr.bf16.mxu0 0
  %119 = vmatpush1.bf16.msra.mxu0 0
  %120 = vmatprep.subr.bf16.mxu0 0
  %121 = vmatpush1.bf16.msra.mxu0 0
  %122 = vmatprep.subr.bf16.mxu0 0
  %123 = vmatpush1.bf16.msra.mxu0 0
  %124 = vmatprep.subr.bf16.mxu0 0
  %125 = vmatpush1.bf16.msra.mxu0 0
  %126 = vmatprep.subr.bf16.mxu0 0
  %127 = vmatpush1.bf16.msra.mxu0 0
  %128 = vmatprep.mubr.bf16.mxu0 0
  %129 = vmatmul.mubr.bf16.gmra.mrb[0].mxu0 %v94
  %v130 = vpop.f32.mrb[0].mxu0
  %v131 = vadd.f32 %v79, %v130
  %v132 = vpop.f32.mrb[0].mxu0
  %v133 = vpop.f32.mrb[0].mxu0
  %v134 = vadd.f32 %v79, %v133
  %v135 = vpop.f32.mrb[0].mxu0
  %136 = vdwg.mxu0
  %v137 = vpack.c.bf16 %v134, %v131
  %v139 = vunpack.c.l.b16 %v137
  %v140 = vunpack.c.h.b16 %v137
  %v141 = vpack.c.b16 %v139, %v139
  %v142 = vpack.c.b16 %v140, %v140
  %vm145 = vcmask 257024
  %146 = vst.msk [vmem:[%s5] sm:$0xf] %vm145, %v141
  %147 = vst.msk [vmem:[%s5 + $0x4] sm:$0xf] %vm145, %v142
  // Predicated region
  $region22: #{transformer_decoder_forward.15} parent=0 // pred_check
    _
  $region23: #{transformer_decoder_forward.15} parent=0 // pred_check_branch
    %149 = sbr.rel (0) target = $region25
  $region24: #{transformer_decoder_forward.15} parent=0 // pred_region
    _
  $region25: #{transformer_decoder_forward.15} parent=0 // pred_fallthru
    _
  // Predicated region
  $region26: #{transformer_decoder_forward.15} parent=0 // pred_check
    _
  $region27: #{transformer_decoder_forward.15} parent=0 // pred_check_branch
    %151 = sbr.rel (0) target = $region29
  $region28: #{transformer_decoder_forward.15} parent=0 // pred_region
    _
  $region29: #{transformer_decoder_forward.15} parent=0 // pred_fallthru
    _

// kernel: transformer_decoder_forward.13
$region0: #{transformer_decoder_forward.13}
  #allocation0 [shape = 'u32[]', space=smem, size = 0x4, offset = 0x4, fixed_abs, tag = 'smem constant byte address 0x4 - core index']
  #allocation1 [shape = 'u32[144,128]{1,0:T(1,128)}', space=vmem, size = 0x12000, scoped, tag = 'internal scratch']
  %s0 = inlined_call_operand.vmem [shape: f32[16,32], index: 0, kind: input, shape index: {}]
  %s1 = inlined_call_operand.vmem [shape: f32[1,32], index: 1, kind: input, shape index: {}]
  %s2 = inlined_call_operand.vmem [shape: f32[1,32], index: 2, kind: input, shape index: {}]
  %s3 = inlined_call_operand.vmem [shape: bf16[32,96], index: 3, kind: input, shape index: {}]
  %s4 = inlined_call_operand.vmem [shape: f32[1,96], index: 4, kind: input, shape index: {}]
  %s5 = inlined_call_operand.vmem [shape: f32[16,32], index: 5, kind: output, shape index: {0}]
  %s6 = inlined_call_operand.vmem [shape: bf16[16,32], index: 6, kind: output, shape index: {1}]
  %s7 = inlined_call_operand.vmem [shape: bf16[16,32], index: 7, kind: output, shape index: {2}]
  %s8 = inlined_call_operand.vmem [shape: bf16[16,32], index: 8, kind: output, shape index: {3}]
  %9 = xla_tuple %s5, %s6, %s7, %s8
  %s10 = sld [smem:[#allocation0]]
  $region54: #{transformer_decoder_forward.13} parent=0
    _
  %s12 = ssub.s32 1, %s10
  %s13 = scalar_select 0, %s12, %s10
  // Predicated region
  $region2: #{transformer_decoder_forward.13} parent=0 // pred_check
    _
  $region3: #{transformer_decoder_forward.13} parent=0 // pred_check_branch
    %15 = sbr.rel (0) target = $region5
  $region4: #{transformer_decoder_forward.13} parent=0 // pred_region
    _
  $region5: #{transformer_decoder_forward.13} parent=0 // pred_fallthru
    _
  // Predicated region
  $region6: #{transformer_decoder_forward.13} parent=0 // pred_check
    _
  $region7: #{transformer_decoder_forward.13} parent=0 // pred_check_branch
    %17 = sbr.rel (0) target = $region9
  $region8: #{transformer_decoder_forward.13} parent=0 // pred_region
    _
  $region9: #{transformer_decoder_forward.13} parent=0 // pred_fallthru
    _
  // Predicated region
  $region10: #{transformer_decoder_forward.13} parent=0 // pred_check
    _
  $region11: #{transformer_decoder_forward.13} parent=0 // pred_check_branch
    %19 = sbr.rel (0) target = $region13
  $region12: #{transformer_decoder_forward.13} parent=0 // pred_region
    _
  $region13: #{transformer_decoder_forward.13} parent=0 // pred_fallthru
    _
  // Predicated region
  $region14: #{transformer_decoder_forward.13} parent=0 // pred_check
    _
  $region15: #{transformer_decoder_forward.13} parent=0 // pred_check_branch
    %21 = sbr.rel (0) target = $region17
  $region16: #{transformer_decoder_forward.13} parent=0 // pred_region
    _
  $region17: #{transformer_decoder_forward.13} parent=0 // pred_fallthru
    _
  // Predicated region
  $region18: #{transformer_decoder_forward.13} parent=0 // pred_check
    _
  $region19: #{transformer_decoder_forward.13} parent=0 // pred_check_branch
    %23 = sbr.rel (0) target = $region21
  $region20: #{transformer_decoder_forward.13} parent=0 // pred_region
    _
  $region21: #{transformer_decoder_forward.13} parent=0 // pred_fallthru
    _
  %v25 = vld [vmem:[%s0] sm:$0xff]
  %v26 = vld [vmem:[%s0 + $0x8] sm:$0xff]
  %vm27 = vcmask 261120
  %v28 = vsel %vm27, %v25, 0.0
  %29 = vadd.xlane.f32.xlu0 %v28
  %v30 = vpop.xlane.xlu0 %29
  %v31 = vsel %vm27, %v26, 0.0
  %32 = vadd.xlane.f32.xlu0 %v31
  %v33 = vpop.xlane.xlu0 %32
  %v34 = vrcp.pop 32.0
  %v35 = vmul.f32 %v30, %v34
  %v36 = vmul.f32 %v33, %v34
  %v37 = vsub.f32 %v25, %v35
  %v38 = vsub.f32 %v26, %v36
  %v39 = vmul.f32 %v37, %v37
  %v40 = vmul.f32 %v38, %v38
  %v41 = vsel %vm27, %v39, 0.0
  %42 = vadd.xlane.f32.xlu0 %v41
  %v43 = vpop.xlane.xlu0 %42
  %v44 = vsel %vm27, %v40, 0.0
  %45 = vadd.xlane.f32.xlu0 %v44
  %v46 = vpop.xlane.xlu0 %45
  %v47 = vmul.f32 %v43, %v34
  %v48 = vmul.f32 %v46, %v34
  %v49 = vadd.f32 %v47, 1e-06
  %v50 = vadd.f32 %v48, 1e-06
  %v51 = vrsqrt.pop %v49
  %v52 = vrsqrt.pop %v50
  %v53 = vmul.f32 %v37, %v51
  %v54 = vmul.f32 %v38, %v52
  %v55 = vld [vmem:[%s1] sm:$0x1]
  %v57 = vlaneseq
  %v58 = vshrl.u32 %v57, 7
  %v59 = vsub.s32 0, %v58
  %v60 = vrot.slane %v55, %v59
  %v62 = vmul.f32 %v53, %v60
  %v63 = vmul.f32 %v54, %v60
  %v64 = vld [vmem:[%s2] sm:$0x1]
  %v66 = vlaneseq
  %v67 = vshrl.u32 %v66, 7
  %v68 = vsub.s32 0, %v67
  %v69 = vrot.slane %v64, %v68
  %v71 = vadd.f32 %v62, %v69
  %v72 = vadd.f32 %v63, %v69
  %73 = vst.msk [vmem:[%s5] sm:$0xff] %vm27, %v71
  %74 = vst.msk [vmem:[%s5 + $0x8] sm:$0xff] %vm27, %v72
  %v75 = vpack.c.bf16 %v72, %v71
  %v76 = vld [vmem:[%s3] sm:$0xf]
  %v77 = vld [vmem:[%s3 + $0x4] sm:$0xf]
  %v78 = vld [vmem:[%s3 + $0x8] sm:$0xf]
  %v79 = vld [vmem:[%s3 + $0xc] sm:$0xf]
  %v80 = vld [vmem:[%s4] sm:$0x1]
  %v82 = vlaneseq
  %v83 = vshrl.u32 %v82, 7
  %v84 = vsub.s32 0, %v83
  %v85 = vrot.slane %v80, %v84
  %v91 = vunpack.c.l.b16 %v76
  %v92 = vunpack.c.l.b16 %v77
  %v93 = vunpack.c.l.b16 %v78
  %v94 = vunpack.c.l.b16 %v79
  %v95 = vpack.c.b16 %v92, %v91
  %v96 = vpack.c.b16 %v94, %v93
  %v100 = vsel %vm27, %v75, 0
  %102 = vmatprep.subr.bf16.mxu0 0
  %103 = vmatpush1.bf16.msra.mxu0 %v95
  %104 = vmatprep.subr.bf16.mxu0 0
  %105 = vmatpush1.bf16.msra.mxu0 %v96
  %106 = vmatprep.subr.bf16.mxu0 0
  %107 = vmatpush1.bf16.msra.mxu0 0
  %108 = vmatprep.subr.bf16.mxu0 0
  %109 = vmatpush1.bf16.msra.mxu0 0
  %110 = vmatprep.subr.bf16.mxu0 0
  %111 = vmatpush1.bf16.msra.mxu0 0
  %112 = vmatprep.subr.bf16.mxu0 0
  %113 = vmatpush1.bf16.msra.mxu0 0
  %114 = vmatprep.subr.bf16.mxu0 0
  %115 = vmatpush1.bf16.msra.mxu0 0
  %116 = vmatprep.subr.bf16.mxu0 0
  %117 = vmatpush1.bf16.msra.mxu0 0
  %118 = vmatprep.subr.bf16.mxu0 0
  %119 = vmatpush1.bf16.msra.mxu0 0
  %120 = vmatprep.subr.bf16.mxu0 0
  %121 = vmatpush1.bf16.msra.mxu0 0
  %122 = vmatprep.subr.bf16.mxu0 0
  %123 = vmatpush1.bf16.msra.mxu0 0
  %124 = vmatprep.subr.bf16.mxu0 0
  %125 = vmatpush1.bf16.msra.mxu0 0
  %126 = vmatprep.subr.bf16.mxu0 0
  %127 = vmatpush1.bf16.msra.mxu0 0
  %128 = vmatprep.subr.bf16.mxu0 0
  %129 = vmatpush1.bf16.msra.mxu0 0
  %130 = vmatprep.subr.bf16.mxu0 0
  %131 = vmatpush1.bf16.msra.mxu0 0
  %132 = vmatprep.subr.bf16.mxu0 0
  %133 = vmatpush1.bf16.msra.mxu0 0
  %134 = vmatprep.mubr.bf16.mxu0 0
  %135 = vmatmul.mubr.bf16.gmra.mrb[0].mxu0 %v100
  %v136 = vpop.f32.mrb[0].mxu0
  %v137 = vadd.f32 %v85, %v136
  %v138 = vpop.f32.mrb[0].mxu0
  %v139 = vpop.f32.mrb[0].mxu0
  %v140 = vadd.f32 %v85, %v139
  %v141 = vpop.f32.mrb[0].mxu0
  %142 = vdwg.mxu0
  %v143 = vpack.c.bf16 %v140, %v137
  %v145 = vunpack.c.l.b16 %v143
  %v146 = vunpack.c.h.b16 %v143
  %v147 = vpack.c.b16 %v145, %v145
  %v148 = vpack.c.b16 %v146, %v146
  %vm151 = vcmask 257024
  %152 = vst.msk [vmem:[%s6] sm:$0xf] %vm151, %v147
  %153 = vst.msk [vmem:[%s6 + $0x4] sm:$0xf] %vm151, %v148
  %154 = vrot.lane.b32.xlu0 %v147, 96
  %v155 = vpop.permute.xlu0 %154
  %156 = vrot.lane.b32.xlu0 %v148, 96
  %v157 = vpop.permute.xlu0 %156
  %160 = vst.msk [vmem:[%s7] sm:$0xf] %vm151, %v155
  %161 = vst.msk [vmem:[%s7 + $0x4] sm:$0xf] %vm151, %v157
  %162 = vrot.lane.b32.xlu0 %v147, 64
  %v163 = vpop.permute.xlu0 %162
  %164 = vrot.lane.b32.xlu0 %v148, 64
  %v165 = vpop.permute.xlu0 %164
  %168 = vst.msk [vmem:[%s8] sm:$0xf] %vm151, %v163
  %169 = vst.msk [vmem:[%s8 + $0x4] sm:$0xf] %vm151, %v165
  // Predicated region
  $region22: #{transformer_decoder_forward.13} parent=0 // pred_check
    _
  $region23: #{transformer_decoder_forward.13} parent=0 // pred_check_branch
    %171 = sbr.rel (0) target = $region25
  $region24: #{transformer_decoder_forward.13} parent=0 // pred_region
    _
  $region25: #{transformer_decoder_forward.13} parent=0 // pred_fallthru
    _
  // Predicated region
  $region26: #{transformer_decoder_forward.13} parent=0 // pred_check
    _
  $region27: #{transformer_decoder_forward.13} parent=0 // pred_check_branch
    %173 = sbr.rel (0) target = $region29
  $region28: #{transformer_decoder_forward.13} parent=0 // pred_region
    _
  $region29: #{transformer_decoder_forward.13} parent=0 // pred_fallthru
    _
  // Predicated region
  $region30: #{transformer_decoder_forward.13} parent=0 // pred_check
    _
  $region31: #{transformer_decoder_forward.13} parent=0 // pred_check_branch
    %175 = sbr.rel (0) target = $region33
  $region32: #{transformer_decoder_forward.13} parent=0 // pred_region
    _
  $region33: #{transformer_decoder_forward.13} parent=0 // pred_fallthru
    _
  // Predicated region
  $region34: #{transformer_decoder_forward.13} parent=0 // pred_check
    _
  $region35: #{transformer_decoder_forward.13} parent=0 // pred_check_branch
    %177 = sbr.rel (0) target = $region37
  $region36: #{transformer_decoder_forward.13} parent=0 // pred_region
    _
  $region37: #{transformer_decoder_forward.13} parent=0 // pred_fallthru
    _
  // Predicated region
  $region38: #{transformer_decoder_forward.13} parent=0 // pred_check
    _
  $region39: #{transformer_decoder_forward.13} parent=0 // pred_check_branch
    %179 = sbr.rel (0) target = $region41
  $region40: #{transformer_decoder_forward.13} parent=0 // pred_region
    _
  $region41: #{transformer_decoder_forward.13} parent=0 // pred_fallthru
    _
  // Predicated region
  $region42: #{transformer_decoder_forward.13} parent=0 // pred_check
    _
  $region43: #{transformer_decoder_forward.13} parent=0 // pred_check_branch
    %181 = sbr.rel (0) target = $region45
  $region44: #{transformer_decoder_forward.13} parent=0 // pred_region
    _
  $region45: #{transformer_decoder_forward.13} parent=0 // pred_fallthru
    _
  // Predicated region
  $region46: #{transformer_decoder_forward.13} parent=0 // pred_check
    _
  $region47: #{transformer_decoder_forward.13} parent=0 // pred_check_branch
    %183 = sbr.rel (0) target = $region49
  $region48: #{transformer_decoder_forward.13} parent=0 // pred_region
    _
  $region49: #{transformer_decoder_forward.13} parent=0 // pred_fallthru
    _
  // Predicated region
  $region50: #{transformer_decoder_forward.13} parent=0 // pred_check
    _
  $region51: #{transformer_decoder_forward.13} parent=0 // pred_check_branch
    %185 = sbr.rel (0) target = $region53
  $region52: #{transformer_decoder_forward.13} parent=0 // pred_region
    _
  $region53: #{transformer_decoder_forward.13} parent=0 // pred_fallthru
    _

// kernel: transformer_decoder_forward.16
$region0: #{transformer_decoder_forward.16}
  #allocation0 [shape = 'u32[]', space=smem, size = 0x4, offset = 0x4, fixed_abs, tag = 'smem constant byte address 0x4 - core index']
  #allocation1 [shape = 'u32[144,128]{1,0:T(1,128)}', space=vmem, size = 0x12000, scoped, tag = 'internal scratch']
  %s0 = inlined_call_operand.vmem [shape: f32[32,32], index: 0, kind: input, shape index: {}]
  %s1 = inlined_call_operand.vmem [shape: bf16[32,64], index: 1, kind: input, shape index: {}]
  %s2 = inlined_call_operand.vmem [shape: f32[1,64], index: 2, kind: input, shape index: {}]
  %s3 = inlined_call_operand.vmem [shape: bf16[32,32], index: 3, kind: output, shape index: {0}]
  %s4 = inlined_call_operand.vmem [shape: bf16[32,32], index: 4, kind: output, shape index: {1}]
  %5 = xla_tuple %s3, %s4
  %s6 = sld [smem:[#allocation0]]
  $region30: #{transformer_decoder_forward.16} parent=0
    _
  %s8 = ssub.s32 1, %s6
  %s9 = scalar_select 0, %s8, %s6
  // Predicated region
  $region2: #{transformer_decoder_forward.16} parent=0 // pred_check
    _
  $region3: #{transformer_decoder_forward.16} parent=0 // pred_check_branch
    %11 = sbr.rel (0) target = $region5
  $region4: #{transformer_decoder_forward.16} parent=0 // pred_region
    _
  $region5: #{transformer_decoder_forward.16} parent=0 // pred_fallthru
    _
  // Predicated region
  $region6: #{transformer_decoder_forward.16} parent=0 // pred_check
    _
  $region7: #{transformer_decoder_forward.16} parent=0 // pred_check_branch
    %13 = sbr.rel (0) target = $region9
  $region8: #{transformer_decoder_forward.16} parent=0 // pred_region
    _
  $region9: #{transformer_decoder_forward.16} parent=0 // pred_fallthru
    _
  // Predicated region
  $region10: #{transformer_decoder_forward.16} parent=0 // pred_check
    _
  $region11: #{transformer_decoder_forward.16} parent=0 // pred_check_branch
    %15 = sbr.rel (0) target = $region13
  $region12: #{transformer_decoder_forward.16} parent=0 // pred_region
    _
  $region13: #{transformer_decoder_forward.16} parent=0 // pred_fallthru
    _
  %v17 = vld [vmem:[%s0] sm:$0xff]
  %v18 = vld [vmem:[%s0 + $0x8] sm:$0xff]
  %v19 = vld [vmem:[%s0 + $0x10] sm:$0xff]
  %v20 = vld [vmem:[%s0 + $0x18] sm:$0xff]
  %v21 = vpack.c.bf16 %v18, %v17
  %v22 = vpack.c.bf16 %v20, %v19
  %v23 = vld [vmem:[%s1] sm:$0xf]
  %v24 = vld [vmem:[%s1 + $0x4] sm:$0xf]
  %v25 = vld [vmem:[%s1 + $0x8] sm:$0xf]
  %v26 = vld [vmem:[%s1 + $0xc] sm:$0xf]
  %v27 = vld [vmem:[%s2] sm:$0x1]
  %v29 = vlaneseq
  %v30 = vshrl.u32 %v29, 7
  %v31 = vsub.s32 0, %v30
  %v32 = vrot.slane %v27, %v31
  %v38 = vunpack.c.l.b16 %v23
  %v39 = vunpack.c.l.b16 %v24
  %v40 = vunpack.c.l.b16 %v25
  %v41 = vunpack.c.l.b16 %v26
  %v42 = vpack.c.b16 %v39, %v38
  %v43 = vpack.c.b16 %v41, %v40
  %vm46 = vcmask 261120
  %v48 = vsel %vm46, %v21, 0
  %v51 = vsel %vm46, %v22, 0
  %53 = vmatprep.subr.bf16.mxu0 0
  %54 = vmatpush1.bf16.msra.mxu0 %v42
  %55 = vmatprep.subr.bf16.mxu0 0
  %56 = vmatpush1.bf16.msra.mxu0 %v43
  %57 = vmatprep.subr.bf16.mxu0 0
  %58 = vmatpush1.bf16.msra.mxu0 0
  %59 = vmatprep.subr.bf16.mxu0 0
  %60 = vmatpush1.bf16.msra.mxu0 0
  %61 = vmatprep.subr.bf16.mxu0 0
  %62 = vmatpush1.bf16.msra.mxu0 0
  %63 = vmatprep.subr.bf16.mxu0 0
  %64 = vmatpush1.bf16.msra.mxu0 0
  %65 = vmatprep.subr.bf16.mxu0 0
  %66 = vmatpush1.bf16.msra.mxu0 0
  %67 = vmatprep.subr.bf16.mxu0 0
  %68 = vmatpush1.bf16.msra.mxu0 0
  %69 = vmatprep.subr.bf16.mxu0 0
  %70 = vmatpush1.bf16.msra.mxu0 0
  %71 = vmatprep.subr.bf16.mxu0 0
  %72 = vmatpush1.bf16.msra.mxu0 0
  %73 = vmatprep.subr.bf16.mxu0 0
  %74 = vmatpush1.bf16.msra.mxu0 0
  %75 = vmatprep.subr.bf16.mxu0 0
  %76 = vmatpush1.bf16.msra.mxu0 0
  %77 = vmatprep.subr.bf16.mxu0 0
  %78 = vmatpush1.bf16.msra.mxu0 0
  %79 = vmatprep.subr.bf16.mxu0 0
  %80 = vmatpush1.bf16.msra.mxu0 0
  %81 = vmatprep.subr.bf16.mxu0 0
  %82 = vmatpush1.bf16.msra.mxu0 0
  %83 = vmatprep.subr.bf16.mxu0 0
  %84 = vmatpush1.bf16.msra.mxu0 0
  %85 = vmatprep.mubr.bf16.mxu0 0
  %86 = vmatmul.mubr.bf16.gmra.mrb[0].mxu0 %v48
  %v87 = vpop.f32.mrb[0].mxu0
  %v88 = vadd.f32 %v32, %v87
  %v89 = vpop.f32.mrb[0].mxu0
  %v90 = vpop.f32.mrb[0].mxu0
  %v91 = vadd.f32 %v32, %v90
  %v92 = vpop.f32.mrb[0].mxu0
  %93 = vmatprep.mubr.bf16.mxu0 0
  %94 = vmatmul.mubr.bf16.gmra.mrb[0].mxu0 %v51
  %v95 = vpop.f32.mrb[0].mxu0
  %v96 = vadd.f32 %v32, %v95
  %v97 = vpop.f32.mrb[0].mxu0
  %v98 = vpop.f32.mrb[0].mxu0
  %v99 = vadd.f32 %v32, %v98
  %v100 = vpop.f32.mrb[0].mxu0
  %101 = vdwg.mxu0
  %v102 = vpack.c.bf16 %v91, %v88
  %v103 = vpack.c.bf16 %v99, %v96
  %v106 = vunpack.c.l.b16 %v102
  %v107 = vunpack.c.h.b16 %v102
  %v108 = vunpack.c.l.b16 %v103
  %v109 = vunpack.c.h.b16 %v103
  %v110 = vpack.c.b16 %v106, %v106
  %v111 = vpack.c.b16 %v107, %v107
  %v112 = vpack.c.b16 %v108, %v108
  %v113 = vpack.c.b16 %v109, %v109
  %vm118 = vcmask 257024
  %119 = vst.msk [vmem:[%s3] sm:$0xf] %vm118, %v110
  %120 = vst.msk [vmem:[%s3 + $0x4] sm:$0xf] %vm118, %v111
  %121 = vst.msk [vmem:[%s3 + $0x8] sm:$0xf] %vm118, %v112
  %122 = vst.msk [vmem:[%s3 + $0xc] sm:$0xf] %vm118, %v113
  %123 = vrot.lane.b32.xlu0 %v110, 96
  %v124 = vpop.permute.xlu0 %123
  %125 = vrot.lane.b32.xlu0 %v111, 96
  %v126 = vpop.permute.xlu0 %125
  %127 = vrot.lane.b32.xlu0 %v112, 96
  %v128 = vpop.permute.xlu0 %127
  %129 = vrot.lane.b32.xlu0 %v113, 96
  %v130 = vpop.permute.xlu0 %129
  %135 = vst.msk [vmem:[%s4] sm:$0xf] %vm118, %v124
  %136 = vst.msk [vmem:[%s4 + $0x4] sm:$0xf] %vm118, %v126
  %137 = vst.msk [vmem:[%s4 + $0x8] sm:$0xf] %vm118, %v128
  %138 = vst.msk [vmem:[%s4 + $0xc] sm:$0xf] %vm118, %v130
  // Predicated region
  $region14: #{transformer_decoder_forward.16} parent=0 // pred_check
    _
  $region15: #{transformer_decoder_forward.16} parent=0 // pred_check_branch
    %140 = sbr.rel (0) target = $region17
  $region16: #{transformer_decoder_forward.16} parent=0 // pred_region
    _
  $region17: #{transformer_decoder_forward.16} parent=0 // pred_fallthru
    _
  // Predicated region
  $region18: #{transformer_decoder_forward.16} parent=0 // pred_check
    _
  $region19: #{transformer_decoder_forward.16} parent=0 // pred_check_branch
    %142 = sbr.rel (0) target = $region21
  $region20: #{transformer_decoder_forward.16} parent=0 // pred_region
    _
  $region21: #{transformer_decoder_forward.16} parent=0 // pred_fallthru
    _
  // Predicated region
  $region22: #{transformer_decoder_forward.16} parent=0 // pred_check
    _
  $region23: #{transformer_decoder_forward.16} parent=0 // pred_check_branch
    %144 = sbr.rel (0) target = $region25
  $region24: #{transformer_decoder_forward.16} parent=0 // pred_region
    _
  $region25: #{transformer_decoder_forward.16} parent=0 // pred_fallthru
    _
  // Predicated region
  $region26: #{transformer_decoder_forward.16} parent=0 // pred_check
    _
  $region27: #{transformer_decoder_forward.16} parent=0 // pred_check_branch
    %146 = sbr.rel (0) target = $region29
  $region28: #{transformer_decoder_forward.16} parent=0 // pred_region
    _
  $region29: #{transformer_decoder_forward.16} parent=0 // pred_fallthru
    _

// kernel: transformer_decoder_forward.14
$region0: #{transformer_decoder_forward.14}
  #allocation0 [shape = 'u32[]', space=smem, size = 0x4, offset = 0x4, fixed_abs, tag = 'smem constant byte address 0x4 - core index']
  #allocation1 [shape = 'u32[144,128]{1,0:T(1,128)}', space=vmem, size = 0x12000, scoped, tag = 'internal scratch']
  #allocation2 [shape = 'f32[8,4]{1,0:T(8,128)}', space=vmem, size = 0x1000, scoped, tag = 'scratch operand']
  #allocation3 [shape = 'f32[8,4]{1,0:T(8,128)}', space=vmem, size = 0x1000, scoped, tag = 'scratch operand']
  #allocation4 [shape = 'f32[8,32]{1,0:T(8,128)}', space=vmem, size = 0x1000, scoped, tag = 'scratch operand']
  %s0 = inlined_call_operand.vmem [shape: f32[2,1,8], index: 0, kind: input, shape index: {}]
  %s1 = inlined_call_operand.vmem [shape: f32[2,8,32], index: 1, kind: input, shape index: {}]
  %s2 = inlined_call_operand.vmem [shape: bf16[2,8,32], index: 2, kind: input, shape index: {}]
  %s3 = inlined_call_operand.vmem [shape: bf16[2,8,32], index: 3, kind: input, shape index: {}]
  %s4 = inlined_call_operand.vmem [shape: bf16[2,8,32], index: 4, kind: input, shape index: {}]
  %s5 = inlined_call_operand.vmem [shape: bf16[32,32], index: 5, kind: input, shape index: {}]
  %s6 = inlined_call_operand.vmem [shape: f32[1,32], index: 6, kind: input, shape index: {}]
  %s7 = inlined_call_operand.vmem [shape: f32[2,8,32], index: 7, kind: output, shape index: {}]
  %s8 = sld [smem:[#allocation0]]
  $region69: #{transformer_decoder_forward.14} parent=0
    _
  %s10 = ssub.s32 1, %s8
  %s11 = scalar_select 0, %s10, %s8
  loop: start=0, step=1, limit=4
  $region2: #{transformer_decoder_forward.14} parent=0 // loop_pre_header
    _
  $region3: #{transformer_decoder_forward.14} parent=0 // loop_header
    %s13 = sphi 0, %s17
    %p14 = scmp.ge.s32.totalorder %s13, 4
    %s20 = sphi 0, %s39
    %s21 = sphi 0, %s35
    %s22 = sphi 0, %s31
    %s23 = sphi 0, %s20
    %s24 = sphi 0, %s21
    %s25 = sphi 0, %s22
    %s26 = sphi 0, %s23
    %s27 = sphi 0, %s24
    %s28 = sphi 0, %s25
    %s44 = sphi 0, %s46
    %s47 = sphi 0, %s44
    %s48 = sphi 0, %s47
    %s64 = sphi 0, %s48
    %s72 = sphi 0, %s74
    %s75 = sphi 0, %s72
    %s76 = sphi 0, %s75
    %s92 = sphi 0, %s76
    %s100 = sphi 0, %s102
    %s103 = sphi 0, %s100
    %s104 = sphi 0, %s103
    %s120 = sphi 0, %s104
    %s128 = sphi 0, %s130
    %s131 = sphi 0, %s128
    %s132 = sphi 0, %s131
    %s148 = sphi 0, %s132
    %s156 = sphi 0, %s158
    %s159 = sphi 0, %s156
    %s160 = sphi 0, %s159
    %s176 = sphi 0, %s160
    %s180 = sphi 0, %s180
    %s182 = sphi 0, %s180
    %s183 = sphi 0, %s182
    %s197 = sphi 0, %s183
    %s201 = sphi 0, %s201
    %s203 = sphi 0, %s201
    %s204 = sphi 0, %s203
    %s218 = sphi 0, %s204
    %s226 = sphi 0, %s228
    %s229 = sphi 0, %s226
    %s230 = sphi 0, %s229
    %s246 = sphi 0, %s230
  $region4: #{transformer_decoder_forward.14} parent=0 // loop_header_branch
    %16 = sbr.rel (%p14) target = $region8
  $region5: #{transformer_decoder_forward.14} parent=0 // loop_body
    %s18 = ssub.s32 %s13, 1
    %s19 = ssub.s32 %s13, 2
    %s29 = sadd.s32 1, %s22
    %p30 = scmp.ge.s32.totalorder %s29, 1
    %s31 = scalar_select %p30, 0, %s29
    %s32 = sadd.s32 1, %s21
    %s33 = scalar_select %p30, %s32, %s21
    %p34 = scmp.ge.s32.totalorder %s33, 1
    %s35 = scalar_select %p34, 0, %s33
    %s36 = sadd.s32 1, %s20
    %s37 = scalar_select %p34, %s36, %s20
    %p38 = scmp.ge.s32.totalorder %s37, 2
    %s39 = scalar_select %p38, 0, %s37
    %s40 = ssub.s32 %s20, %s39
    %s41 = ssub.s32 %s22, %s31
    %s42 = sor.u32 %s40, %s41
    %p43 = scmp.eq.s32.totalorder %s42, 0
    %s45 = sadd.s32 %s44, 1
    %s46 = scalar_select %p43, %s44, %s45
    %p49 = pneg %p43
    %p50 = scmp.eq.s32.totalorder %s13, 1
    %p51 = por %p49, %p50
    %p52 = scmp.ne.s32.totalorder %s44, %s47
    %p53 = scmp.eq.s32.totalorder %s13, 0
    %p54 = por %p52, %p53
    %p55 = scmp.ne.s32.totalorder %s44, %s47
    %p56 = scmp.eq.s32.totalorder %s18, 1
    %p57 = por %p55, %p56
    %p58 = scmp.ne.s32.totalorder %s47, %s48
    %p59 = scmp.eq.s32.totalorder %s18, 0
    %p60 = por %p58, %p59
    %p61 = scmp.ne.s32.totalorder %s47, %s48
    %p62 = scmp.eq.s32.totalorder %s19, 1
    %p63 = por %p61, %p62
    %p65 = scmp.ne.s32.totalorder %s48, %s64
    %p66 = scmp.eq.s32.totalorder %s19, 0
    %p67 = por %p65, %p66
    %s68 = ssub.s32 %s20, %s39
    %s69 = ssub.s32 %s21, %s35
    %s70 = sor.u32 %s68, %s69
    %p71 = scmp.eq.s32.totalorder %s70, 0
    %s73 = sadd.s32 %s72, 1
    %s74 = scalar_select %p71, %s72, %s73
    %p77 = pneg %p71
    %p78 = scmp.eq.s32.totalorder %s13, 1
    %p79 = por %p77, %p78
    %p80 = scmp.ne.s32.totalorder %s72, %s75
    %p81 = scmp.eq.s32.totalorder %s13, 0
    %p82 = por %p80, %p81
    %p83 = scmp.ne.s32.totalorder %s72, %s75
    %p84 = scmp.eq.s32.totalorder %s18, 1
    %p85 = por %p83, %p84
    %p86 = scmp.ne.s32.totalorder %s75, %s76
    %p87 = scmp.eq.s32.totalorder %s18, 0
    %p88 = por %p86, %p87
    %p89 = scmp.ne.s32.totalorder %s75, %s76
    %p90 = scmp.eq.s32.totalorder %s19, 1
    %p91 = por %p89, %p90
    %p93 = scmp.ne.s32.totalorder %s76, %s92
    %p94 = scmp.eq.s32.totalorder %s19, 0
    %p95 = por %p93, %p94
    %s96 = ssub.s32 %s20, %s39
    %s97 = ssub.s32 %s21, %s35
    %s98 = sor.u32 %s96, %s97
    %p99 = scmp.eq.s32.totalorder %s98, 0
    %s101 = sadd.s32 %s100, 1
    %s102 = scalar_select %p99, %s100, %s101
    %p105 = pneg %p99
    %p106 = scmp.eq.s32.totalorder %s13, 1
    %p107 = por %p105, %p106
    %p108 = scmp.ne.s32.totalorder %s100, %s103
    %p109 = scmp.eq.s32.totalorder %s13, 0
    %p110 = por %p108, %p109
    %p111 = scmp.ne.s32.totalorder %s100, %s103
    %p112 = scmp.eq.s32.totalorder %s18, 1
    %p113 = por %p111, %p112
    %p114 = scmp.ne.s32.totalorder %s103, %s104
    %p115 = scmp.eq.s32.totalorder %s18, 0
    %p116 = por %p114, %p115
    %p117 = scmp.ne.s32.totalorder %s103, %s104
    %p118 = scmp.eq.s32.totalorder %s19, 1
    %p119 = por %p117, %p118
    %p121 = scmp.ne.s32.totalorder %s104, %s120
    %p122 = scmp.eq.s32.totalorder %s19, 0
    %p123 = por %p121, %p122
    %s124 = ssub.s32 %s20, %s39
    %s125 = ssub.s32 %s22, %s31
    %s126 = sor.u32 %s124, %s125
    %p127 = scmp.eq.s32.totalorder %s126, 0
    %s129 = sadd.s32 %s128, 1
    %s130 = scalar_select %p127, %s128, %s129
    %p133 = pneg %p127
    %p134 = scmp.eq.s32.totalorder %s13, 1
    %p135 = por %p133, %p134
    %p136 = scmp.ne.s32.totalorder %s128, %s131
    %p137 = scmp.eq.s32.totalorder %s13, 0
    %p138 = por %p136, %p137
    %p139 = scmp.ne.s32.totalorder %s128, %s131
    %p140 = scmp.eq.s32.totalorder %s18, 1
    %p141 = por %p139, %p140
    %p142 = scmp.ne.s32.totalorder %s131, %s132
    %p143 = scmp.eq.s32.totalorder %s18, 0
    %p144 = por %p142, %p143
    %p145 = scmp.ne.s32.totalorder %s131, %s132
    %p146 = scmp.eq.s32.totalorder %s19, 1
    %p147 = por %p145, %p146
    %p149 = scmp.ne.s32.totalorder %s132, %s148
    %p150 = scmp.eq.s32.totalorder %s19, 0
    %p151 = por %p149, %p150
    %s152 = ssub.s32 %s20, %s39
    %s153 = ssub.s32 %s22, %s31
    %s154 = sor.u32 %s152, %s153
    %p155 = scmp.eq.s32.totalorder %s154, 0
    %s157 = sadd.s32 %s156, 1
    %s158 = scalar_select %p155, %s156, %s157
    %p161 = pneg %p155
    %p162 = scmp.eq.s32.totalorder %s13, 1
    %p163 = por %p161, %p162
    %p164 = scmp.ne.s32.totalorder %s156, %s159
    %p165 = scmp.eq.s32.totalorder %s13, 0
    %p166 = por %p164, %p165
    %p167 = scmp.ne.s32.totalorder %s156, %s159
    %p168 = scmp.eq.s32.totalorder %s18, 1
    %p169 = por %p167, %p168
    %p170 = scmp.ne.s32.totalorder %s159, %s160
    %p171 = scmp.eq.s32.totalorder %s18, 0
    %p172 = por %p170, %p171
    %p173 = scmp.ne.s32.totalorder %s159, %s160
    %p174 = scmp.eq.s32.totalorder %s19, 1
    %p175 = por %p173, %p174
    %p177 = scmp.ne.s32.totalorder %s160, %s176
    %p178 = scmp.eq.s32.totalorder %s19, 0
    %p179 = por %p177, %p178
    %s181 = sadd.s32 %s180, 1
    %p184 = scmp.eq.s32.totalorder %s13, 1
    %p185 = scmp.ne.s32.totalorder %s180, %s182
    %p186 = scmp.eq.s32.totalorder %s13, 0
    %p187 = por %p185, %p186
    %p188 = scmp.ne.s32.totalorder %s180, %s182
    %p189 = scmp.eq.s32.totalorder %s18, 1
    %p190 = por %p188, %p189
    %p191 = scmp.ne.s32.totalorder %s182, %s183
    %p192 = scmp.eq.s32.totalorder %s18, 0
    %p193 = por %p191, %p192
    %p194 = scmp.ne.s32.totalorder %s182, %s183
    %p195 = scmp.eq.s32.totalorder %s19, 1
    %p196 = por %p194, %p195
    %p198 = scmp.ne.s32.totalorder %s183, %s197
    %p199 = scmp.eq.s32.totalorder %s19, 0
    %p200 = por %p198, %p199
    %s202 = sadd.s32 %s201, 1
    %p205 = scmp.eq.s32.totalorder %s13, 1
    %p206 = scmp.ne.s32.totalorder %s201, %s203
    %p207 = scmp.eq.s32.totalorder %s13, 0
    %p208 = por %p206, %p207
    %p209 = scmp.ne.s32.totalorder %s201, %s203
    %p210 = scmp.eq.s32.totalorder %s18, 1
    %p211 = por %p209, %p210
    %p212 = scmp.ne.s32.totalorder %s203, %s204
    %p213 = scmp.eq.s32.totalorder %s18, 0
    %p214 = por %p212, %p213
    %p215 = scmp.ne.s32.totalorder %s203, %s204
    %p216 = scmp.eq.s32.totalorder %s19, 1
    %p217 = por %p215, %p216
    %p219 = scmp.ne.s32.totalorder %s204, %s218
    %p220 = scmp.eq.s32.totalorder %s19, 0
    %p221 = por %p219, %p220
    %s222 = ssub.s32 %s20, %s39
    %s223 = ssub.s32 %s21, %s35
    %s224 = sor.u32 %s222, %s223
    %p225 = scmp.eq.s32.totalorder %s224, 0
    %s227 = sadd.s32 %s226, 1
    %s228 = scalar_select %p225, %s226, %s227
    %p231 = pneg %p225
    %p232 = scmp.eq.s32.totalorder %s13, 1
    %p233 = por %p231, %p232
    %p234 = scmp.ne.s32.totalorder %s226, %s229
    %p235 = scmp.eq.s32.totalorder %s13, 0
    %p236 = por %p234, %p235
    %p237 = scmp.ne.s32.totalorder %s226, %s229
    %p238 = scmp.eq.s32.totalorder %s18, 1
    %p239 = por %p237, %p238
    %p240 = scmp.ne.s32.totalorder %s229, %s230
    %p241 = scmp.eq.s32.totalorder %s18, 0
    %p242 = por %p240, %p241
    %p243 = scmp.ne.s32.totalorder %s229, %s230
    %p244 = scmp.eq.s32.totalorder %s19, 1
    %p245 = por %p243, %p244
    %p247 = scmp.ne.s32.totalorder %s230, %s246
    %p248 = scmp.eq.s32.totalorder %s19, 0
    %p249 = por %p247, %p248
    %p250 = scmp.le.s32.totalorder 1, %s13
    %p251 = scmp.lt.s32.totalorder %s13, 3
    %p252 = pnand %p250, %p251
    %p253 = pneg %p252
    // Predicated region
    $region9: #{transformer_decoder_forward.14} parent=5 // pred_check
      _
    $region10: #{transformer_decoder_forward.14} parent=5 // pred_check_branch
      %255 = sbr.rel (%p252) target = $region12
    $region11: #{transformer_decoder_forward.14} parent=5 // pred_region
      %s256 = ssub.s32 %s13, 1
      // Predicated region
      $region13: #{transformer_decoder_forward.14} parent=11 // pred_check
        %p257 = pneg %p193
      $region14: #{transformer_decoder_forward.14} parent=11 // pred_check_branch
        %259 = sbr.rel (%p257) target = $region16
      $region15: #{transformer_decoder_forward.14} parent=11 // pred_region
        _
      $region16: #{transformer_decoder_forward.14} parent=11 // pred_fallthru
        _
      // Predicated region
      $region17: #{transformer_decoder_forward.14} parent=11 // pred_check
        %p260 = pneg %p214
      $region18: #{transformer_decoder_forward.14} parent=11 // pred_check_branch
        %262 = sbr.rel (%p260) target = $region20
      $region19: #{transformer_decoder_forward.14} parent=11 // pred_region
        _
      $region20: #{transformer_decoder_forward.14} parent=11 // pred_fallthru
        _
    $region12: #{transformer_decoder_forward.14} parent=5 // pred_fallthru
      _
    %p263 = scmp.lt.s32.totalorder %s13, 2
    // Predicated region
    $region21: #{transformer_decoder_forward.14} parent=5 // pred_check
      %p264 = pneg %p263
    $region22: #{transformer_decoder_forward.14} parent=5 // pred_check_branch
      %266 = sbr.rel (%p264) target = $region24
    $region23: #{transformer_decoder_forward.14} parent=5 // pred_region
      // Predicated region
      $region25: #{transformer_decoder_forward.14} parent=23 // pred_check
        %p267 = pneg %p54
      $region26: #{transformer_decoder_forward.14} parent=23 // pred_check_branch
        %269 = sbr.rel (%p267) target = $region28
      $region27: #{transformer_decoder_forward.14} parent=23 // pred_region
        %p270 = scmp.lt.s32.totalorder %s20, 1
        %s271 = scalar_select %p270, %s20, 1
        %p272 = scmp.lt.s32.totalorder %s22, 0
        %s273 = scalar_select %p272, %s22, 0
        %s274 = sadd.s32 %s273, %s271
        %s275 = scalar_lea.vmem %s0, %s274
      $region28: #{transformer_decoder_forward.14} parent=23 // pred_fallthru
        _
      // Predicated region
      $region29: #{transformer_decoder_forward.14} parent=23 // pred_check
        %p276 = pneg %p82
      $region30: #{transformer_decoder_forward.14} parent=23 // pred_check_branch
        %278 = sbr.rel (%p276) target = $region32
      $region31: #{transformer_decoder_forward.14} parent=23 // pred_region
        %p279 = scmp.lt.s32.totalorder %s20, 1
        %s280 = scalar_select %p279, %s20, 1
        %p281 = scmp.lt.s32.totalorder %s21, 0
        %s282 = scalar_select %p281, %s21, 0
        %s283 = sadd.s32 %s282, %s280
        %s284 = smul.addr %s283, 8
        %s285 = scalar_lea.vmem %s1, %s284
      $region32: #{transformer_decoder_forward.14} parent=23 // pred_fallthru
        _
      // Predicated region
      $region33: #{transformer_decoder_forward.14} parent=23 // pred_check
        %p286 = pneg %p110
      $region34: #{transformer_decoder_forward.14} parent=23 // pred_check_branch
        %288 = sbr.rel (%p286) target = $region36
      $region35: #{transformer_decoder_forward.14} parent=23 // pred_region
        %p289 = scmp.lt.s32.totalorder %s20, 1
        %s290 = scalar_select %p289, %s20, 1
        %p291 = scmp.lt.s32.totalorder %s21, 0
        %s292 = scalar_select %p291, %s21, 0
        %s293 = sadd.s32 %s292, %s290
        %s294 = smul.addr %s293, 4
        %s295 = scalar_lea.vmem %s2, %s294
      $region36: #{transformer_decoder_forward.14} parent=23 // pred_fallthru
        _
      // Predicated region
      $region37: #{transformer_decoder_forward.14} parent=23 // pred_check
        %p296 = pneg %p138
      $region38: #{transformer_decoder_forward.14} parent=23 // pred_check_branch
        %298 = sbr.rel (%p296) target = $region40
      $region39: #{transformer_decoder_forward.14} parent=23 // pred_region
        %p299 = scmp.lt.s32.totalorder %s20, 1
        %s300 = scalar_select %p299, %s20, 1
        %p301 = scmp.lt.s32.totalorder %s22, 0
        %s302 = scalar_select %p301, %s22, 0
        %s303 = sadd.s32 %s302, %s300
        %s304 = smul.addr %s303, 4
        %s305 = scalar_lea.vmem %s3, %s304
      $region40: #{transformer_decoder_forward.14} parent=23 // pred_fallthru
        _
      // Predicated region
      $region41: #{transformer_decoder_forward.14} parent=23 // pred_check
        %p306 = pneg %p166
      $region42: #{transformer_decoder_forward.14} parent=23 // pred_check_branch
        %308 = sbr.rel (%p306) target = $region44
      $region43: #{transformer_decoder_forward.14} parent=23 // pred_region
        %p309 = scmp.lt.s32.totalorder %s20, 1
        %s310 = scalar_select %p309, %s20, 1
        %p311 = scmp.lt.s32.totalorder %s22, 0
        %s312 = scalar_select %p311, %s22, 0
        %s313 = sadd.s32 %s312, %s310
        %s314 = smul.addr %s313, 4
        %s315 = scalar_lea.vmem %s4, %s314
      $region44: #{transformer_decoder_forward.14} parent=23 // pred_fallthru
        _
    $region24: #{transformer_decoder_forward.14} parent=5 // pred_fallthru
      _
    %p316 = scmp.le.s32.totalorder 1, %s13
    %p317 = scmp.lt.s32.totalorder %s13, 3
    %p318 = pnand %p316, %p317
    %p319 = pneg %p318
    // Predicated region
    $region45: #{transformer_decoder_forward.14} parent=5 // pred_check
      _
    $region46: #{transformer_decoder_forward.14} parent=5 // pred_check_branch
      %321 = sbr.rel (%p318) target = $region48
    $region47: #{transformer_decoder_forward.14} parent=5 // pred_region
      %s322 = ssub.s32 %s13, 1
      %p323 = scmp.lt.s32.totalorder %s23, 1
      %s324 = scalar_select %p323, %s23, 1
      %p325 = scmp.lt.s32.totalorder %s25, 0
      %s326 = scalar_select %p325, %s25, 0
      %s327 = sadd.s32 %s326, %s324
      %s328 = scalar_lea.vmem %s0, %s327
      %p329 = pneg %p60
      %p330 = pneg %p57
      %p331 = scmp.lt.s32.totalorder %s23, 1
      %s332 = scalar_select %p331, %s23, 1
      %p333 = scmp.lt.s32.totalorder %s24, 0
      %s334 = scalar_select %p333, %s24, 0
      %s335 = sadd.s32 %s334, %s332
      %s336 = smul.addr %s335, 8
      %s337 = scalar_lea.vmem %s1, %s336
      %p338 = pneg %p88
      %p339 = pneg %p85
      %p340 = scmp.lt.s32.totalorder %s23, 1
      %s341 = scalar_select %p340, %s23, 1
      %p342 = scmp.lt.s32.totalorder %s24, 0
      %s343 = scalar_select %p342, %s24, 0
      %s344 = sadd.s32 %s343, %s341
      %s345 = smul.addr %s344, 4
      %s346 = scalar_lea.vmem %s2, %s345
      %p347 = pneg %p116
      %p348 = pneg %p113
      %p349 = scmp.lt.s32.totalorder %s23, 1
      %s350 = scalar_select %p349, %s23, 1
      %p351 = scmp.lt.s32.totalorder %s25, 0
      %s352 = scalar_select %p351, %s25, 0
      %s353 = sadd.s32 %s352, %s350
      %s354 = smul.addr %s353, 4
      %s355 = scalar_lea.vmem %s3, %s354
      %p356 = pneg %p144
      %p357 = pneg %p141
      %p358 = scmp.lt.s32.totalorder %s23, 1
      %s359 = scalar_select %p358, %s23, 1
      %p360 = scmp.lt.s32.totalorder %s25, 0
      %s361 = scalar_select %p360, %s25, 0
      %s362 = sadd.s32 %s361, %s359
      %s363 = smul.addr %s362, 4
      %s364 = scalar_lea.vmem %s4, %s363
      %p365 = pneg %p172
      %p366 = pneg %p169
      %p367 = pneg %p193
      %p368 = pneg %p190
      %p369 = pneg %p214
      %p370 = pneg %p211
      %p371 = pneg %p242
      %p372 = pneg %p239
      %p373 = scmp.lt.s32.totalorder %s23, 1
      %s374 = scalar_select %p373, %s23, 1
      %p375 = scmp.lt.s32.totalorder %s24, 0
      %s376 = scalar_select %p375, %s24, 0
      %s377 = sadd.s32 %s376, %s374
      %s378 = smul.addr %s377, 8
      %s379 = scalar_lea.vmem %s7, %s378
      %p380 = scmp.lt.s32.totalorder %s23, 1
      %s381 = scalar_select %p380, %s23, 1
      %p382 = scmp.lt.s32.totalorder %s25, 0
      %s383 = scalar_select %p382, %s25, 0
      %s384 = sadd.s32 %s383, %s381
      %s385 = scalar_lea.vmem %s0, %s384
      %p386 = scmp.lt.s32.totalorder %s23, 1
      %s387 = scalar_select %p386, %s23, 1
      %p388 = scmp.lt.s32.totalorder %s24, 0
      %s389 = scalar_select %p388, %s24, 0
      %s390 = sadd.s32 %s389, %s387
      %s391 = smul.addr %s390, 8
      %s392 = scalar_lea.vmem %s1, %s391
      %p393 = scmp.lt.s32.totalorder %s23, 1
      %s394 = scalar_select %p393, %s23, 1
      %p395 = scmp.lt.s32.totalorder %s24, 0
      %s396 = scalar_select %p395, %s24, 0
      %s397 = sadd.s32 %s396, %s394
      %s398 = smul.addr %s397, 4
      %s399 = scalar_lea.vmem %s2, %s398
      %p400 = scmp.lt.s32.totalorder %s23, 1
      %s401 = scalar_select %p400, %s23, 1
      %p402 = scmp.lt.s32.totalorder %s25, 0
      %s403 = scalar_select %p402, %s25, 0
      %s404 = sadd.s32 %s403, %s401
      %s405 = smul.addr %s404, 4
      %s406 = scalar_lea.vmem %s3, %s405
      %p407 = scmp.lt.s32.totalorder %s23, 1
      %s408 = scalar_select %p407, %s23, 1
      %p409 = scmp.lt.s32.totalorder %s25, 0
      %s410 = scalar_select %p409, %s25, 0
      %s411 = sadd.s32 %s410, %s408
      %s412 = smul.addr %s411, 4
      %s413 = scalar_lea.vmem %s4, %s412
      %p414 = scmp.lt.s32.totalorder %s23, 1
      %s415 = scalar_select %p414, %s23, 1
      %p416 = scmp.lt.s32.totalorder %s24, 0
      %s417 = scalar_select %p416, %s24, 0
      %s418 = sadd.s32 %s417, %s415
      %s419 = smul.addr %s418, 8
      %s420 = scalar_lea.vmem %s7, %s419
      %p422 = scmp.eq.s32.totalorder %s25, 0
      // Predicated region
      $region49: #{transformer_decoder_forward.14} parent=47 // pred_check
        %p423 = pneg %p422
      $region50: #{transformer_decoder_forward.14} parent=47 // pred_check_branch
        %425 = sbr.rel (%p423) target = $region52
      $region51: #{transformer_decoder_forward.14} parent=47 // pred_region
        %vm426 = vcmask 31744
        %427 = vst.msk [vmem:[#allocation2] sm:$0xff] %vm426, -inf
        %428 = vst.msk [vmem:[#allocation3] sm:$0xff] %vm426, 0.0
        %vm429 = vcmask 261120
        %430 = vst.msk [vmem:[#allocation4] sm:$0xff] %vm429, 0.0
      $region52: #{transformer_decoder_forward.14} parent=47 // pred_fallthru
        _
      %v431 = vld [vmem:[%s399] sm:$0xf]
      %v432 = vld [vmem:[%s406] sm:$0xf]
      %v433 = vld [vmem:[%s413] sm:$0xf]
      %s434 = smul.u32 %s25, 8
      %v435 = vlaneseq
      %v436 = vand.u32 %v435, 127
      %v437 = vstv %s434
      %v438 = vadd.s32 %v437, %v436
      %v439 = vld [vmem:[%s385] sm:$0x1]
      %vm440 = vcmp.gt.f32.partialorder %v439, 0.0
      %v441 = vsel %vm440, 1, 0
      %v442 = vlaneseq
      %v443 = vshrl.u32 %v442, 7
      %v444 = vsub.s32 0, %v443
      %v445 = vrot.slane %v441, %v444
      %vm446 = vcmp.eq.s32.totalorder %v445, 1
      %s447 = smul.u32 %s24, 8
      %v448 = vlaneseq
      %v449 = vshrl.u32 %v448, 7
      %v450 = vstv %s447
      %v451 = vadd.s32 %v450, %v449
      %vm452 = vcmp.gt.s32.totalorder %v438, %v451
      %vm453 = vmor %vm446, %vm452
      %vm454 = vcmask 64512
      %v456 = vsel %vm454, %v431, 0
      %v459 = vsel %vm454, %v432, 0
      %461 = vmatprep.subr.bf16.mxu0 0
      %462 = vmatpush1.bf16.xpose.msra.mxu0 %v459
      %463 = vmatprep.subr.bf16.mxu0 0
      %464 = vmatpush1.bf16.xpose.msra.mxu0 0
      %465 = vmatprep.subr.bf16.mxu0 0
      %466 = vmatpush1.bf16.xpose.msra.mxu0 0
      %467 = vmatprep.subr.bf16.mxu0 0
      %468 = vmatpush1.bf16.xpose.msra.mxu0 0
      %469 = vmatprep.subr.bf16.mxu0 0
      %470 = vmatpush1.bf16.xpose.msra.mxu0 0
      %471 = vmatprep.subr.bf16.mxu0 0
      %472 = vmatpush1.bf16.xpose.msra.mxu0 0
      %473 = vmatprep.subr.bf16.mxu0 0
      %474 = vmatpush1.bf16.xpose.msra.mxu0 0
      %475 = vmatprep.subr.bf16.mxu0 0
      %476 = vmatpush1.bf16.xpose.msra.mxu0 0
      %477 = vmatprep.subr.bf16.mxu0 0
      %478 = vmatpush1.bf16.xpose.msra.mxu0 0
      %479 = vmatprep.subr.bf16.mxu0 0
      %480 = vmatpush1.bf16.xpose.msra.mxu0 0
      %481 = vmatprep.subr.bf16.mxu0 0
      %482 = vmatpush1.bf16.xpose.msra.mxu0 0
      %483 = vmatprep.subr.bf16.mxu0 0
      %484 = vmatpush1.bf16.xpose.msra.mxu0 0
      %485 = vmatprep.subr.bf16.mxu0 0
      %486 = vmatpush1.bf16.xpose.msra.mxu0 0
      %487 = vmatprep.subr.bf16.mxu0 0
      %488 = vmatpush1.bf16.xpose.msra.mxu0 0
      %489 = vmatprep.subr.bf16.mxu0 0
      %490 = vmatpush1.bf16.xpose.msra.mxu0 0
      %491 = vmatprep.subr.bf16.mxu0 0
      %492 = vmatpush1.bf16.xpose.msra.mxu0 0
      %493 = vmatprep.mubr.bf16.mxu0 0
      %494 = vmatmul.mubr.bf16.gmra.mrb[0].mxu0 %v456
      %v495 = vpop.f32.mrb[0].mxu0
      %v496 = vadd.f32 0.0, %v495
      %v497 = vpop.f32.mrb[0].mxu0
      %v498 = vpop.f32.mrb[0].mxu0
      %v499 = vpop.f32.mrb[0].mxu0
      %500 = vdwg.mxu0
      %v501 = vmul.f32 %v496, 0.35355338
      %v502 = vsel %vm453, -1e+18, %v501
      %v503 = vld [vmem:[#allocation2] sm:$0xff]
      %v504 = vsel %vm454, %v502, -inf
      %505 = vmax.xlane.f32.xlu0 %v504
      %v506 = vpop.xlane.xlu0 %505
      %v507 = vmax.f32 %v503, %v506
      %v508 = vsub.f32 %v503, %v507
      %v509 = vmul.f32 %v508, 1.442695
      %v510 = vpow.pop %v509
      %512 = vset.pattern.permute.xlu0 0
      %513 = vperm.xlu0 %512, %v507
      %v514 = vpop.permute.xlu0 %513
      %v516 = vsub.f32 %v502, %v514
      %v517 = vmul.f32 %v516, 1.442695
      %v518 = vpow.pop %v517
      %v519 = vld [vmem:[#allocation3] sm:$0xff]
      %v520 = vmul.f32 %v510, %v519
      %v521 = vsel %vm454, %v518, 0.0
      %522 = vadd.xlane.f32.xlu0 %v521
      %v523 = vpop.xlane.xlu0 %522
      %v524 = vadd.f32 %v520, %v523
      %vm525 = vcmask 7168
      %526 = vst.msk [vmem:[#allocation3] sm:$0xff] %vm525, %v524
      %v527 = vld [vmem:[#allocation4] sm:$0xff]
      %529 = vset.pattern.permute.xlu0 0
      %530 = vperm.xlu0 %529, %v510
      %v531 = vpop.permute.xlu0 %530
      %v533 = vmul.f32 %v531, %v527
      %v534 = vpack.c.bf16 %v518, %v518
      %v536 = vsel %vm454, %v534, 0
      %vm538 = vcmask 1043456
      %v540 = vsel %vm538, %v433, 0
      %542 = vmatprep.subr.bf16.mxu0 0
      %543 = vmatpush1.bf16.msra.mxu0 %v540
      %544 = vmatprep.subr.bf16.mxu0 0
      %545 = vmatpush1.bf16.msra.mxu0 0
      %546 = vmatprep.subr.bf16.mxu0 0
      %547 = vmatpush1.bf16.msra.mxu0 0
      %548 = vmatprep.subr.bf16.mxu0 0
      %549 = vmatpush1.bf16.msra.mxu0 0
      %550 = vmatprep.subr.bf16.mxu0 0
      %551 = vmatpush1.bf16.msra.mxu0 0
      %552 = vmatprep.subr.bf16.mxu0 0
      %553 = vmatpush1.bf16.msra.mxu0 0
      %554 = vmatprep.subr.bf16.mxu0 0
      %555 = vmatpush1.bf16.msra.mxu0 0
      %556 = vmatprep.subr.bf16.mxu0 0
      %557 = vmatpush1.bf16.msra.mxu0 0
      %558 = vmatprep.subr.bf16.mxu0 0
      %559 = vmatpush1.bf16.msra.mxu0 0
      %560 = vmatprep.subr.bf16.mxu0 0
      %561 = vmatpush1.bf16.msra.mxu0 0
      %562 = vmatprep.subr.bf16.mxu0 0
      %563 = vmatpush1.bf16.msra.mxu0 0
      %564 = vmatprep.subr.bf16.mxu0 0
      %565 = vmatpush1.bf16.msra.mxu0 0
      %566 = vmatprep.subr.bf16.mxu0 0
      %567 = vmatpush1.bf16.msra.mxu0 0
      %568 = vmatprep.subr.bf16.mxu0 0
      %569 = vmatpush1.bf16.msra.mxu0 0
      %570 = vmatprep.subr.bf16.mxu0 0
      %571 = vmatpush1.bf16.msra.mxu0 0
      %572 = vmatprep.subr.bf16.mxu0 0
      %573 = vmatpush1.bf16.msra.mxu0 0
      %574 = vmatprep.mubr.bf16.mxu0 0
      %575 = vmatmul.mubr.bf16.gmra.mrb[0].mxu0 %v536
      %v576 = vpop.f32.mrb[0].mxu0
      %v577 = vadd.f32 0.0, %v576
      %v578 = vpop.f32.mrb[0].mxu0
      %v579 = vpop.f32.mrb[0].mxu0
      %v580 = vpop.f32.mrb[0].mxu0
      %581 = vdwg.mxu0
      %v582 = vadd.f32 %v533, %v577
      %583 = vst.msk [vmem:[#allocation4] sm:$0xff] %vm454, %v582
      %584 = vst.msk [vmem:[#allocation2] sm:$0xff] %vm525, %v507
      %v586 = vunpack.c.l.b16 %v431
      %v587 = vpack.c.b16 %v586, %v586
      %588 = vrot.lane.b32.xlu0 %v587, 120
      %v589 = vpop.permute.xlu0 %588
      %v591 = vunpack.c.l.b16 %v432
      %v592 = vpack.c.b16 %v591, %v591
      %593 = vrot.lane.b32.xlu0 %v592, 120
      %v594 = vpop.permute.xlu0 %593
      %v596 = vsel %vm454, %v589, 0
      %v599 = vsel %vm454, %v594, 0
      %601 = vmatprep.subr.bf16.mxu0 0
      %602 = vmatpush1.bf16.xpose.msra.mxu0 %v599
      %603 = vmatprep.subr.bf16.mxu0 0
      %604 = vmatpush1.bf16.xpose.msra.mxu0 0
      %605 = vmatprep.subr.bf16.mxu0 0
      %606 = vmatpush1.bf16.xpose.msra.mxu0 0
      %607 = vmatprep.subr.bf16.mxu0 0
      %608 = vmatpush1.bf16.xpose.msra.mxu0 0
      %609 = vmatprep.subr.bf16.mxu0 0
      %610 = vmatpush1.bf16.xpose.msra.mxu0 0
      %611 = vmatprep.subr.bf16.mxu0 0
      %612 = vmatpush1.bf16.xpose.msra.mxu0 0
      %613 = vmatprep.subr.bf16.mxu0 0
      %614 = vmatpush1.bf16.xpose.msra.mxu0 0
      %615 = vmatprep.subr.bf16.mxu0 0
      %616 = vmatpush1.bf16.xpose.msra.mxu0 0
      %617 = vmatprep.subr.bf16.mxu0 0
      %618 = vmatpush1.bf16.xpose.msra.mxu0 0
      %619 = vmatprep.subr.bf16.mxu0 0
      %620 = vmatpush1.bf16.xpose.msra.mxu0 0
      %621 = vmatprep.subr.bf16.mxu0 0
      %622 = vmatpush1.bf16.xpose.msra.mxu0 0
      %623 = vmatprep.subr.bf16.mxu0 0
      %624 = vmatpush1.bf16.xpose.msra.mxu0 0
      %625 = vmatprep.subr.bf16.mxu0 0
      %626 = vmatpush1.bf16.xpose.msra.mxu0 0
      %627 = vmatprep.subr.bf16.mxu0 0
      %628 = vmatpush1.bf16.xpose.msra.mxu0 0
      %629 = vmatprep.subr.bf16.mxu0 0
      %630 = vmatpush1.bf16.xpose.msra.mxu0 0
      %631 = vmatprep.subr.bf16.mxu0 0
      %632 = vmatpush1.bf16.xpose.msra.mxu0 0
      %633 = vmatprep.mubr.bf16.mxu0 0
      %634 = vmatmul.mubr.bf16.gmra.mrb[0].mxu0 %v596
      %v635 = vpop.f32.mrb[0].mxu0
      %v636 = vadd.f32 0.0, %v635
      %v637 = vpop.f32.mrb[0].mxu0
      %v638 = vpop.f32.mrb[0].mxu0
      %v639 = vpop.f32.mrb[0].mxu0
      %640 = vdwg.mxu0
      %v641 = vmul.f32 %v636, 0.35355338
      %v642 = vsel %vm453, -1e+18, %v641
      %v643 = vld [vmem:[#allocation2] sm:$0xff]
      %v644 = vsel %vm454, %v642, -inf
      %645 = vmax.xlane.f32.xlu0 %v644
      %v646 = vpop.xlane.xlu0 %645
      %v647 = vmax.f32 %v643, %v646
      %v648 = vsub.f32 %v643, %v647
      %v649 = vmul.f32 %v648, 1.442695
      %v650 = vpow.pop %v649
      %652 = vset.pattern.permute.xlu0 1
      %653 = vperm.xlu0 %652, %v647
      %v654 = vpop.permute.xlu0 %653
      %v656 = vsub.f32 %v642, %v654
      %v657 = vmul.f32 %v656, 1.442695
      %v658 = vpow.pop %v657
      %v659 = vld [vmem:[#allocation3] sm:$0xff]
      %v660 = vmul.f32 %v650, %v659
      %v661 = vsel %vm454, %v658, 0.0
      %662 = vadd.xlane.f32.xlu0 %v661
      %v663 = vpop.xlane.xlu0 %662
      %v664 = vadd.f32 %v660, %v663
      %vm665 = vcmask 15368
      %666 = vst.msk [vmem:[#allocation3] sm:$0xff] %vm665, %v664
      %v667 = vld [vmem:[#allocation4] sm:$0xff]
      %669 = vset.pattern.permute.xlu0 1
      %670 = vperm.xlu0 %669, %v650
      %v671 = vpop.permute.xlu0 %670
      %v673 = vmul.f32 %v671, %v667
      %v674 = vpack.c.bf16 %v658, %v658
      %v676 = vunpack.c.l.b16 %v433
      %v677 = vpack.c.b16 %v676, %v676
      %678 = vrot.lane.b32.xlu0 %v677, 120
      %v679 = vpop.permute.xlu0 %678
      %v681 = vsel %vm454, %v674, 0
      %v684 = vsel %vm538, %v679, 0
      %686 = vmatprep.subr.bf16.mxu0 0
      %687 = vmatpush1.bf16.msra.mxu0 %v684
      %688 = vmatprep.subr.bf16.mxu0 0
      %689 = vmatpush1.bf16.msra.mxu0 0
      %690 = vmatprep.subr.bf16.mxu0 0
      %691 = vmatpush1.bf16.msra.mxu0 0
      %692 = vmatprep.subr.bf16.mxu0 0
      %693 = vmatpush1.bf16.msra.mxu0 0
      %694 = vmatprep.subr.bf16.mxu0 0
      %695 = vmatpush1.bf16.msra.mxu0 0
      %696 = vmatprep.subr.bf16.mxu0 0
      %697 = vmatpush1.bf16.msra.mxu0 0
      %698 = vmatprep.subr.bf16.mxu0 0
      %699 = vmatpush1.bf16.msra.mxu0 0
      %700 = vmatprep.subr.bf16.mxu0 0
      %701 = vmatpush1.bf16.msra.mxu0 0
      %702 = vmatprep.subr.bf16.mxu0 0
      %703 = vmatpush1.bf16.msra.mxu0 0
      %704 = vmatprep.subr.bf16.mxu0 0
      %705 = vmatpush1.bf16.msra.mxu0 0
      %706 = vmatprep.subr.bf16.mxu0 0
      %707 = vmatpush1.bf16.msra.mxu0 0
      %708 = vmatprep.subr.bf16.mxu0 0
      %709 = vmatpush1.bf16.msra.mxu0 0
      %710 = vmatprep.subr.bf16.mxu0 0
      %711 = vmatpush1.bf16.msra.mxu0 0
      %712 = vmatprep.subr.bf16.mxu0 0
      %713 = vmatpush1.bf16.msra.mxu0 0
      %714 = vmatprep.subr.bf16.mxu0 0
      %715 = vmatpush1.bf16.msra.mxu0 0
      %716 = vmatprep.subr.bf16.mxu0 0
      %717 = vmatpush1.bf16.msra.mxu0 0
      %718 = vmatprep.mubr.bf16.mxu0 0
      %719 = vmatmul.mubr.bf16.gmra.mrb[0].mxu0 %v681
      %v720 = vpop.f32.mrb[0].mxu0
      %v721 = vadd.f32 0.0, %v720
      %v722 = vpop.f32.mrb[0].mxu0
      %v723 = vpop.f32.mrb[0].mxu0
      %v724 = vpop.f32.mrb[0].mxu0
      %725 = vdwg.mxu0
      %727 = vrot.lane.b32.xlu0 %v721, 8
      %v728 = vpop.permute.xlu0 %727
      %v730 = vadd.f32 %v673, %v728
      %vm731 = vcmask 130112
      %732 = vst.msk [vmem:[#allocation4] sm:$0xff] %vm731, %v730
      %733 = vst.msk [vmem:[#allocation2] sm:$0xff] %vm665, %v647
      %734 = vrot.lane.b32.xlu0 %v587, 112
      %v735 = vpop.permute.xlu0 %734
      %736 = vrot.lane.b32.xlu0 %v592, 112
      %v737 = vpop.permute.xlu0 %736
      %v739 = vsel %vm454, %v735, 0
      %v742 = vsel %vm454, %v737, 0
      %744 = vmatprep.subr.bf16.mxu0 0
      %745 = vmatpush1.bf16.xpose.msra.mxu0 %v742
      %746 = vmatprep.subr.bf16.mxu0 0
      %747 = vmatpush1.bf16.xpose.msra.mxu0 0
      %748 = vmatprep.subr.bf16.mxu0 0
      %749 = vmatpush1.bf16.xpose.msra.mxu0 0
      %750 = vmatprep.subr.bf16.mxu0 0
      %751 = vmatpush1.bf16.xpose.msra.mxu0 0
      %752 = vmatprep.subr.bf16.mxu0 0
      %753 = vmatpush1.bf16.xpose.msra.mxu0 0
      %754 = vmatprep.subr.bf16.mxu0 0
      %755 = vmatpush1.bf16.xpose.msra.mxu0 0
      %756 = vmatprep.subr.bf16.mxu0 0
      %757 = vmatpush1.bf16.xpose.msra.mxu0 0
      %758 = vmatprep.subr.bf16.mxu0 0
      %759 = vmatpush1.bf16.xpose.msra.mxu0 0
      %760 = vmatprep.subr.bf16.mxu0 0
      %761 = vmatpush1.bf16.xpose.msra.mxu0 0
      %762 = vmatprep.subr.bf16.mxu0 0
      %763 = vmatpush1.bf16.xpose.msra.mxu0 0
      %764 = vmatprep.subr.bf16.mxu0 0
      %765 = vmatpush1.bf16.xpose.msra.mxu0 0
      %766 = vmatprep.subr.bf16.mxu0 0
      %767 = vmatpush1.bf16.xpose.msra.mxu0 0
      %768 = vmatprep.subr.bf16.mxu0 0
      %769 = vmatpush1.bf16.xpose.msra.mxu0 0
      %770 = vmatprep.subr.bf16.mxu0 0
      %771 = vmatpush1.bf16.xpose.msra.mxu0 0
      %772 = vmatprep.subr.bf16.mxu0 0
      %773 = vmatpush1.bf16.xpose.msra.mxu0 0
      %774 = vmatprep.subr.bf16.mxu0 0
      %775 = vmatpush1.bf16.xpose.msra.mxu0 0
      %776 = vmatprep.mubr.bf16.mxu0 0
      %777 = vmatmul.mubr.bf16.gmra.mrb[0].mxu0 %v739
      %v778 = vpop.f32.mrb[0].mxu0
      %v779 = vadd.f32 0.0, %v778
      %v780 = vpop.f32.mrb[0].mxu0
      %v781 = vpop.f32.mrb[0].mxu0
      %v782 = vpop.f32.mrb[0].mxu0
      %783 = vdwg.mxu0
      %v784 = vmul.f32 %v779, 0.35355338
      %v785 = vsel %vm453, -1e+18, %v784
      %v786 = vld [vmem:[#allocation2] sm:$0xff]
      %v787 = vsel %vm454, %v785, -inf
      %788 = vmax.xlane.f32.xlu0 %v787
      %v789 = vpop.xlane.xlu0 %788
      %v790 = vmax.f32 %v786, %v789
      %v791 = vsub.f32 %v786, %v790
      %v792 = vmul.f32 %v791, 1.442695
      %v793 = vpow.pop %v792
      %795 = vset.pattern.permute.xlu0 2
      %796 = vperm.xlu0 %795, %v790
      %v797 = vpop.permute.xlu0 %796
      %v799 = vsub.f32 %v785, %v797
      %v800 = vmul.f32 %v799, 1.442695
      %v801 = vpow.pop %v800
      %v802 = vld [vmem:[#allocation3] sm:$0xff]
      %v803 = vmul.f32 %v793, %v802
      %v804 = vsel %vm454, %v801, 0.0
      %805 = vadd.xlane.f32.xlu0 %v804
      %v806 = vpop.xlane.xlu0 %805
      %v807 = vadd.f32 %v803, %v806
      %vm808 = vcmask 23568
      %809 = vst.msk [vmem:[#allocation3] sm:$0xff] %vm808, %v807
      %v810 = vld [vmem:[#allocation4] sm:$0xff]
      %812 = vset.pattern.permute.xlu0 2
      %813 = vperm.xlu0 %812, %v793
      %v814 = vpop.permute.xlu0 %813
      %v816 = vmul.f32 %v814, %v810
      %v817 = vpack.c.bf16 %v801, %v801
      %818 = vrot.lane.b32.xlu0 %v677, 112
      %v819 = vpop.permute.xlu0 %818
      %v821 = vsel %vm454, %v817, 0
      %v824 = vsel %vm538, %v819, 0
      %826 = vmatprep.subr.bf16.mxu0 0
      %827 = vmatpush1.bf16.msra.mxu0 %v824
      %828 = vmatprep.subr.bf16.mxu0 0
      %829 = vmatpush1.bf16.msra.mxu0 0
      %830 = vmatprep.subr.bf16.mxu0 0
      %831 = vmatpush1.bf16.msra.mxu0 0
      %832 = vmatprep.subr.bf16.mxu0 0
      %833 = vmatpush1.bf16.msra.mxu0 0
      %834 = vmatprep.subr.bf16.mxu0 0
      %835 = vmatpush1.bf16.msra.mxu0 0
      %836 = vmatprep.subr.bf16.mxu0 0
      %837 = vmatpush1.bf16.msra.mxu0 0
      %838 = vmatprep.subr.bf16.mxu0 0
      %839 = vmatpush1.bf16.msra.mxu0 0
      %840 = vmatprep.subr.bf16.mxu0 0
      %841 = vmatpush1.bf16.msra.mxu0 0
      %842 = vmatprep.subr.bf16.mxu0 0
      %843 = vmatpush1.bf16.msra.mxu0 0
      %844 = vmatprep.subr.bf16.mxu0 0
      %845 = vmatpush1.bf16.msra.mxu0 0
      %846 = vmatprep.subr.bf16.mxu0 0
      %847 = vmatpush1.bf16.msra.mxu0 0
      %848 = vmatprep.subr.bf16.mxu0 0
      %849 = vmatpush1.bf16.msra.mxu0 0
      %850 = vmatprep.subr.bf16.mxu0 0
      %851 = vmatpush1.bf16.msra.mxu0 0
      %852 = vmatprep.subr.bf16.mxu0 0
      %853 = vmatpush1.bf16.msra.mxu0 0
      %854 = vmatprep.subr.bf16.mxu0 0
      %855 = vmatpush1.bf16.msra.mxu0 0
      %856 = vmatprep.subr.bf16.mxu0 0
      %857 = vmatpush1.bf16.msra.mxu0 0
      %858 = vmatprep.mubr.bf16.mxu0 0
      %859 = vmatmul.mubr.bf16.gmra.mrb[0].mxu0 %v821
      %v860 = vpop.f32.mrb[0].mxu0
      %v861 = vadd.f32 0.0, %v860
      %v862 = vpop.f32.mrb[0].mxu0
      %v863 = vpop.f32.mrb[0].mxu0
      %v864 = vpop.f32.mrb[0].mxu0
      %865 = vdwg.mxu0
      %867 = vrot.lane.b32.xlu0 %v861, 16
      %v868 = vpop.permute.xlu0 %867
      %v870 = vadd.f32 %v816, %v868
      %vm871 = vcmask 195712
      %872 = vst.msk [vmem:[#allocation4] sm:$0xff] %vm871, %v870
      %873 = vst.msk [vmem:[#allocation2] sm:$0xff] %vm808, %v790
      %874 = vrot.lane.b32.xlu0 %v587, 104
      %v875 = vpop.permute.xlu0 %874
      %876 = vrot.lane.b32.xlu0 %v592, 104
      %v877 = vpop.permute.xlu0 %876
      %v879 = vsel %vm454, %v875, 0
      %v882 = vsel %vm454, %v877, 0
      %884 = vmatprep.subr.bf16.mxu0 0
      %885 = vmatpush1.bf16.xpose.msra.mxu0 %v882
      %886 = vmatprep.subr.bf16.mxu0 0
      %887 = vmatpush1.bf16.xpose.msra.mxu0 0
      %888 = vmatprep.subr.bf16.mxu0 0
      %889 = vmatpush1.bf16.xpose.msra.mxu0 0
      %890 = vmatprep.subr.bf16.mxu0 0
      %891 = vmatpush1.bf16.xpose.msra.mxu0 0
      %892 = vmatprep.subr.bf16.mxu0 0
      %893 = vmatpush1.bf16.xpose.msra.mxu0 0
      %894 = vmatprep.subr.bf16.mxu0 0
      %895 = vmatpush1.bf16.xpose.msra.mxu0 0
      %896 = vmatprep.subr.bf16.mxu0 0
      %897 = vmatpush1.bf16.xpose.msra.mxu0 0
      %898 = vmatprep.subr.bf16.mxu0 0
      %899 = vmatpush1.bf16.xpose.msra.mxu0 0
      %900 = vmatprep.subr.bf16.mxu0 0
      %901 = vmatpush1.bf16.xpose.msra.mxu0 0
      %902 = vmatprep.subr.bf16.mxu0 0
      %903 = vmatpush1.bf16.xpose.msra.mxu0 0
      %904 = vmatprep.subr.bf16.mxu0 0
      %905 = vmatpush1.bf16.xpose.msra.mxu0 0
      %906 = vmatprep.subr.bf16.mxu0 0
      %907 = vmatpush1.bf16.xpose.msra.mxu0 0
      %908 = vmatprep.subr.bf16.mxu0 0
      %909 = vmatpush1.bf16.xpose.msra.mxu0 0
      %910 = vmatprep.subr.bf16.mxu0 0
      %911 = vmatpush1.bf16.xpose.msra.mxu0 0
      %912 = vmatprep.subr.bf16.mxu0 0
      %913 = vmatpush1.bf16.xpose.msra.mxu0 0
      %914 = vmatprep.subr.bf16.mxu0 0
      %915 = vmatpush1.bf16.xpose.msra.mxu0 0
      %916 = vmatprep.mubr.bf16.mxu0 0
      %917 = vmatmul.mubr.bf16.gmra.mrb[0].mxu0 %v879
      %v918 = vpop.f32.mrb[0].mxu0
      %v919 = vadd.f32 0.0, %v918
      %v920 = vpop.f32.mrb[0].mxu0
      %v921 = vpop.f32.mrb[0].mxu0
      %v922 = vpop.f32.mrb[0].mxu0
      %923 = vdwg.mxu0
      %v924 = vmul.f32 %v919, 0.35355338
      %v925 = vsel %vm453, -1e+18, %v924
      %v926 = vld [vmem:[#allocation2] sm:$0xff]
      %v927 = vsel %vm454, %v925, -inf
      %928 = vmax.xlane.f32.xlu0 %v927
      %v929 = vpop.xlane.xlu0 %928
      %v930 = vmax.f32 %v926, %v929
      %v931 = vsub.f32 %v926, %v930
      %v932 = vmul.f32 %v931, 1.442695
      %v933 = vpow.pop %v932
      %935 = vset.pattern.permute.xlu0 3
      %936 = vperm.xlu0 %935, %v930
      %v937 = vpop.permute.xlu0 %936
      %v939 = vsub.f32 %v925, %v937
      %v940 = vmul.f32 %v939, 1.442695
      %v941 = vpow.pop %v940
      %v942 = vld [vmem:[#allocation3] sm:$0xff]
      %v943 = vmul.f32 %v933, %v942
      %v944 = vsel %vm454, %v941, 0.0
      %945 = vadd.xlane.f32.xlu0 %v944
      %v946 = vpop.xlane.xlu0 %945
      %v947 = vadd.f32 %v943, %v946
      %vm948 = vcmask 31768
      %949 = vst.msk [vmem:[#allocation3] sm:$0xff] %vm948, %v947
      %v950 = vld [vmem:[#allocation4] sm:$0xff]
      %952 = vset.pattern.permute.xlu0 3
      %953 = vperm.xlu0 %952, %v933
      %v954 = vpop.permute.xlu0 %953
      %v956 = vmul.f32 %v954, %v950
      %v957 = vpack.c.bf16 %v941, %v941
      %958 = vrot.lane.b32.xlu0 %v677, 104
      %v959 = vpop.permute.xlu0 %958
      %v961 = vsel %vm454, %v957, 0
      %v964 = vsel %vm538, %v959, 0
      %966 = vmatprep.subr.bf16.mxu0 0
      %967 = vmatpush1.bf16.msra.mxu0 %v964
      %968 = vmatprep.subr.bf16.mxu0 0
      %969 = vmatpush1.bf16.msra.mxu0 0
      %970 = vmatprep.subr.bf16.mxu0 0
      %971 = vmatpush1.bf16.msra.mxu0 0
      %972 = vmatprep.subr.bf16.mxu0 0
      %973 = vmatpush1.bf16.msra.mxu0 0
      %974 = vmatprep.subr.bf16.mxu0 0
      %975 = vmatpush1.bf16.msra.mxu0 0
      %976 = vmatprep.subr.bf16.mxu0 0
      %977 = vmatpush1.bf16.msra.mxu0 0
      %978 = vmatprep.subr.bf16.mxu0 0
      %979 = vmatpush1.bf16.msra.mxu0 0
      %980 = vmatprep.subr.bf16.mxu0 0
      %981 = vmatpush1.bf16.msra.mxu0 0
      %982 = vmatprep.subr.bf16.mxu0 0
      %983 = vmatpush1.bf16.msra.mxu0 0
      %984 = vmatprep.subr.bf16.mxu0 0
      %985 = vmatpush1.bf16.msra.mxu0 0
      %986 = vmatprep.subr.bf16.mxu0 0
      %987 = vmatpush1.bf16.msra.mxu0 0
      %988 = vmatprep.subr.bf16.mxu0 0
      %989 = vmatpush1.bf16.msra.mxu0 0
      %990 = vmatprep.subr.bf16.mxu0 0
      %991 = vmatpush1.bf16.msra.mxu0 0
      %992 = vmatprep.subr.bf16.mxu0 0
      %993 = vmatpush1.bf16.msra.mxu0 0
      %994 = vmatprep.subr.bf16.mxu0 0
      %995 = vmatpush1.bf16.msra.mxu0 0
      %996 = vmatprep.subr.bf16.mxu0 0
      %997 = vmatpush1.bf16.msra.mxu0 0
      %998 = vmatprep.mubr.bf16.mxu0 0
      %999 = vmatmul.mubr.bf16.gmra.mrb[0].mxu0 %v961
      %v1000 = vpop.f32.mrb[0].mxu0
      %v1001 = vadd.f32 0.0, %v1000
      %v1002 = vpop.f32.mrb[0].mxu0
      %v1003 = vpop.f32.mrb[0].mxu0
      %v1004 = vpop.f32.mrb[0].mxu0
      %1005 = vdwg.mxu0
      %1007 = vrot.lane.b32.xlu0 %v1001, 24
      %v1008 = vpop.permute.xlu0 %1007
      %v1010 = vadd.f32 %v956, %v1008
      %vm1011 = vcmask 261312
      %1012 = vst.msk [vmem:[#allocation4] sm:$0xff] %vm1011, %v1010
      %1013 = vst.msk [vmem:[#allocation2] sm:$0xff] %vm948, %v930
      // Predicated region
      $region53: #{transformer_decoder_forward.14} parent=47 // pred_check
        %p1014 = pneg %p422
      $region54: #{transformer_decoder_forward.14} parent=47 // pred_check_branch
        %1016 = sbr.rel (%p1014) target = $region56
      $region55: #{transformer_decoder_forward.14} parent=47 // pred_region
        %v1017 = vld [vmem:[#allocation4] sm:$0xff]
        %v1018 = vld [vmem:[#allocation3] sm:$0xff]
        %1020 = vset.pattern.permute.xlu0 0
        %1021 = vperm.xlu0 %1020, %v1018
        %v1022 = vpop.permute.xlu0 %1021
        %v1024 = vrcp.pop %v1022
        %v1025 = vmul.f32 %v1017, %v1024
        %1026 = vst.msk [vmem:[#allocation4] sm:$0xff] %vm454, %v1025
        %v1027 = vld [vmem:[#allocation4] sm:$0xff]
        %v1028 = vld [vmem:[#allocation3] sm:$0xff]
        %1030 = vset.pattern.permute.xlu0 1
        %1031 = vperm.xlu0 %1030, %v1028
        %v1032 = vpop.permute.xlu0 %1031
        %v1034 = vrcp.pop %v1032
        %v1035 = vmul.f32 %v1027, %v1034
        %1036 = vst.msk [vmem:[#allocation4] sm:$0xff] %vm731, %v1035
        %v1037 = vld [vmem:[#allocation4] sm:$0xff]
        %v1038 = vld [vmem:[#allocation3] sm:$0xff]
        %1040 = vset.pattern.permute.xlu0 2
        %1041 = vperm.xlu0 %1040, %v1038
        %v1042 = vpop.permute.xlu0 %1041
        %v1044 = vrcp.pop %v1042
        %v1045 = vmul.f32 %v1037, %v1044
        %1046 = vst.msk [vmem:[#allocation4] sm:$0xff] %vm871, %v1045
        %v1047 = vld [vmem:[#allocation4] sm:$0xff]
        %v1048 = vld [vmem:[#allocation3] sm:$0xff]
        %1050 = vset.pattern.permute.xlu0 3
        %1051 = vperm.xlu0 %1050, %v1048
        %v1052 = vpop.permute.xlu0 %1051
        %v1054 = vrcp.pop %v1052
        %v1055 = vmul.f32 %v1047, %v1054
        %1056 = vst.msk [vmem:[#allocation4] sm:$0xff] %vm1011, %v1055
        %v1057 = vld [vmem:[#allocation4] sm:$0xff]
        %v1058 = vpack.c.bf16 %v1057, %v1057
        %v1059 = vld [vmem:[%s5] sm:$0xf]
        %v1060 = vld [vmem:[%s5 + $0x4] sm:$0xf]
        %v1061 = vld [vmem:[%s5 + $0x8] sm:$0xf]
        %v1062 = vld [vmem:[%s5 + $0xc] sm:$0xf]
        %v1063 = vld [vmem:[%s6] sm:$0x1]
        %v1065 = vlaneseq
        %v1066 = vshrl.u32 %v1065, 7
        %v1067 = vsub.s32 0, %v1066
        %v1068 = vrot.slane %v1063, %v1067
        %v1074 = vunpack.c.l.b16 %v1059
        %v1075 = vunpack.c.l.b16 %v1060
        %v1076 = vunpack.c.l.b16 %v1061
        %v1077 = vunpack.c.l.b16 %v1062
        %v1078 = vpack.c.b16 %v1075, %v1074
        %v1079 = vpack.c.b16 %v1077, %v1076
        %vm1082 = vcmask 261120
        %v1084 = vsel %vm1082, %v1058, 0
        %1086 = vmatprep.subr.bf16.mxu0 0
        %1087 = vmatpush1.bf16.msra.mxu0 %v1078
        %1088 = vmatprep.subr.bf16.mxu0 0
        %1089 = vmatpush1.bf16.msra.mxu0 %v1079
        %1090 = vmatprep.subr.bf16.mxu0 0
        %1091 = vmatpush1.bf16.msra.mxu0 0
        %1092 = vmatprep.subr.bf16.mxu0 0
        %1093 = vmatpush1.bf16.msra.mxu0 0
        %1094 = vmatprep.subr.bf16.mxu0 0
        %1095 = vmatpush1.bf16.msra.mxu0 0
        %1096 = vmatprep.subr.bf16.mxu0 0
        %1097 = vmatpush1.bf16.msra.mxu0 0
        %1098 = vmatprep.subr.bf16.mxu0 0
        %1099 = vmatpush1.bf16.msra.mxu0 0
        %1100 = vmatprep.subr.bf16.mxu0 0
        %1101 = vmatpush1.bf16.msra.mxu0 0
        %1102 = vmatprep.subr.bf16.mxu0 0
        %1103 = vmatpush1.bf16.msra.mxu0 0
        %1104 = vmatprep.subr.bf16.mxu0 0
        %1105 = vmatpush1.bf16.msra.mxu0 0
        %1106 = vmatprep.subr.bf16.mxu0 0
        %1107 = vmatpush1.bf16.msra.mxu0 0
        %1108 = vmatprep.subr.bf16.mxu0 0
        %1109 = vmatpush1.bf16.msra.mxu0 0
        %1110 = vmatprep.subr.bf16.mxu0 0
        %1111 = vmatpush1.bf16.msra.mxu0 0
        %1112 = vmatprep.subr.bf16.mxu0 0
        %1113 = vmatpush1.bf16.msra.mxu0 0
        %1114 = vmatprep.subr.bf16.mxu0 0
        %1115 = vmatpush1.bf16.msra.mxu0 0
        %1116 = vmatprep.subr.bf16.mxu0 0
        %1117 = vmatpush1.bf16.msra.mxu0 0
        %1118 = vmatprep.mubr.bf16.mxu0 0
        %1119 = vmatmul.mubr.bf16.gmra.mrb[0].mxu0 %v1084
        %v1120 = vpop.f32.mrb[0].mxu0
        %v1121 = vadd.f32 %v1068, %v1120
        %v1122 = vpop.f32.mrb[0].mxu0
        %v1123 = vpop.f32.mrb[0].mxu0
        %v1124 = vpop.f32.mrb[0].mxu0
        %1125 = vdwg.mxu0
        %v1126 = vld [vmem:[%s392] sm:$0xff]
        %v1127 = vadd.f32 %v1121, %v1126
        %1128 = vst.msk [vmem:[%s420] sm:$0xff] %vm1082, %v1127
      $region56: #{transformer_decoder_forward.14} parent=47 // pred_fallthru
        _
      %p1129 = scmp.lt.s32.totalorder %s23, 1
      %s1130 = scalar_select %p1129, %s23, 1
      %p1131 = scmp.lt.s32.totalorder %s24, 0
      %s1132 = scalar_select %p1131, %s24, 0
      %s1133 = sadd.s32 %s1132, %s1130
      %s1134 = smul.addr %s1133, 8
      %s1135 = scalar_lea.vmem %s7, %s1134
      // Predicated region
      $region57: #{transformer_decoder_forward.14} parent=47 // pred_check
        %p1136 = pneg %p239
      $region58: #{transformer_decoder_forward.14} parent=47 // pred_check_branch
        %1138 = sbr.rel (%p1136) target = $region60
      $region59: #{transformer_decoder_forward.14} parent=47 // pred_region
        _
      $region60: #{transformer_decoder_forward.14} parent=47 // pred_fallthru
        _
    $region48: #{transformer_decoder_forward.14} parent=5 // pred_fallthru
      _
    %p1139 = scmp.le.s32.totalorder 2, %s13
    // Predicated region
    $region61: #{transformer_decoder_forward.14} parent=5 // pred_check
      %p1140 = pneg %p1139
    $region62: #{transformer_decoder_forward.14} parent=5 // pred_check_branch
      %1142 = sbr.rel (%p1140) target = $region64
    $region63: #{transformer_decoder_forward.14} parent=5 // pred_region
      %s1143 = ssub.s32 %s13, 2
      // Predicated region
      $region65: #{transformer_decoder_forward.14} parent=63 // pred_check
        %p1144 = pneg %p245
      $region66: #{transformer_decoder_forward.14} parent=63 // pred_check_branch
        %1146 = sbr.rel (%p1144) target = $region68
      $region67: #{transformer_decoder_forward.14} parent=63 // pred_region
        %p1147 = scmp.lt.s32.totalorder %s26, 1
        %s1148 = scalar_select %p1147, %s26, 1
        %p1149 = scmp.lt.s32.totalorder %s27, 0
        %s1150 = scalar_select %p1149, %s27, 0
        %s1151 = sadd.s32 %s1150, %s1148
        %s1152 = smul.addr %s1151, 8
        %s1153 = scalar_lea.vmem %s7, %s1152
      $region68: #{transformer_decoder_forward.14} parent=63 // pred_fallthru
        _
    $region64: #{transformer_decoder_forward.14} parent=5 // pred_fallthru
      _
  $region6: #{transformer_decoder_forward.14} parent=0 // loop_footer
    %s17 = sadd.s32 1, %s13
  $region7: #{transformer_decoder_forward.14} parent=0 // loop_footer_branch
    %12 = sbr.rel target = $region3
  $region8: #{transformer_decoder_forward.14} parent=0 // loop_exit
    _

// kernel: transformer_decoder_forward.18
$region0: #{transformer_decoder_forward.18}
  #allocation0 [shape = 'u32[]', space=smem, size = 0x4, offset = 0x4, fixed_abs, tag = 'smem constant byte address 0x4 - core index']
  #allocation1 [shape = 'u32[144,128]{1,0:T(1,128)}', space=vmem, size = 0x12000, scoped, tag = 'internal scratch']
  #allocation2 [shape = 'f32[16,32]{1,0:T(8,128)}', space=vmem, size = 0x2000, scoped, tag = 'scratch operand']
  #allocation3 [shape = 'f32[16,32]{1,0:T(8,128)}', space=vmem, size = 0x2000, scoped, tag = 'scratch operand']
  %s0 = inlined_call_operand.vmem [shape: f32[16,32], index: 0, kind: input, shape index: {}]
  %s1 = inlined_call_operand.vmem [shape: f32[1,32], index: 1, kind: input, shape index: {}]
  %s2 = inlined_call_operand.vmem [shape: f32[1,32], index: 2, kind: input, shape index: {}]
  %s3 = inlined_call_operand.vmem [shape: bf16[32,64], index: 3, kind: input, shape index: {}]
  %s4 = inlined_call_operand.vmem [shape: f32[1,64], index: 4, kind: input, shape index: {}]
  %s5 = inlined_call_operand.vmem [shape: bf16[64,32], index: 5, kind: input, shape index: {}]
  %s6 = inlined_call_operand.vmem [shape: f32[1,32], index: 6, kind: input, shape index: {}]
  %s7 = inlined_call_operand.vmem [shape: f32[16,32], index: 7, kind: output, shape index: {}]
  %s8 = sld [smem:[#allocation0]]
  $region46: #{transformer_decoder_forward.18} parent=0
    _
  %s10 = ssub.s32 1, %s8
  %s11 = scalar_select 0, %s10, %s8
  // Predicated region
  $region2: #{transformer_decoder_forward.18} parent=0 // pred_check
    _
  $region3: #{transformer_decoder_forward.18} parent=0 // pred_check_branch
    %13 = sbr.rel (0) target = $region5
  $region4: #{transformer_decoder_forward.18} parent=0 // pred_region
    _
  $region5: #{transformer_decoder_forward.18} parent=0 // pred_fallthru
    _
  // Predicated region
  $region6: #{transformer_decoder_forward.18} parent=0 // pred_check
    _
  $region7: #{transformer_decoder_forward.18} parent=0 // pred_check_branch
    %15 = sbr.rel (0) target = $region9
  $region8: #{transformer_decoder_forward.18} parent=0 // pred_region
    _
  $region9: #{transformer_decoder_forward.18} parent=0 // pred_fallthru
    _
  // Predicated region
  $region10: #{transformer_decoder_forward.18} parent=0 // pred_check
    _
  $region11: #{transformer_decoder_forward.18} parent=0 // pred_check_branch
    %17 = sbr.rel (0) target = $region13
  $region12: #{transformer_decoder_forward.18} parent=0 // pred_region
    _
  $region13: #{transformer_decoder_forward.18} parent=0 // pred_fallthru
    _
  // Predicated region
  $region14: #{transformer_decoder_forward.18} parent=0 // pred_check
    _
  $region15: #{transformer_decoder_forward.18} parent=0 // pred_check_branch
    %19 = sbr.rel (0) target = $region17
  $region16: #{transformer_decoder_forward.18} parent=0 // pred_region
    _
  $region17: #{transformer_decoder_forward.18} parent=0 // pred_fallthru
    _
  // Predicated region
  $region18: #{transformer_decoder_forward.18} parent=0 // pred_check
    _
  $region19: #{transformer_decoder_forward.18} parent=0 // pred_check_branch
    %21 = sbr.rel (0) target = $region21
  $region20: #{transformer_decoder_forward.18} parent=0 // pred_region
    _
  $region21: #{transformer_decoder_forward.18} parent=0 // pred_fallthru
    _
  // Predicated region
  $region22: #{transformer_decoder_forward.18} parent=0 // pred_check
    _
  $region23: #{transformer_decoder_forward.18} parent=0 // pred_check_branch
    %23 = sbr.rel (0) target = $region25
  $region24: #{transformer_decoder_forward.18} parent=0 // pred_region
    _
  $region25: #{transformer_decoder_forward.18} parent=0 // pred_fallthru
    _
  // Predicated region
  $region26: #{transformer_decoder_forward.18} parent=0 // pred_check
    _
  $region27: #{transformer_decoder_forward.18} parent=0 // pred_check_branch
    %25 = sbr.rel (0) target = $region29
  $region28: #{transformer_decoder_forward.18} parent=0 // pred_region
    _
  $region29: #{transformer_decoder_forward.18} parent=0 // pred_fallthru
    _
  %p27 = scmp.eq.s32.totalorder 0, 0
  // Predicated region
  $region30: #{transformer_decoder_forward.18} parent=0 // pred_check
    %p28 = pneg %p27
  $region31: #{transformer_decoder_forward.18} parent=0 // pred_check_branch
    %30 = sbr.rel (%p28) target = $region33
  $region32: #{transformer_decoder_forward.18} parent=0 // pred_region
    %v31 = vld [vmem:[%s0] sm:$0xff]
    %v32 = vld [vmem:[%s0 + $0x8] sm:$0xff]
    %vm33 = vcmask 261120
    %v34 = vsel %vm33, %v31, 0.0
    %35 = vadd.xlane.f32.xlu0 %v34
    %v36 = vpop.xlane.xlu0 %35
    %v37 = vsel %vm33, %v32, 0.0
    %38 = vadd.xlane.f32.xlu0 %v37
    %v39 = vpop.xlane.xlu0 %38
    %v40 = vrcp.pop 32.0
    %v41 = vmul.f32 %v36, %v40
    %v42 = vmul.f32 %v39, %v40
    %v43 = vsub.f32 %v31, %v41
    %v44 = vsub.f32 %v32, %v42
    %v45 = vmul.f32 %v43, %v43
    %v46 = vmul.f32 %v44, %v44
    %v47 = vsel %vm33, %v45, 0.0
    %48 = vadd.xlane.f32.xlu0 %v47
    %v49 = vpop.xlane.xlu0 %48
    %v50 = vsel %vm33, %v46, 0.0
    %51 = vadd.xlane.f32.xlu0 %v50
    %v52 = vpop.xlane.xlu0 %51
    %v53 = vmul.f32 %v49, %v40
    %v54 = vmul.f32 %v52, %v40
    %v55 = vadd.f32 %v53, 1e-06
    %v56 = vadd.f32 %v54, 1e-06
    %v57 = vrsqrt.pop %v55
    %v58 = vrsqrt.pop %v56
    %v59 = vmul.f32 %v43, %v57
    %v60 = vmul.f32 %v44, %v58
    %v61 = vld [vmem:[%s1] sm:$0x1]
    %v63 = vlaneseq
    %v64 = vshrl.u32 %v63, 7
    %v65 = vsub.s32 0, %v64
    %v66 = vrot.slane %v61, %v65
    %v68 = vmul.f32 %v59, %v66
    %v69 = vmul.f32 %v60, %v66
    %v70 = vld [vmem:[%s2] sm:$0x1]
    %v72 = vlaneseq
    %v73 = vshrl.u32 %v72, 7
    %v74 = vsub.s32 0, %v73
    %v75 = vrot.slane %v70, %v74
    %v77 = vadd.f32 %v68, %v75
    %v78 = vadd.f32 %v69, %v75
    %79 = vst.msk [vmem:[#allocation2] sm:$0xff] %vm33, %v77
    %80 = vst.msk [vmem:[#allocation2 + $0x8] sm:$0xff] %vm33, %v78
    %81 = vst.msk [vmem:[#allocation3] sm:$0xff] %vm33, 0.0
    %82 = vst.msk [vmem:[#allocation3 + $0x8] sm:$0xff] %vm33, 0.0
  $region33: #{transformer_decoder_forward.18} parent=0 // pred_fallthru
    _
  %v83 = vld [vmem:[#allocation2] sm:$0xff]
  %v84 = vld [vmem:[#allocation2 + $0x8] sm:$0xff]
  %v85 = vpack.c.bf16 %v84, %v83
  %v86 = vld [vmem:[%s3] sm:$0xf]
  %v87 = vld [vmem:[%s3 + $0x4] sm:$0xf]
  %v88 = vld [vmem:[%s3 + $0x8] sm:$0xf]
  %v89 = vld [vmem:[%s3 + $0xc] sm:$0xf]
  %v90 = vld [vmem:[%s4] sm:$0x1]
  %v92 = vlaneseq
  %v93 = vshrl.u32 %v92, 7
  %v94 = vsub.s32 0, %v93
  %v95 = vrot.slane %v90, %v94
  %v101 = vunpack.c.l.b16 %v86
  %v102 = vunpack.c.l.b16 %v87
  %v103 = vunpack.c.l.b16 %v88
  %v104 = vunpack.c.l.b16 %v89
  %v105 = vpack.c.b16 %v102, %v101
  %v106 = vpack.c.b16 %v104, %v103
  %vm109 = vcmask 261120
  %v111 = vsel %vm109, %v85, 0
  %113 = vmatprep.subr.bf16.mxu0 0
  %114 = vmatpush1.bf16.msra.mxu0 %v105
  %115 = vmatprep.subr.bf16.mxu0 0
  %116 = vmatpush1.bf16.msra.mxu0 %v106
  %117 = vmatprep.subr.bf16.mxu0 0
  %118 = vmatpush1.bf16.msra.mxu0 0
  %119 = vmatprep.subr.bf16.mxu0 0
  %120 = vmatpush1.bf16.msra.mxu0 0
  %121 = vmatprep.subr.bf16.mxu0 0
  %122 = vmatpush1.bf16.msra.mxu0 0
  %123 = vmatprep.subr.bf16.mxu0 0
  %124 = vmatpush1.bf16.msra.mxu0 0
  %125 = vmatprep.subr.bf16.mxu0 0
  %126 = vmatpush1.bf16.msra.mxu0 0
  %127 = vmatprep.subr.bf16.mxu0 0
  %128 = vmatpush1.bf16.msra.mxu0 0
  %129 = vmatprep.subr.bf16.mxu0 0
  %130 = vmatpush1.bf16.msra.mxu0 0
  %131 = vmatprep.subr.bf16.mxu0 0
  %132 = vmatpush1.bf16.msra.mxu0 0
  %133 = vmatprep.subr.bf16.mxu0 0
  %134 = vmatpush1.bf16.msra.mxu0 0
  %135 = vmatprep.subr.bf16.mxu0 0
  %136 = vmatpush1.bf16.msra.mxu0 0
  %137 = vmatprep.subr.bf16.mxu0 0
  %138 = vmatpush1.bf16.msra.mxu0 0
  %139 = vmatprep.subr.bf16.mxu0 0
  %140 = vmatpush1.bf16.msra.mxu0 0
  %141 = vmatprep.subr.bf16.mxu0 0
  %142 = vmatpush1.bf16.msra.mxu0 0
  %143 = vmatprep.subr.bf16.mxu0 0
  %144 = vmatpush1.bf16.msra.mxu0 0
  %145 = vmatprep.mubr.bf16.mxu0 0
  %146 = vmatmul.mubr.bf16.gmra.mrb[0].mxu0 %v111
  %v147 = vpop.f32.mrb[0].mxu0
  %v148 = vadd.f32 %v95, %v147
  %v149 = vpop.f32.mrb[0].mxu0
  %v150 = vpop.f32.mrb[0].mxu0
  %v151 = vadd.f32 %v95, %v150
  %v152 = vpop.f32.mrb[0].mxu0
  %153 = vdwg.mxu0
  %v154 = vmul.f32 %v148, 0.5
  %v155 = vmul.f32 %v151, 0.5
  %v156 = vmul.f32 %v148, 0.044715
  %v157 = vmul.f32 %v151, 0.044715
  %v158 = vmul.f32 %v156, %v148
  %v159 = vmul.f32 %v157, %v151
  %v160 = vmul.f32 %v158, %v148
  %v161 = vmul.f32 %v159, %v151
  %v162 = vadd.f32 %v148, %v160
  %v163 = vadd.f32 %v151, %v161
  %v164 = vmul.f32 %v162, 0.7978846
  %v165 = vmul.f32 %v163, 0.7978846
  %v166 = vtanh.pop %v164
  %v167 = vtanh.pop %v165
  %v168 = vadd.f32 %v166, 1.0
  %v169 = vadd.f32 %v167, 1.0
  %v170 = vmul.f32 %v154, %v168
  %v171 = vmul.f32 %v155, %v169
  %v172 = vld [vmem:[#allocation3] sm:$0xff]
  %v173 = vld [vmem:[#allocation3 + $0x8] sm:$0xff]
  %v174 = vpack.c.bf16 %v171, %v170
  %v175 = vld [vmem:[%s5] sm:$0xf]
  %v176 = vld [vmem:[%s5 + $0x4] sm:$0xf]
  %v177 = vld [vmem:[%s5 + $0x8] sm:$0xf]
  %v178 = vld [vmem:[%s5 + $0xc] sm:$0xf]
  %v179 = vld [vmem:[%s5 + $0x10] sm:$0xf]
  %v180 = vld [vmem:[%s5 + $0x14] sm:$0xf]
  %v181 = vld [vmem:[%s5 + $0x18] sm:$0xf]
  %v182 = vld [vmem:[%s5 + $0x1c] sm:$0xf]
  %v191 = vunpack.c.l.b16 %v175
  %v192 = vunpack.c.l.b16 %v176
  %v193 = vunpack.c.l.b16 %v177
  %v194 = vunpack.c.l.b16 %v178
  %v195 = vunpack.c.l.b16 %v179
  %v196 = vunpack.c.l.b16 %v180
  %v197 = vunpack.c.l.b16 %v181
  %v198 = vunpack.c.l.b16 %v182
  %v199 = vpack.c.b16 %v192, %v191
  %v200 = vpack.c.b16 %v194, %v193
  %v201 = vpack.c.b16 %v196, %v195
  %v202 = vpack.c.b16 %v198, %v197
  %vm207 = vcmask 523264
  %v209 = vsel %vm207, %v174, 0
  %211 = vmatprep.subr.bf16.mxu0 0
  %212 = vmatpush1.bf16.msra.mxu0 %v199
  %213 = vmatprep.subr.bf16.mxu0 0
  %214 = vmatpush1.bf16.msra.mxu0 %v200
  %215 = vmatprep.subr.bf16.mxu0 0
  %216 = vmatpush1.bf16.msra.mxu0 %v201
  %217 = vmatprep.subr.bf16.mxu0 0
  %218 = vmatpush1.bf16.msra.mxu0 %v202
  %219 = vmatprep.subr.bf16.mxu0 0
  %220 = vmatpush1.bf16.msra.mxu0 0
  %221 = vmatprep.subr.bf16.mxu0 0
  %222 = vmatpush1.bf16.msra.mxu0 0
  %223 = vmatprep.subr.bf16.mxu0 0
  %224 = vmatpush1.bf16.msra.mxu0 0
  %225 = vmatprep.subr.bf16.mxu0 0
  %226 = vmatpush1.bf16.msra.mxu0 0
  %227 = vmatprep.subr.bf16.mxu0 0
  %228 = vmatpush1.bf16.msra.mxu0 0
  %229 = vmatprep.subr.bf16.mxu0 0
  %230 = vmatpush1.bf16.msra.mxu0 0
  %231 = vmatprep.subr.bf16.mxu0 0
  %232 = vmatpush1.bf16.msra.mxu0 0
  %233 = vmatprep.subr.bf16.mxu0 0
  %234 = vmatpush1.bf16.msra.mxu0 0
  %235 = vmatprep.subr.bf16.mxu0 0
  %236 = vmatpush1.bf16.msra.mxu0 0
  %237 = vmatprep.subr.bf16.mxu0 0
  %238 = vmatpush1.bf16.msra.mxu0 0
  %239 = vmatprep.subr.bf16.mxu0 0
  %240 = vmatpush1.bf16.msra.mxu0 0
  %241 = vmatprep.subr.bf16.mxu0 0
  %242 = vmatpush1.bf16.msra.mxu0 0
  %243 = vmatprep.mubr.bf16.mxu0 0
  %244 = vmatmul.mubr.bf16.gmra.mrb[0].mxu0 %v209
  %v245 = vpop.f32.mrb[0].mxu0
  %v246 = vadd.f32 0.0, %v245
  %v247 = vpop.f32.mrb[0].mxu0
  %v248 = vpop.f32.mrb[0].mxu0
  %v249 = vadd.f32 0.0, %v248
  %v250 = vpop.f32.mrb[0].mxu0
  %251 = vdwg.mxu0
  %v252 = vadd.f32 %v172, %v246
  %v253 = vadd.f32 %v173, %v249
  %254 = vst.msk [vmem:[#allocation3] sm:$0xff] %vm109, %v252
  %255 = vst.msk [vmem:[#allocation3 + $0x8] sm:$0xff] %vm109, %v253
  // Predicated region
  $region34: #{transformer_decoder_forward.18} parent=0 // pred_check
    %p256 = pneg %p27
  $region35: #{transformer_decoder_forward.18} parent=0 // pred_check_branch
    %258 = sbr.rel (%p256) target = $region37
  $region36: #{transformer_decoder_forward.18} parent=0 // pred_region
    %v259 = vld [vmem:[#allocation3] sm:$0xff]
    %v260 = vld [vmem:[#allocation3 + $0x8] sm:$0xff]
    %v261 = vld [vmem:[%s6] sm:$0x1]
    %v263 = vlaneseq
    %v264 = vshrl.u32 %v263, 7
    %v265 = vsub.s32 0, %v264
    %v266 = vrot.slane %v261, %v265
    %v268 = vadd.f32 %v259, %v266
    %v269 = vadd.f32 %v260, %v266
    %v270 = vld [vmem:[%s0] sm:$0xff]
    %v271 = vld [vmem:[%s0 + $0x8] sm:$0xff]
    %v272 = vadd.f32 %v268, %v270
    %v273 = vadd.f32 %v269, %v271
    %274 = vst.msk [vmem:[%s7] sm:$0xff] %vm109, %v272
    %275 = vst.msk [vmem:[%s7 + $0x8] sm:$0xff] %vm109, %v273
  $region37: #{transformer_decoder_forward.18} parent=0 // pred_fallthru
    _
  // Predicated region
  $region38: #{transformer_decoder_forward.18} parent=0 // pred_check
    _
  $region39: #{transformer_decoder_forward.18} parent=0 // pred_check_branch
    %277 = sbr.rel (0) target = $region41
  $region40: #{transformer_decoder_forward.18} parent=0 // pred_region
    _
  $region41: #{transformer_decoder_forward.18} parent=0 // pred_fallthru
    _
  // Predicated region
  $region42: #{transformer_decoder_forward.18} parent=0 // pred_check
    _
  $region43: #{transformer_decoder_forward.18} parent=0 // pred_check_branch
    %279 = sbr.rel (0) target = $region45
  $region44: #{transformer_decoder_forward.18} parent=0 // pred_region
    _
  $region45: #{transformer_decoder_forward.18} parent=0 // pred_fallthru
    _

// kernel: transformer_decoder_forward.25
$region0: #{transformer_decoder_forward.25}
  #allocation0 [shape = 'u32[]', space=smem, size = 0x4, offset = 0x4, fixed_abs, tag = 'smem constant byte address 0x4 - core index']
  #allocation1 [shape = 'u32[144,128]{1,0:T(1,128)}', space=vmem, size = 0x12000, scoped, tag = 'internal scratch']
  %s0 = inlined_call_operand.vmem [shape: f32[16,32], index: 0, kind: input, shape index: {}]
  %s1 = inlined_call_operand.vmem [shape: f32[1,32], index: 1, kind: input, shape index: {}]
  %s2 = inlined_call_operand.vmem [shape: f32[1,32], index: 2, kind: input, shape index: {}]
  %s3 = inlined_call_operand.hbm [shape: f32[16,32], index: 3, kind: output, shape index: {}]
  %s4 = sld [smem:[#allocation0]]
  $region22: #{transformer_decoder_forward.25} parent=0
    _
  %s6 = ssub.s32 1, %s4
  %s7 = scalar_select 0, %s6, %s4
  $region1: #{transformer_decoder_forward.25} parent=0
    #allocation2 [shape = 'u8[8192]{0}', space=vmem, size = 0x2000, scoped, tag = 'output window, operand 0, single buffered']
    #allocation3 [shape = 's32[1]{0}', space=sflag, size = 0x4, scoped, tag = 'scoped memory for transformer_decoder_forward.25']
    %8 = vsyncpa [#allocation3], 0
    // Predicated region
    $region2: #{transformer_decoder_forward.25} parent=1 // pred_check
      _
    $region3: #{transformer_decoder_forward.25} parent=1 // pred_check_branch
      %10 = sbr.rel (0) target = $region5
    $region4: #{transformer_decoder_forward.25} parent=1 // pred_region
      _
    $region5: #{transformer_decoder_forward.25} parent=1 // pred_fallthru
      _
    // Predicated region
    $region6: #{transformer_decoder_forward.25} parent=1 // pred_check
      _
    $region7: #{transformer_decoder_forward.25} parent=1 // pred_check_branch
      %12 = sbr.rel (0) target = $region9
    $region8: #{transformer_decoder_forward.25} parent=1 // pred_region
      _
    $region9: #{transformer_decoder_forward.25} parent=1 // pred_fallthru
      _
    // Predicated region
    $region10: #{transformer_decoder_forward.25} parent=1 // pred_check
      _
    $region11: #{transformer_decoder_forward.25} parent=1 // pred_check_branch
      %14 = sbr.rel (0) target = $region13
    $region12: #{transformer_decoder_forward.25} parent=1 // pred_region
      _
    $region13: #{transformer_decoder_forward.25} parent=1 // pred_fallthru
      _
    %v15 = vld [vmem:[%s0] sm:$0xff]
    %v16 = vld [vmem:[%s0 + $0x8] sm:$0xff]
    %vm17 = vcmask 261120
    %v18 = vsel %vm17, %v15, 0.0
    %19 = vadd.xlane.f32.xlu0 %v18
    %v20 = vpop.xlane.xlu0 %19
    %v21 = vsel %vm17, %v16, 0.0
    %22 = vadd.xlane.f32.xlu0 %v21
    %v23 = vpop.xlane.xlu0 %22
    %v24 = vrcp.pop 32.0
    %v25 = vmul.f32 %v20, %v24
    %v26 = vmul.f32 %v23, %v24
    %v27 = vsub.f32 %v15, %v25
    %v28 = vsub.f32 %v16, %v26
    %v29 = vmul.f32 %v27, %v27
    %v30 = vmul.f32 %v28, %v28
    %v31 = vsel %vm17, %v29, 0.0
    %32 = vadd.xlane.f32.xlu0 %v31
    %v33 = vpop.xlane.xlu0 %32
    %v34 = vsel %vm17, %v30, 0.0
    %35 = vadd.xlane.f32.xlu0 %v34
    %v36 = vpop.xlane.xlu0 %35
    %v37 = vmul.f32 %v33, %v24
    %v38 = vmul.f32 %v36, %v24
    %v39 = vadd.f32 %v37, 1e-06
    %v40 = vadd.f32 %v38, 1e-06
    %v41 = vrsqrt.pop %v39
    %v42 = vrsqrt.pop %v40
    %v43 = vmul.f32 %v27, %v41
    %v44 = vmul.f32 %v28, %v42
    %v45 = vld [vmem:[%s1] sm:$0x1]
    %v47 = vlaneseq
    %v48 = vshrl.u32 %v47, 7
    %v49 = vsub.s32 0, %v48
    %v50 = vrot.slane %v45, %v49
    %v52 = vmul.f32 %v43, %v50
    %v53 = vmul.f32 %v44, %v50
    %v54 = vld [vmem:[%s2] sm:$0x1]
    %v56 = vlaneseq
    %v57 = vshrl.u32 %v56, 7
    %v58 = vsub.s32 0, %v57
    %v59 = vrot.slane %v54, %v58
    %v61 = vadd.f32 %v52, %v59
    %v62 = vadd.f32 %v53, %v59
    %63 = vst.msk [vmem:[#allocation2] sm:$0xff] %vm17, %v61
    %64 = vst.msk [vmem:[#allocation2 + $0x8] sm:$0xff] %vm17, %v62
    // Predicated region
    $region14: #{transformer_decoder_forward.25} parent=1 // pred_check
      _
    $region15: #{transformer_decoder_forward.25} parent=1 // pred_check_branch
      %66 = sbr.rel (0) target = $region17
    $region16: #{transformer_decoder_forward.25} parent=1 // pred_region
      %s68 = ssub.s32 256, 256
      %69 = vsyncadd [#allocation3], %s68
      %s70 = sshll.u32 [#allocation2], 4
      %s71 = int_to_ptr.vmem [resolvable:$true] %s70
      %76 = dma.vmem_to_hbm [thread:$0]  %s71, 256, %s3, [#allocation3], 128, 128, 8
    $region17: #{transformer_decoder_forward.25} parent=1 // pred_fallthru
      _
    // Predicated region
    $region18: #{transformer_decoder_forward.25} parent=1 // pred_check
      _
    $region19: #{transformer_decoder_forward.25} parent=1 // pred_check_branch
      %78 = sbr.rel (0) target = $region21
    $region20: #{transformer_decoder_forward.25} parent=1 // pred_region
      %79 = dma.done [#allocation3], 256
    $region21: #{transformer_decoder_forward.25} parent=1 // pred_fallthru
      _
    %80 = vsyncpa [#allocation3], 1

// kernel: transformer_decoder_forward.17
$region0: #{transformer_decoder_forward.17}
  #allocation0 [shape = 'u32[]', space=smem, size = 0x4, offset = 0x4, fixed_abs, tag = 'smem constant byte address 0x4 - core index']
  #allocation1 [shape = 'u32[144,128]{1,0:T(1,128)}', space=vmem, size = 0x12000, scoped, tag = 'internal scratch']
  #allocation2 [shape = 'f32[8,4]{1,0:T(8,128)}', space=vmem, size = 0x1000, scoped, tag = 'scratch operand']
  #allocation3 [shape = 'f32[8,4]{1,0:T(8,128)}', space=vmem, size = 0x1000, scoped, tag = 'scratch operand']
  #allocation4 [shape = 'f32[8,32]{1,0:T(8,128)}', space=vmem, size = 0x1000, scoped, tag = 'scratch operand']
  %s0 = inlined_call_operand.vmem [shape: f32[2,1,16], index: 0, kind: input, shape index: {}]
  %s1 = inlined_call_operand.vmem [shape: f32[2,8,32], index: 1, kind: input, shape index: {}]
  %s2 = inlined_call_operand.vmem [shape: bf16[2,8,32], index: 2, kind: input, shape index: {}]
  %s3 = inlined_call_operand.vmem [shape: bf16[2,16,32], index: 3, kind: input, shape index: {}]
  %s4 = inlined_call_operand.vmem [shape: bf16[2,16,32], index: 4, kind: input, shape index: {}]
  %s5 = inlined_call_operand.vmem [shape: bf16[32,32], index: 5, kind: input, shape index: {}]
  %s6 = inlined_call_operand.vmem [shape: f32[1,32], index: 6, kind: input, shape index: {}]
  %s7 = inlined_call_operand.vmem [shape: f32[2,8,32], index: 7, kind: output, shape index: {}]
  %s8 = sld [smem:[#allocation0]]
  $region69: #{transformer_decoder_forward.17} parent=0
    _
  %s10 = ssub.s32 1, %s8
  %s11 = scalar_select 0, %s10, %s8
  loop: start=0, step=1, limit=4
  $region2: #{transformer_decoder_forward.17} parent=0 // loop_pre_header
    _
  $region3: #{transformer_decoder_forward.17} parent=0 // loop_header
    %s13 = sphi 0, %s17
    %p14 = scmp.ge.s32.totalorder %s13, 4
    %s20 = sphi 0, %s39
    %s21 = sphi 0, %s35
    %s22 = sphi 0, %s31
    %s23 = sphi 0, %s20
    %s24 = sphi 0, %s21
    %s25 = sphi 0, %s22
    %s26 = sphi 0, %s23
    %s27 = sphi 0, %s24
    %s28 = sphi 0, %s25
    %s44 = sphi 0, %s46
    %s47 = sphi 0, %s44
    %s48 = sphi 0, %s47
    %s64 = sphi 0, %s48
    %s72 = sphi 0, %s74
    %s75 = sphi 0, %s72
    %s76 = sphi 0, %s75
    %s92 = sphi 0, %s76
    %s100 = sphi 0, %s102
    %s103 = sphi 0, %s100
    %s104 = sphi 0, %s103
    %s120 = sphi 0, %s104
    %s128 = sphi 0, %s130
    %s131 = sphi 0, %s128
    %s132 = sphi 0, %s131
    %s148 = sphi 0, %s132
    %s156 = sphi 0, %s158
    %s159 = sphi 0, %s156
    %s160 = sphi 0, %s159
    %s176 = sphi 0, %s160
    %s180 = sphi 0, %s180
    %s182 = sphi 0, %s180
    %s183 = sphi 0, %s182
    %s197 = sphi 0, %s183
    %s201 = sphi 0, %s201
    %s203 = sphi 0, %s201
    %s204 = sphi 0, %s203
    %s218 = sphi 0, %s204
    %s226 = sphi 0, %s228
    %s229 = sphi 0, %s226
    %s230 = sphi 0, %s229
    %s246 = sphi 0, %s230
  $region4: #{transformer_decoder_forward.17} parent=0 // loop_header_branch
    %16 = sbr.rel (%p14) target = $region8
  $region5: #{transformer_decoder_forward.17} parent=0 // loop_body
    %s18 = ssub.s32 %s13, 1
    %s19 = ssub.s32 %s13, 2
    %s29 = sadd.s32 1, %s22
    %p30 = scmp.ge.s32.totalorder %s29, 1
    %s31 = scalar_select %p30, 0, %s29
    %s32 = sadd.s32 1, %s21
    %s33 = scalar_select %p30, %s32, %s21
    %p34 = scmp.ge.s32.totalorder %s33, 1
    %s35 = scalar_select %p34, 0, %s33
    %s36 = sadd.s32 1, %s20
    %s37 = scalar_select %p34, %s36, %s20
    %p38 = scmp.ge.s32.totalorder %s37, 2
    %s39 = scalar_select %p38, 0, %s37
    %s40 = ssub.s32 %s20, %s39
    %s41 = ssub.s32 %s22, %s31
    %s42 = sor.u32 %s40, %s41
    %p43 = scmp.eq.s32.totalorder %s42, 0
    %s45 = sadd.s32 %s44, 1
    %s46 = scalar_select %p43, %s44, %s45
    %p49 = pneg %p43
    %p50 = scmp.eq.s32.totalorder %s13, 1
    %p51 = por %p49, %p50
    %p52 = scmp.ne.s32.totalorder %s44, %s47
    %p53 = scmp.eq.s32.totalorder %s13, 0
    %p54 = por %p52, %p53
    %p55 = scmp.ne.s32.totalorder %s44, %s47
    %p56 = scmp.eq.s32.totalorder %s18, 1
    %p57 = por %p55, %p56
    %p58 = scmp.ne.s32.totalorder %s47, %s48
    %p59 = scmp.eq.s32.totalorder %s18, 0
    %p60 = por %p58, %p59
    %p61 = scmp.ne.s32.totalorder %s47, %s48
    %p62 = scmp.eq.s32.totalorder %s19, 1
    %p63 = por %p61, %p62
    %p65 = scmp.ne.s32.totalorder %s48, %s64
    %p66 = scmp.eq.s32.totalorder %s19, 0
    %p67 = por %p65, %p66
    %s68 = ssub.s32 %s20, %s39
    %s69 = ssub.s32 %s21, %s35
    %s70 = sor.u32 %s68, %s69
    %p71 = scmp.eq.s32.totalorder %s70, 0
    %s73 = sadd.s32 %s72, 1
    %s74 = scalar_select %p71, %s72, %s73
    %p77 = pneg %p71
    %p78 = scmp.eq.s32.totalorder %s13, 1
    %p79 = por %p77, %p78
    %p80 = scmp.ne.s32.totalorder %s72, %s75
    %p81 = scmp.eq.s32.totalorder %s13, 0
    %p82 = por %p80, %p81
    %p83 = scmp.ne.s32.totalorder %s72, %s75
    %p84 = scmp.eq.s32.totalorder %s18, 1
    %p85 = por %p83, %p84
    %p86 = scmp.ne.s32.totalorder %s75, %s76
    %p87 = scmp.eq.s32.totalorder %s18, 0
    %p88 = por %p86, %p87
    %p89 = scmp.ne.s32.totalorder %s75, %s76
    %p90 = scmp.eq.s32.totalorder %s19, 1
    %p91 = por %p89, %p90
    %p93 = scmp.ne.s32.totalorder %s76, %s92
    %p94 = scmp.eq.s32.totalorder %s19, 0
    %p95 = por %p93, %p94
    %s96 = ssub.s32 %s20, %s39
    %s97 = ssub.s32 %s21, %s35
    %s98 = sor.u32 %s96, %s97
    %p99 = scmp.eq.s32.totalorder %s98, 0
    %s101 = sadd.s32 %s100, 1
    %s102 = scalar_select %p99, %s100, %s101
    %p105 = pneg %p99
    %p106 = scmp.eq.s32.totalorder %s13, 1
    %p107 = por %p105, %p106
    %p108 = scmp.ne.s32.totalorder %s100, %s103
    %p109 = scmp.eq.s32.totalorder %s13, 0
    %p110 = por %p108, %p109
    %p111 = scmp.ne.s32.totalorder %s100, %s103
    %p112 = scmp.eq.s32.totalorder %s18, 1
    %p113 = por %p111, %p112
    %p114 = scmp.ne.s32.totalorder %s103, %s104
    %p115 = scmp.eq.s32.totalorder %s18, 0
    %p116 = por %p114, %p115
    %p117 = scmp.ne.s32.totalorder %s103, %s104
    %p118 = scmp.eq.s32.totalorder %s19, 1
    %p119 = por %p117, %p118
    %p121 = scmp.ne.s32.totalorder %s104, %s120
    %p122 = scmp.eq.s32.totalorder %s19, 0
    %p123 = por %p121, %p122
    %s124 = ssub.s32 %s20, %s39
    %s125 = ssub.s32 %s22, %s31
    %s126 = sor.u32 %s124, %s125
    %p127 = scmp.eq.s32.totalorder %s126, 0
    %s129 = sadd.s32 %s128, 1
    %s130 = scalar_select %p127, %s128, %s129
    %p133 = pneg %p127
    %p134 = scmp.eq.s32.totalorder %s13, 1
    %p135 = por %p133, %p134
    %p136 = scmp.ne.s32.totalorder %s128, %s131
    %p137 = scmp.eq.s32.totalorder %s13, 0
    %p138 = por %p136, %p137
    %p139 = scmp.ne.s32.totalorder %s128, %s131
    %p140 = scmp.eq.s32.totalorder %s18, 1
    %p141 = por %p139, %p140
    %p142 = scmp.ne.s32.totalorder %s131, %s132
    %p143 = scmp.eq.s32.totalorder %s18, 0
    %p144 = por %p142, %p143
    %p145 = scmp.ne.s32.totalorder %s131, %s132
    %p146 = scmp.eq.s32.totalorder %s19, 1
    %p147 = por %p145, %p146
    %p149 = scmp.ne.s32.totalorder %s132, %s148
    %p150 = scmp.eq.s32.totalorder %s19, 0
    %p151 = por %p149, %p150
    %s152 = ssub.s32 %s20, %s39
    %s153 = ssub.s32 %s22, %s31
    %s154 = sor.u32 %s152, %s153
    %p155 = scmp.eq.s32.totalorder %s154, 0
    %s157 = sadd.s32 %s156, 1
    %s158 = scalar_select %p155, %s156, %s157
    %p161 = pneg %p155
    %p162 = scmp.eq.s32.totalorder %s13, 1
    %p163 = por %p161, %p162
    %p164 = scmp.ne.s32.totalorder %s156, %s159
    %p165 = scmp.eq.s32.totalorder %s13, 0
    %p166 = por %p164, %p165
    %p167 = scmp.ne.s32.totalorder %s156, %s159
    %p168 = scmp.eq.s32.totalorder %s18, 1
    %p169 = por %p167, %p168
    %p170 = scmp.ne.s32.totalorder %s159, %s160
    %p171 = scmp.eq.s32.totalorder %s18, 0
    %p172 = por %p170, %p171
    %p173 = scmp.ne.s32.totalorder %s159, %s160
    %p174 = scmp.eq.s32.totalorder %s19, 1
    %p175 = por %p173, %p174
    %p177 = scmp.ne.s32.totalorder %s160, %s176
    %p178 = scmp.eq.s32.totalorder %s19, 0
    %p179 = por %p177, %p178
    %s181 = sadd.s32 %s180, 1
    %p184 = scmp.eq.s32.totalorder %s13, 1
    %p185 = scmp.ne.s32.totalorder %s180, %s182
    %p186 = scmp.eq.s32.totalorder %s13, 0
    %p187 = por %p185, %p186
    %p188 = scmp.ne.s32.totalorder %s180, %s182
    %p189 = scmp.eq.s32.totalorder %s18, 1
    %p190 = por %p188, %p189
    %p191 = scmp.ne.s32.totalorder %s182, %s183
    %p192 = scmp.eq.s32.totalorder %s18, 0
    %p193 = por %p191, %p192
    %p194 = scmp.ne.s32.totalorder %s182, %s183
    %p195 = scmp.eq.s32.totalorder %s19, 1
    %p196 = por %p194, %p195
    %p198 = scmp.ne.s32.totalorder %s183, %s197
    %p199 = scmp.eq.s32.totalorder %s19, 0
    %p200 = por %p198, %p199
    %s202 = sadd.s32 %s201, 1
    %p205 = scmp.eq.s32.totalorder %s13, 1
    %p206 = scmp.ne.s32.totalorder %s201, %s203
    %p207 = scmp.eq.s32.totalorder %s13, 0
    %p208 = por %p206, %p207
    %p209 = scmp.ne.s32.totalorder %s201, %s203
    %p210 = scmp.eq.s32.totalorder %s18, 1
    %p211 = por %p209, %p210
    %p212 = scmp.ne.s32.totalorder %s203, %s204
    %p213 = scmp.eq.s32.totalorder %s18, 0
    %p214 = por %p212, %p213
    %p215 = scmp.ne.s32.totalorder %s203, %s204
    %p216 = scmp.eq.s32.totalorder %s19, 1
    %p217 = por %p215, %p216
    %p219 = scmp.ne.s32.totalorder %s204, %s218
    %p220 = scmp.eq.s32.totalorder %s19, 0
    %p221 = por %p219, %p220
    %s222 = ssub.s32 %s20, %s39
    %s223 = ssub.s32 %s21, %s35
    %s224 = sor.u32 %s222, %s223
    %p225 = scmp.eq.s32.totalorder %s224, 0
    %s227 = sadd.s32 %s226, 1
    %s228 = scalar_select %p225, %s226, %s227
    %p231 = pneg %p225
    %p232 = scmp.eq.s32.totalorder %s13, 1
    %p233 = por %p231, %p232
    %p234 = scmp.ne.s32.totalorder %s226, %s229
    %p235 = scmp.eq.s32.totalorder %s13, 0
    %p236 = por %p234, %p235
    %p237 = scmp.ne.s32.totalorder %s226, %s229
    %p238 = scmp.eq.s32.totalorder %s18, 1
    %p239 = por %p237, %p238
    %p240 = scmp.ne.s32.totalorder %s229, %s230
    %p241 = scmp.eq.s32.totalorder %s18, 0
    %p242 = por %p240, %p241
    %p243 = scmp.ne.s32.totalorder %s229, %s230
    %p244 = scmp.eq.s32.totalorder %s19, 1
    %p245 = por %p243, %p244
    %p247 = scmp.ne.s32.totalorder %s230, %s246
    %p248 = scmp.eq.s32.totalorder %s19, 0
    %p249 = por %p247, %p248
    %p250 = scmp.le.s32.totalorder 1, %s13
    %p251 = scmp.lt.s32.totalorder %s13, 3
    %p252 = pnand %p250, %p251
    %p253 = pneg %p252
    // Predicated region
    $region9: #{transformer_decoder_forward.17} parent=5 // pred_check
      _
    $region10: #{transformer_decoder_forward.17} parent=5 // pred_check_branch
      %255 = sbr.rel (%p252) target = $region12
    $region11: #{transformer_decoder_forward.17} parent=5 // pred_region
      %s256 = ssub.s32 %s13, 1
      // Predicated region
      $region13: #{transformer_decoder_forward.17} parent=11 // pred_check
        %p257 = pneg %p193
      $region14: #{transformer_decoder_forward.17} parent=11 // pred_check_branch
        %259 = sbr.rel (%p257) target = $region16
      $region15: #{transformer_decoder_forward.17} parent=11 // pred_region
        _
      $region16: #{transformer_decoder_forward.17} parent=11 // pred_fallthru
        _
      // Predicated region
      $region17: #{transformer_decoder_forward.17} parent=11 // pred_check
        %p260 = pneg %p214
      $region18: #{transformer_decoder_forward.17} parent=11 // pred_check_branch
        %262 = sbr.rel (%p260) target = $region20
      $region19: #{transformer_decoder_forward.17} parent=11 // pred_region
        _
      $region20: #{transformer_decoder_forward.17} parent=11 // pred_fallthru
        _
    $region12: #{transformer_decoder_forward.17} parent=5 // pred_fallthru
      _
    %p263 = scmp.lt.s32.totalorder %s13, 2
    // Predicated region
    $region21: #{transformer_decoder_forward.17} parent=5 // pred_check
      %p264 = pneg %p263
    $region22: #{transformer_decoder_forward.17} parent=5 // pred_check_branch
      %266 = sbr.rel (%p264) target = $region24
    $region23: #{transformer_decoder_forward.17} parent=5 // pred_region
      // Predicated region
      $region25: #{transformer_decoder_forward.17} parent=23 // pred_check
        %p267 = pneg %p54
      $region26: #{transformer_decoder_forward.17} parent=23 // pred_check_branch
        %269 = sbr.rel (%p267) target = $region28
      $region27: #{transformer_decoder_forward.17} parent=23 // pred_region
        %p270 = scmp.lt.s32.totalorder %s20, 1
        %s271 = scalar_select %p270, %s20, 1
        %p272 = scmp.lt.s32.totalorder %s22, 0
        %s273 = scalar_select %p272, %s22, 0
        %s274 = sadd.s32 %s273, %s271
        %s275 = scalar_lea.vmem %s0, %s274
      $region28: #{transformer_decoder_forward.17} parent=23 // pred_fallthru
        _
      // Predicated region
      $region29: #{transformer_decoder_forward.17} parent=23 // pred_check
        %p276 = pneg %p82
      $region30: #{transformer_decoder_forward.17} parent=23 // pred_check_branch
        %278 = sbr.rel (%p276) target = $region32
      $region31: #{transformer_decoder_forward.17} parent=23 // pred_region
        %p279 = scmp.lt.s32.totalorder %s20, 1
        %s280 = scalar_select %p279, %s20, 1
        %p281 = scmp.lt.s32.totalorder %s21, 0
        %s282 = scalar_select %p281, %s21, 0
        %s283 = sadd.s32 %s282, %s280
        %s284 = smul.addr %s283, 8
        %s285 = scalar_lea.vmem %s1, %s284
      $region32: #{transformer_decoder_forward.17} parent=23 // pred_fallthru
        _
      // Predicated region
      $region33: #{transformer_decoder_forward.17} parent=23 // pred_check
        %p286 = pneg %p110
      $region34: #{transformer_decoder_forward.17} parent=23 // pred_check_branch
        %288 = sbr.rel (%p286) target = $region36
      $region35: #{transformer_decoder_forward.17} parent=23 // pred_region
        %p289 = scmp.lt.s32.totalorder %s20, 1
        %s290 = scalar_select %p289, %s20, 1
        %p291 = scmp.lt.s32.totalorder %s21, 0
        %s292 = scalar_select %p291, %s21, 0
        %s293 = sadd.s32 %s292, %s290
        %s294 = smul.addr %s293, 4
        %s295 = scalar_lea.vmem %s2, %s294
      $region36: #{transformer_decoder_forward.17} parent=23 // pred_fallthru
        _
      // Predicated region
      $region37: #{transformer_decoder_forward.17} parent=23 // pred_check
        %p296 = pneg %p138
      $region38: #{transformer_decoder_forward.17} parent=23 // pred_check_branch
        %298 = sbr.rel (%p296) target = $region40
      $region39: #{transformer_decoder_forward.17} parent=23 // pred_region
        %s299 = smul.u32 2, %s22
        %p300 = scmp.lt.s32.totalorder %s20, 1
        %s301 = scalar_select %p300, %s20, 1
        %p302 = scmp.lt.s32.totalorder %s299, 1
        %s303 = scalar_select %p302, %s299, 1
        %s304 = smul.addr %s301, 2
        %s305 = sadd.s32 %s303, %s304
        %s306 = smul.addr %s305, 4
        %s307 = scalar_lea.vmem %s3, %s306
        %s308 = smul.u32 2, %s22
      $region40: #{transformer_decoder_forward.17} parent=23 // pred_fallthru
        _
      // Predicated region
      $region41: #{transformer_decoder_forward.17} parent=23 // pred_check
        %p309 = pneg %p166
      $region42: #{transformer_decoder_forward.17} parent=23 // pred_check_branch
        %311 = sbr.rel (%p309) target = $region44
      $region43: #{transformer_decoder_forward.17} parent=23 // pred_region
        %s312 = smul.u32 2, %s22
        %p313 = scmp.lt.s32.totalorder %s20, 1
        %s314 = scalar_select %p313, %s20, 1
        %p315 = scmp.lt.s32.totalorder %s312, 1
        %s316 = scalar_select %p315, %s312, 1
        %s317 = smul.addr %s314, 2
        %s318 = sadd.s32 %s316, %s317
        %s319 = smul.addr %s318, 4
        %s320 = scalar_lea.vmem %s4, %s319
        %s321 = smul.u32 2, %s22
      $region44: #{transformer_decoder_forward.17} parent=23 // pred_fallthru
        _
    $region24: #{transformer_decoder_forward.17} parent=5 // pred_fallthru
      _
    %p322 = scmp.le.s32.totalorder 1, %s13
    %p323 = scmp.lt.s32.totalorder %s13, 3
    %p324 = pnand %p322, %p323
    %p325 = pneg %p324
    // Predicated region
    $region45: #{transformer_decoder_forward.17} parent=5 // pred_check
      _
    $region46: #{transformer_decoder_forward.17} parent=5 // pred_check_branch
      %327 = sbr.rel (%p324) target = $region48
    $region47: #{transformer_decoder_forward.17} parent=5 // pred_region
      %s328 = ssub.s32 %s13, 1
      %p329 = scmp.lt.s32.totalorder %s23, 1
      %s330 = scalar_select %p329, %s23, 1
      %p331 = scmp.lt.s32.totalorder %s25, 0
      %s332 = scalar_select %p331, %s25, 0
      %s333 = sadd.s32 %s332, %s330
      %s334 = scalar_lea.vmem %s0, %s333
      %p335 = pneg %p60
      %p336 = pneg %p57
      %p337 = scmp.lt.s32.totalorder %s23, 1
      %s338 = scalar_select %p337, %s23, 1
      %p339 = scmp.lt.s32.totalorder %s24, 0
      %s340 = scalar_select %p339, %s24, 0
      %s341 = sadd.s32 %s340, %s338
      %s342 = smul.addr %s341, 8
      %s343 = scalar_lea.vmem %s1, %s342
      %p344 = pneg %p88
      %p345 = pneg %p85
      %p346 = scmp.lt.s32.totalorder %s23, 1
      %s347 = scalar_select %p346, %s23, 1
      %p348 = scmp.lt.s32.totalorder %s24, 0
      %s349 = scalar_select %p348, %s24, 0
      %s350 = sadd.s32 %s349, %s347
      %s351 = smul.addr %s350, 4
      %s352 = scalar_lea.vmem %s2, %s351
      %p353 = pneg %p116
      %p354 = pneg %p113
      %s355 = smul.u32 2, %s25
      %p356 = scmp.lt.s32.totalorder %s23, 1
      %s357 = scalar_select %p356, %s23, 1
      %p358 = scmp.lt.s32.totalorder %s355, 1
      %s359 = scalar_select %p358, %s355, 1
      %s360 = smul.addr %s357, 2
      %s361 = sadd.s32 %s359, %s360
      %s362 = smul.addr %s361, 4
      %s363 = scalar_lea.vmem %s3, %s362
      %p364 = pneg %p144
      %p365 = pneg %p141
      %s366 = smul.u32 2, %s25
      %p367 = scmp.lt.s32.totalorder %s23, 1
      %s368 = scalar_select %p367, %s23, 1
      %p369 = scmp.lt.s32.totalorder %s366, 1
      %s370 = scalar_select %p369, %s366, 1
      %s371 = smul.addr %s368, 2
      %s372 = sadd.s32 %s370, %s371
      %s373 = smul.addr %s372, 4
      %s374 = scalar_lea.vmem %s4, %s373
      %p375 = pneg %p172
      %p376 = pneg %p169
      %p377 = pneg %p193
      %p378 = pneg %p190
      %p379 = pneg %p214
      %p380 = pneg %p211
      %p381 = pneg %p242
      %p382 = pneg %p239
      %p383 = scmp.lt.s32.totalorder %s23, 1
      %s384 = scalar_select %p383, %s23, 1
      %p385 = scmp.lt.s32.totalorder %s24, 0
      %s386 = scalar_select %p385, %s24, 0
      %s387 = sadd.s32 %s386, %s384
      %s388 = smul.addr %s387, 8
      %s389 = scalar_lea.vmem %s7, %s388
      %p390 = scmp.lt.s32.totalorder %s23, 1
      %s391 = scalar_select %p390, %s23, 1
      %p392 = scmp.lt.s32.totalorder %s25, 0
      %s393 = scalar_select %p392, %s25, 0
      %s394 = sadd.s32 %s393, %s391
      %s395 = scalar_lea.vmem %s0, %s394
      %p396 = scmp.lt.s32.totalorder %s23, 1
      %s397 = scalar_select %p396, %s23, 1
      %p398 = scmp.lt.s32.totalorder %s24, 0
      %s399 = scalar_select %p398, %s24, 0
      %s400 = sadd.s32 %s399, %s397
      %s401 = smul.addr %s400, 8
      %s402 = scalar_lea.vmem %s1, %s401
      %p403 = scmp.lt.s32.totalorder %s23, 1
      %s404 = scalar_select %p403, %s23, 1
      %p405 = scmp.lt.s32.totalorder %s24, 0
      %s406 = scalar_select %p405, %s24, 0
      %s407 = sadd.s32 %s406, %s404
      %s408 = smul.addr %s407, 4
      %s409 = scalar_lea.vmem %s2, %s408
      %s410 = smul.u32 2, %s25
      %p411 = scmp.lt.s32.totalorder %s23, 1
      %s412 = scalar_select %p411, %s23, 1
      %p413 = scmp.lt.s32.totalorder %s410, 1
      %s414 = scalar_select %p413, %s410, 1
      %s415 = smul.addr %s412, 2
      %s416 = sadd.s32 %s414, %s415
      %s417 = smul.addr %s416, 4
      %s418 = scalar_lea.vmem %s3, %s417
      %s419 = smul.u32 2, %s25
      %s420 = smul.u32 2, %s25
      %p421 = scmp.lt.s32.totalorder %s23, 1
      %s422 = scalar_select %p421, %s23, 1
      %p423 = scmp.lt.s32.totalorder %s420, 1
      %s424 = scalar_select %p423, %s420, 1
      %s425 = smul.addr %s422, 2
      %s426 = sadd.s32 %s424, %s425
      %s427 = smul.addr %s426, 4
      %s428 = scalar_lea.vmem %s4, %s427
      %s429 = smul.u32 2, %s25
      %p430 = scmp.lt.s32.totalorder %s23, 1
      %s431 = scalar_select %p430, %s23, 1
      %p432 = scmp.lt.s32.totalorder %s24, 0
      %s433 = scalar_select %p432, %s24, 0
      %s434 = sadd.s32 %s433, %s431
      %s435 = smul.addr %s434, 8
      %s436 = scalar_lea.vmem %s7, %s435
      %p438 = scmp.eq.s32.totalorder %s25, 0
      // Predicated region
      $region49: #{transformer_decoder_forward.17} parent=47 // pred_check
        %p439 = pneg %p438
      $region50: #{transformer_decoder_forward.17} parent=47 // pred_check_branch
        %441 = sbr.rel (%p439) target = $region52
      $region51: #{transformer_decoder_forward.17} parent=47 // pred_region
        %vm442 = vcmask 31744
        %443 = vst.msk [vmem:[#allocation2] sm:$0xff] %vm442, -inf
        %444 = vst.msk [vmem:[#allocation3] sm:$0xff] %vm442, 0.0
        %vm445 = vcmask 261120
        %446 = vst.msk [vmem:[#allocation4] sm:$0xff] %vm445, 0.0
      $region52: #{transformer_decoder_forward.17} parent=47 // pred_fallthru
        _
      %v447 = vld [vmem:[%s409] sm:$0xf]
      %v448 = vld [vmem:[%s418] sm:$0xf]
      %v449 = vld [vmem:[%s418 + $0x4] sm:$0xf]
      %v450 = vld [vmem:[%s428] sm:$0xf]
      %v451 = vld [vmem:[%s428 + $0x4] sm:$0xf]
      %v452 = vld [vmem:[%s395] sm:$0x1]
      %vm453 = vcmp.gt.f32.partialorder %v452, 0.0
      %v454 = vsel %vm453, 1, 0
      %v455 = vlaneseq
      %v456 = vshrl.u32 %v455, 7
      %v457 = vsub.s32 0, %v456
      %v458 = vrot.slane %v454, %v457
      %vm459 = vcmp.eq.s32.totalorder %v458, 1
      %v462 = vunpack.c.l.b16 %v448
      %v463 = vunpack.c.l.b16 %v449
      %v464 = vpack.c.b16 %v463, %v462
      %vm465 = vcmask 64512
      %v467 = vsel %vm465, %v447, 0
      %v470 = vsel %vm465, %v464, 0
      %472 = vmatprep.subr.bf16.mxu0 0
      %473 = vmatpush1.bf16.xpose.msra.mxu0 %v470
      %474 = vmatprep.subr.bf16.mxu0 0
      %475 = vmatpush1.bf16.xpose.msra.mxu0 0
      %476 = vmatprep.subr.bf16.mxu0 0
      %477 = vmatpush1.bf16.xpose.msra.mxu0 0
      %478 = vmatprep.subr.bf16.mxu0 0
      %479 = vmatpush1.bf16.xpose.msra.mxu0 0
      %480 = vmatprep.subr.bf16.mxu0 0
      %481 = vmatpush1.bf16.xpose.msra.mxu0 0
      %482 = vmatprep.subr.bf16.mxu0 0
      %483 = vmatpush1.bf16.xpose.msra.mxu0 0
      %484 = vmatprep.subr.bf16.mxu0 0
      %485 = vmatpush1.bf16.xpose.msra.mxu0 0
      %486 = vmatprep.subr.bf16.mxu0 0
      %487 = vmatpush1.bf16.xpose.msra.mxu0 0
      %488 = vmatprep.subr.bf16.mxu0 0
      %489 = vmatpush1.bf16.xpose.msra.mxu0 0
      %490 = vmatprep.subr.bf16.mxu0 0
      %491 = vmatpush1.bf16.xpose.msra.mxu0 0
      %492 = vmatprep.subr.bf16.mxu0 0
      %493 = vmatpush1.bf16.xpose.msra.mxu0 0
      %494 = vmatprep.subr.bf16.mxu0 0
      %495 = vmatpush1.bf16.xpose.msra.mxu0 0
      %496 = vmatprep.subr.bf16.mxu0 0
      %497 = vmatpush1.bf16.xpose.msra.mxu0 0
      %498 = vmatprep.subr.bf16.mxu0 0
      %499 = vmatpush1.bf16.xpose.msra.mxu0 0
      %500 = vmatprep.subr.bf16.mxu0 0
      %501 = vmatpush1.bf16.xpose.msra.mxu0 0
      %502 = vmatprep.subr.bf16.mxu0 0
      %503 = vmatpush1.bf16.xpose.msra.mxu0 0
      %504 = vmatprep.mubr.bf16.mxu0 0
      %505 = vmatmul.mubr.bf16.gmra.mrb[0].mxu0 %v467
      %v506 = vpop.f32.mrb[0].mxu0
      %v507 = vadd.f32 0.0, %v506
      %v508 = vpop.f32.mrb[0].mxu0
      %v509 = vpop.f32.mrb[0].mxu0
      %v510 = vpop.f32.mrb[0].mxu0
      %511 = vdwg.mxu0
      %v512 = vmul.f32 %v507, 0.35355338
      %v513 = vsel %vm459, -1e+18, %v512
      %v514 = vld [vmem:[#allocation2] sm:$0xff]
      %vm515 = vcmask 130048
      %v516 = vsel %vm515, %v513, -inf
      %517 = vmax.xlane.f32.xlu0 %v516
      %v518 = vpop.xlane.xlu0 %517
      %v519 = vmax.f32 %v514, %v518
      %v520 = vsub.f32 %v514, %v519
      %v521 = vmul.f32 %v520, 1.442695
      %v522 = vpow.pop %v521
      %524 = vset.pattern.permute.xlu0 0
      %525 = vperm.xlu0 %524, %v519
      %v526 = vpop.permute.xlu0 %525
      %v528 = vsub.f32 %v513, %v526
      %v529 = vmul.f32 %v528, 1.442695
      %v530 = vpow.pop %v529
      %v531 = vld [vmem:[#allocation3] sm:$0xff]
      %v532 = vmul.f32 %v522, %v531
      %v533 = vsel %vm515, %v530, 0.0
      %534 = vadd.xlane.f32.xlu0 %v533
      %v535 = vpop.xlane.xlu0 %534
      %v536 = vadd.f32 %v532, %v535
      %vm537 = vcmask 7168
      %538 = vst.msk [vmem:[#allocation3] sm:$0xff] %vm537, %v536
      %v539 = vld [vmem:[#allocation4] sm:$0xff]
      %541 = vset.pattern.permute.xlu0 0
      %542 = vperm.xlu0 %541, %v522
      %v543 = vpop.permute.xlu0 %542
      %v545 = vmul.f32 %v543, %v539
      %v546 = vpack.c.bf16 %v530, %v530
      %v549 = vunpack.c.l.b16 %v450
      %v550 = vunpack.c.l.b16 %v451
      %v551 = vpack.c.b16 %v550, %v549
      %v554 = vsel %vm515, %v546, 0
      %556 = vmatprep.subr.bf16.mxu0 0
      %557 = vmatpush1.bf16.msra.mxu0 %v551
      %558 = vmatprep.subr.bf16.mxu0 0
      %559 = vmatpush1.bf16.msra.mxu0 0
      %560 = vmatprep.subr.bf16.mxu0 0
      %561 = vmatpush1.bf16.msra.mxu0 0
      %562 = vmatprep.subr.bf16.mxu0 0
      %563 = vmatpush1.bf16.msra.mxu0 0
      %564 = vmatprep.subr.bf16.mxu0 0
      %565 = vmatpush1.bf16.msra.mxu0 0
      %566 = vmatprep.subr.bf16.mxu0 0
      %567 = vmatpush1.bf16.msra.mxu0 0
      %568 = vmatprep.subr.bf16.mxu0 0
      %569 = vmatpush1.bf16.msra.mxu0 0
      %570 = vmatprep.subr.bf16.mxu0 0
      %571 = vmatpush1.bf16.msra.mxu0 0
      %572 = vmatprep.subr.bf16.mxu0 0
      %573 = vmatpush1.bf16.msra.mxu0 0
      %574 = vmatprep.subr.bf16.mxu0 0
      %575 = vmatpush1.bf16.msra.mxu0 0
      %576 = vmatprep.subr.bf16.mxu0 0
      %577 = vmatpush1.bf16.msra.mxu0 0
      %578 = vmatprep.subr.bf16.mxu0 0
      %579 = vmatpush1.bf16.msra.mxu0 0
      %580 = vmatprep.subr.bf16.mxu0 0
      %581 = vmatpush1.bf16.msra.mxu0 0
      %582 = vmatprep.subr.bf16.mxu0 0
      %583 = vmatpush1.bf16.msra.mxu0 0
      %584 = vmatprep.subr.bf16.mxu0 0
      %585 = vmatpush1.bf16.msra.mxu0 0
      %586 = vmatprep.subr.bf16.mxu0 0
      %587 = vmatpush1.bf16.msra.mxu0 0
      %588 = vmatprep.mubr.bf16.mxu0 0
      %589 = vmatmul.mubr.bf16.gmra.mrb[0].mxu0 %v554
      %v590 = vpop.f32.mrb[0].mxu0
      %v591 = vadd.f32 0.0, %v590
      %v592 = vpop.f32.mrb[0].mxu0
      %v593 = vpop.f32.mrb[0].mxu0
      %v594 = vpop.f32.mrb[0].mxu0
      %595 = vdwg.mxu0
      %v596 = vadd.f32 %v545, %v591
      %597 = vst.msk [vmem:[#allocation4] sm:$0xff] %vm465, %v596
      %598 = vst.msk [vmem:[#allocation2] sm:$0xff] %vm537, %v519
      %v600 = vunpack.c.l.b16 %v447
      %v601 = vpack.c.b16 %v600, %v600
      %602 = vrot.lane.b32.xlu0 %v601, 120
      %v603 = vpop.permute.xlu0 %602
      %604 = vrot.lane.b32.xlu0 %v464, 120
      %v605 = vpop.permute.xlu0 %604
      %v607 = vsel %vm465, %v603, 0
      %v610 = vsel %vm465, %v605, 0
      %612 = vmatprep.subr.bf16.mxu0 0
      %613 = vmatpush1.bf16.xpose.msra.mxu0 %v610
      %614 = vmatprep.subr.bf16.mxu0 0
      %615 = vmatpush1.bf16.xpose.msra.mxu0 0
      %616 = vmatprep.subr.bf16.mxu0 0
      %617 = vmatpush1.bf16.xpose.msra.mxu0 0
      %618 = vmatprep.subr.bf16.mxu0 0
      %619 = vmatpush1.bf16.xpose.msra.mxu0 0
      %620 = vmatprep.subr.bf16.mxu0 0
      %621 = vmatpush1.bf16.xpose.msra.mxu0 0
      %622 = vmatprep.subr.bf16.mxu0 0
      %623 = vmatpush1.bf16.xpose.msra.mxu0 0
      %624 = vmatprep.subr.bf16.mxu0 0
      %625 = vmatpush1.bf16.xpose.msra.mxu0 0
      %626 = vmatprep.subr.bf16.mxu0 0
      %627 = vmatpush1.bf16.xpose.msra.mxu0 0
      %628 = vmatprep.subr.bf16.mxu0 0
      %629 = vmatpush1.bf16.xpose.msra.mxu0 0
      %630 = vmatprep.subr.bf16.mxu0 0
      %631 = vmatpush1.bf16.xpose.msra.mxu0 0
      %632 = vmatprep.subr.bf16.mxu0 0
      %633 = vmatpush1.bf16.xpose.msra.mxu0 0
      %634 = vmatprep.subr.bf16.mxu0 0
      %635 = vmatpush1.bf16.xpose.msra.mxu0 0
      %636 = vmatprep.subr.bf16.mxu0 0
      %637 = vmatpush1.bf16.xpose.msra.mxu0 0
      %638 = vmatprep.subr.bf16.mxu0 0
      %639 = vmatpush1.bf16.xpose.msra.mxu0 0
      %640 = vmatprep.subr.bf16.mxu0 0
      %641 = vmatpush1.bf16.xpose.msra.mxu0 0
      %642 = vmatprep.subr.bf16.mxu0 0
      %643 = vmatpush1.bf16.xpose.msra.mxu0 0
      %644 = vmatprep.mubr.bf16.mxu0 0
      %645 = vmatmul.mubr.bf16.gmra.mrb[0].mxu0 %v607
      %v646 = vpop.f32.mrb[0].mxu0
      %v647 = vadd.f32 0.0, %v646
      %v648 = vpop.f32.mrb[0].mxu0
      %v649 = vpop.f32.mrb[0].mxu0
      %v650 = vpop.f32.mrb[0].mxu0
      %651 = vdwg.mxu0
      %v652 = vmul.f32 %v647, 0.35355338
      %v653 = vsel %vm459, -1e+18, %v652
      %v654 = vld [vmem:[#allocation2] sm:$0xff]
      %v655 = vsel %vm515, %v653, -inf
      %656 = vmax.xlane.f32.xlu0 %v655
      %v657 = vpop.xlane.xlu0 %656
      %v658 = vmax.f32 %v654, %v657
      %v659 = vsub.f32 %v654, %v658
      %v660 = vmul.f32 %v659, 1.442695
      %v661 = vpow.pop %v660
      %663 = vset.pattern.permute.xlu0 1
      %664 = vperm.xlu0 %663, %v658
      %v665 = vpop.permute.xlu0 %664
      %v667 = vsub.f32 %v653, %v665
      %v668 = vmul.f32 %v667, 1.442695
      %v669 = vpow.pop %v668
      %v670 = vld [vmem:[#allocation3] sm:$0xff]
      %v671 = vmul.f32 %v661, %v670
      %v672 = vsel %vm515, %v669, 0.0
      %673 = vadd.xlane.f32.xlu0 %v672
      %v674 = vpop.xlane.xlu0 %673
      %v675 = vadd.f32 %v671, %v674
      %vm676 = vcmask 15368
      %677 = vst.msk [vmem:[#allocation3] sm:$0xff] %vm676, %v675
      %v678 = vld [vmem:[#allocation4] sm:$0xff]
      %680 = vset.pattern.permute.xlu0 1
      %681 = vperm.xlu0 %680, %v661
      %v682 = vpop.permute.xlu0 %681
      %v684 = vmul.f32 %v682, %v678
      %v685 = vpack.c.bf16 %v669, %v669
      %686 = vrot.lane.b32.xlu0 %v551, 120
      %v687 = vpop.permute.xlu0 %686
      %v690 = vsel %vm515, %v685, 0
      %692 = vmatprep.subr.bf16.mxu0 0
      %693 = vmatpush1.bf16.msra.mxu0 %v687
      %694 = vmatprep.subr.bf16.mxu0 0
      %695 = vmatpush1.bf16.msra.mxu0 0
      %696 = vmatprep.subr.bf16.mxu0 0
      %697 = vmatpush1.bf16.msra.mxu0 0
      %698 = vmatprep.subr.bf16.mxu0 0
      %699 = vmatpush1.bf16.msra.mxu0 0
      %700 = vmatprep.subr.bf16.mxu0 0
      %701 = vmatpush1.bf16.msra.mxu0 0
      %702 = vmatprep.subr.bf16.mxu0 0
      %703 = vmatpush1.bf16.msra.mxu0 0
      %704 = vmatprep.subr.bf16.mxu0 0
      %705 = vmatpush1.bf16.msra.mxu0 0
      %706 = vmatprep.subr.bf16.mxu0 0
      %707 = vmatpush1.bf16.msra.mxu0 0
      %708 = vmatprep.subr.bf16.mxu0 0
      %709 = vmatpush1.bf16.msra.mxu0 0
      %710 = vmatprep.subr.bf16.mxu0 0
      %711 = vmatpush1.bf16.msra.mxu0 0
      %712 = vmatprep.subr.bf16.mxu0 0
      %713 = vmatpush1.bf16.msra.mxu0 0
      %714 = vmatprep.subr.bf16.mxu0 0
      %715 = vmatpush1.bf16.msra.mxu0 0
      %716 = vmatprep.subr.bf16.mxu0 0
      %717 = vmatpush1.bf16.msra.mxu0 0
      %718 = vmatprep.subr.bf16.mxu0 0
      %719 = vmatpush1.bf16.msra.mxu0 0
      %720 = vmatprep.subr.bf16.mxu0 0
      %721 = vmatpush1.bf16.msra.mxu0 0
      %722 = vmatprep.subr.bf16.mxu0 0
      %723 = vmatpush1.bf16.msra.mxu0 0
      %724 = vmatprep.mubr.bf16.mxu0 0
      %725 = vmatmul.mubr.bf16.gmra.mrb[0].mxu0 %v690
      %v726 = vpop.f32.mrb[0].mxu0
      %v727 = vadd.f32 0.0, %v726
      %v728 = vpop.f32.mrb[0].mxu0
      %v729 = vpop.f32.mrb[0].mxu0
      %v730 = vpop.f32.mrb[0].mxu0
      %731 = vdwg.mxu0
      %733 = vrot.lane.b32.xlu0 %v727, 8
      %v734 = vpop.permute.xlu0 %733
      %v736 = vadd.f32 %v684, %v734
      %vm737 = vcmask 130112
      %738 = vst.msk [vmem:[#allocation4] sm:$0xff] %vm737, %v736
      %739 = vst.msk [vmem:[#allocation2] sm:$0xff] %vm676, %v658
      %740 = vrot.lane.b32.xlu0 %v601, 112
      %v741 = vpop.permute.xlu0 %740
      %742 = vrot.lane.b32.xlu0 %v464, 112
      %v743 = vpop.permute.xlu0 %742
      %v745 = vsel %vm465, %v741, 0
      %v748 = vsel %vm465, %v743, 0
      %750 = vmatprep.subr.bf16.mxu0 0
      %751 = vmatpush1.bf16.xpose.msra.mxu0 %v748
      %752 = vmatprep.subr.bf16.mxu0 0
      %753 = vmatpush1.bf16.xpose.msra.mxu0 0
      %754 = vmatprep.subr.bf16.mxu0 0
      %755 = vmatpush1.bf16.xpose.msra.mxu0 0
      %756 = vmatprep.subr.bf16.mxu0 0
      %757 = vmatpush1.bf16.xpose.msra.mxu0 0
      %758 = vmatprep.subr.bf16.mxu0 0
      %759 = vmatpush1.bf16.xpose.msra.mxu0 0
      %760 = vmatprep.subr.bf16.mxu0 0
      %761 = vmatpush1.bf16.xpose.msra.mxu0 0
      %762 = vmatprep.subr.bf16.mxu0 0
      %763 = vmatpush1.bf16.xpose.msra.mxu0 0
      %764 = vmatprep.subr.bf16.mxu0 0
      %765 = vmatpush1.bf16.xpose.msra.mxu0 0
      %766 = vmatprep.subr.bf16.mxu0 0
      %767 = vmatpush1.bf16.xpose.msra.mxu0 0
      %768 = vmatprep.subr.bf16.mxu0 0
      %769 = vmatpush1.bf16.xpose.msra.mxu0 0
      %770 = vmatprep.subr.bf16.mxu0 0
      %771 = vmatpush1.bf16.xpose.msra.mxu0 0
      %772 = vmatprep.subr.bf16.mxu0 0
      %773 = vmatpush1.bf16.xpose.msra.mxu0 0
      %774 = vmatprep.subr.bf16.mxu0 0
      %775 = vmatpush1.bf16.xpose.msra.mxu0 0
      %776 = vmatprep.subr.bf16.mxu0 0
      %777 = vmatpush1.bf16.xpose.msra.mxu0 0
      %778 = vmatprep.subr.bf16.mxu0 0
      %779 = vmatpush1.bf16.xpose.msra.mxu0 0
      %780 = vmatprep.subr.bf16.mxu0 0
      %781 = vmatpush1.bf16.xpose.msra.mxu0 0
      %782 = vmatprep.mubr.bf16.mxu0 0
      %783 = vmatmul.mubr.bf16.gmra.mrb[0].mxu0 %v745
      %v784 = vpop.f32.mrb[0].mxu0
      %v785 = vadd.f32 0.0, %v784
      %v786 = vpop.f32.mrb[0].mxu0
      %v787 = vpop.f32.mrb[0].mxu0
      %v788 = vpop.f32.mrb[0].mxu0
      %789 = vdwg.mxu0
      %v790 = vmul.f32 %v785, 0.35355338
      %v791 = vsel %vm459, -1e+18, %v790
      %v792 = vld [vmem:[#allocation2] sm:$0xff]
      %v793 = vsel %vm515, %v791, -inf
      %794 = vmax.xlane.f32.xlu0 %v793
      %v795 = vpop.xlane.xlu0 %794
      %v796 = vmax.f32 %v792, %v795
      %v797 = vsub.f32 %v792, %v796
      %v798 = vmul.f32 %v797, 1.442695
      %v799 = vpow.pop %v798
      %801 = vset.pattern.permute.xlu0 2
      %802 = vperm.xlu0 %801, %v796
      %v803 = vpop.permute.xlu0 %802
      %v805 = vsub.f32 %v791, %v803
      %v806 = vmul.f32 %v805, 1.442695
      %v807 = vpow.pop %v806
      %v808 = vld [vmem:[#allocation3] sm:$0xff]
      %v809 = vmul.f32 %v799, %v808
      %v810 = vsel %vm515, %v807, 0.0
      %811 = vadd.xlane.f32.xlu0 %v810
      %v812 = vpop.xlane.xlu0 %811
      %v813 = vadd.f32 %v809, %v812
      %vm814 = vcmask 23568
      %815 = vst.msk [vmem:[#allocation3] sm:$0xff] %vm814, %v813
      %v816 = vld [vmem:[#allocation4] sm:$0xff]
      %818 = vset.pattern.permute.xlu0 2
      %819 = vperm.xlu0 %818, %v799
      %v820 = vpop.permute.xlu0 %819
      %v822 = vmul.f32 %v820, %v816
      %v823 = vpack.c.bf16 %v807, %v807
      %824 = vrot.lane.b32.xlu0 %v551, 112
      %v825 = vpop.permute.xlu0 %824
      %v828 = vsel %vm515, %v823, 0
      %830 = vmatprep.subr.bf16.mxu0 0
      %831 = vmatpush1.bf16.msra.mxu0 %v825
      %832 = vmatprep.subr.bf16.mxu0 0
      %833 = vmatpush1.bf16.msra.mxu0 0
      %834 = vmatprep.subr.bf16.mxu0 0
      %835 = vmatpush1.bf16.msra.mxu0 0
      %836 = vmatprep.subr.bf16.mxu0 0
      %837 = vmatpush1.bf16.msra.mxu0 0
      %838 = vmatprep.subr.bf16.mxu0 0
      %839 = vmatpush1.bf16.msra.mxu0 0
      %840 = vmatprep.subr.bf16.mxu0 0
      %841 = vmatpush1.bf16.msra.mxu0 0
      %842 = vmatprep.subr.bf16.mxu0 0
      %843 = vmatpush1.bf16.msra.mxu0 0
      %844 = vmatprep.subr.bf16.mxu0 0
      %845 = vmatpush1.bf16.msra.mxu0 0
      %846 = vmatprep.subr.bf16.mxu0 0
      %847 = vmatpush1.bf16.msra.mxu0 0
      %848 = vmatprep.subr.bf16.mxu0 0
      %849 = vmatpush1.bf16.msra.mxu0 0
      %850 = vmatprep.subr.bf16.mxu0 0
      %851 = vmatpush1.bf16.msra.mxu0 0
      %852 = vmatprep.subr.bf16.mxu0 0
      %853 = vmatpush1.bf16.msra.mxu0 0
      %854 = vmatprep.subr.bf16.mxu0 0
      %855 = vmatpush1.bf16.msra.mxu0 0
      %856 = vmatprep.subr.bf16.mxu0 0
      %857 = vmatpush1.bf16.msra.mxu0 0
      %858 = vmatprep.subr.bf16.mxu0 0
      %859 = vmatpush1.bf16.msra.mxu0 0
      %860 = vmatprep.subr.bf16.mxu0 0
      %861 = vmatpush1.bf16.msra.mxu0 0
      %862 = vmatprep.mubr.bf16.mxu0 0
      %863 = vmatmul.mubr.bf16.gmra.mrb[0].mxu0 %v828
      %v864 = vpop.f32.mrb[0].mxu0
      %v865 = vadd.f32 0.0, %v864
      %v866 = vpop.f32.mrb[0].mxu0
      %v867 = vpop.f32.mrb[0].mxu0
      %v868 = vpop.f32.mrb[0].mxu0
      %869 = vdwg.mxu0
      %871 = vrot.lane.b32.xlu0 %v865, 16
      %v872 = vpop.permute.xlu0 %871
      %v874 = vadd.f32 %v822, %v872
      %vm875 = vcmask 195712
      %876 = vst.msk [vmem:[#allocation4] sm:$0xff] %vm875, %v874
      %877 = vst.msk [vmem:[#allocation2] sm:$0xff] %vm814, %v796
      %878 = vrot.lane.b32.xlu0 %v601, 104
      %v879 = vpop.permute.xlu0 %878
      %880 = vrot.lane.b32.xlu0 %v464, 104
      %v881 = vpop.permute.xlu0 %880
      %v883 = vsel %vm465, %v879, 0
      %v886 = vsel %vm465, %v881, 0
      %888 = vmatprep.subr.bf16.mxu0 0
      %889 = vmatpush1.bf16.xpose.msra.mxu0 %v886
      %890 = vmatprep.subr.bf16.mxu0 0
      %891 = vmatpush1.bf16.xpose.msra.mxu0 0
      %892 = vmatprep.subr.bf16.mxu0 0
      %893 = vmatpush1.bf16.xpose.msra.mxu0 0
      %894 = vmatprep.subr.bf16.mxu0 0
      %895 = vmatpush1.bf16.xpose.msra.mxu0 0
      %896 = vmatprep.subr.bf16.mxu0 0
      %897 = vmatpush1.bf16.xpose.msra.mxu0 0
      %898 = vmatprep.subr.bf16.mxu0 0
      %899 = vmatpush1.bf16.xpose.msra.mxu0 0
      %900 = vmatprep.subr.bf16.mxu0 0
      %901 = vmatpush1.bf16.xpose.msra.mxu0 0
      %902 = vmatprep.subr.bf16.mxu0 0
      %903 = vmatpush1.bf16.xpose.msra.mxu0 0
      %904 = vmatprep.subr.bf16.mxu0 0
      %905 = vmatpush1.bf16.xpose.msra.mxu0 0
      %906 = vmatprep.subr.bf16.mxu0 0
      %907 = vmatpush1.bf16.xpose.msra.mxu0 0
      %908 = vmatprep.subr.bf16.mxu0 0
      %909 = vmatpush1.bf16.xpose.msra.mxu0 0
      %910 = vmatprep.subr.bf16.mxu0 0
      %911 = vmatpush1.bf16.xpose.msra.mxu0 0
      %912 = vmatprep.subr.bf16.mxu0 0
      %913 = vmatpush1.bf16.xpose.msra.mxu0 0
      %914 = vmatprep.subr.bf16.mxu0 0
      %915 = vmatpush1.bf16.xpose.msra.mxu0 0
      %916 = vmatprep.subr.bf16.mxu0 0
      %917 = vmatpush1.bf16.xpose.msra.mxu0 0
      %918 = vmatprep.subr.bf16.mxu0 0
      %919 = vmatpush1.bf16.xpose.msra.mxu0 0
      %920 = vmatprep.mubr.bf16.mxu0 0
      %921 = vmatmul.mubr.bf16.gmra.mrb[0].mxu0 %v883
      %v922 = vpop.f32.mrb[0].mxu0
      %v923 = vadd.f32 0.0, %v922
      %v924 = vpop.f32.mrb[0].mxu0
      %v925 = vpop.f32.mrb[0].mxu0
      %v926 = vpop.f32.mrb[0].mxu0
      %927 = vdwg.mxu0
      %v928 = vmul.f32 %v923, 0.35355338
      %v929 = vsel %vm459, -1e+18, %v928
      %v930 = vld [vmem:[#allocation2] sm:$0xff]
      %v931 = vsel %vm515, %v929, -inf
      %932 = vmax.xlane.f32.xlu0 %v931
      %v933 = vpop.xlane.xlu0 %932
      %v934 = vmax.f32 %v930, %v933
      %v935 = vsub.f32 %v930, %v934
      %v936 = vmul.f32 %v935, 1.442695
      %v937 = vpow.pop %v936
      %939 = vset.pattern.permute.xlu0 3
      %940 = vperm.xlu0 %939, %v934
      %v941 = vpop.permute.xlu0 %940
      %v943 = vsub.f32 %v929, %v941
      %v944 = vmul.f32 %v943, 1.442695
      %v945 = vpow.pop %v944
      %v946 = vld [vmem:[#allocation3] sm:$0xff]
      %v947 = vmul.f32 %v937, %v946
      %v948 = vsel %vm515, %v945, 0.0
      %949 = vadd.xlane.f32.xlu0 %v948
      %v950 = vpop.xlane.xlu0 %949
      %v951 = vadd.f32 %v947, %v950
      %vm952 = vcmask 31768
      %953 = vst.msk [vmem:[#allocation3] sm:$0xff] %vm952, %v951
      %v954 = vld [vmem:[#allocation4] sm:$0xff]
      %956 = vset.pattern.permute.xlu0 3
      %957 = vperm.xlu0 %956, %v937
      %v958 = vpop.permute.xlu0 %957
      %v960 = vmul.f32 %v958, %v954
      %v961 = vpack.c.bf16 %v945, %v945
      %962 = vrot.lane.b32.xlu0 %v551, 104
      %v963 = vpop.permute.xlu0 %962
      %v966 = vsel %vm515, %v961, 0
      %968 = vmatprep.subr.bf16.mxu0 0
      %969 = vmatpush1.bf16.msra.mxu0 %v963
      %970 = vmatprep.subr.bf16.mxu0 0
      %971 = vmatpush1.bf16.msra.mxu0 0
      %972 = vmatprep.subr.bf16.mxu0 0
      %973 = vmatpush1.bf16.msra.mxu0 0
      %974 = vmatprep.subr.bf16.mxu0 0
      %975 = vmatpush1.bf16.msra.mxu0 0
      %976 = vmatprep.subr.bf16.mxu0 0
      %977 = vmatpush1.bf16.msra.mxu0 0
      %978 = vmatprep.subr.bf16.mxu0 0
      %979 = vmatpush1.bf16.msra.mxu0 0
      %980 = vmatprep.subr.bf16.mxu0 0
      %981 = vmatpush1.bf16.msra.mxu0 0
      %982 = vmatprep.subr.bf16.mxu0 0
      %983 = vmatpush1.bf16.msra.mxu0 0
      %984 = vmatprep.subr.bf16.mxu0 0
      %985 = vmatpush1.bf16.msra.mxu0 0
      %986 = vmatprep.subr.bf16.mxu0 0
      %987 = vmatpush1.bf16.msra.mxu0 0
      %988 = vmatprep.subr.bf16.mxu0 0
      %989 = vmatpush1.bf16.msra.mxu0 0
      %990 = vmatprep.subr.bf16.mxu0 0
      %991 = vmatpush1.bf16.msra.mxu0 0
      %992 = vmatprep.subr.bf16.mxu0 0
      %993 = vmatpush1.bf16.msra.mxu0 0
      %994 = vmatprep.subr.bf16.mxu0 0
      %995 = vmatpush1.bf16.msra.mxu0 0
      %996 = vmatprep.subr.bf16.mxu0 0
      %997 = vmatpush1.bf16.msra.mxu0 0
      %998 = vmatprep.subr.bf16.mxu0 0
      %999 = vmatpush1.bf16.msra.mxu0 0
      %1000 = vmatprep.mubr.bf16.mxu0 0
      %1001 = vmatmul.mubr.bf16.gmra.mrb[0].mxu0 %v966
      %v1002 = vpop.f32.mrb[0].mxu0
      %v1003 = vadd.f32 0.0, %v1002
      %v1004 = vpop.f32.mrb[0].mxu0
      %v1005 = vpop.f32.mrb[0].mxu0
      %v1006 = vpop.f32.mrb[0].mxu0
      %1007 = vdwg.mxu0
      %1009 = vrot.lane.b32.xlu0 %v1003, 24
      %v1010 = vpop.permute.xlu0 %1009
      %v1012 = vadd.f32 %v960, %v1010
      %vm1013 = vcmask 261312
      %1014 = vst.msk [vmem:[#allocation4] sm:$0xff] %vm1013, %v1012
      %1015 = vst.msk [vmem:[#allocation2] sm:$0xff] %vm952, %v934
      // Predicated region
      $region53: #{transformer_decoder_forward.17} parent=47 // pred_check
        %p1016 = pneg %p438
      $region54: #{transformer_decoder_forward.17} parent=47 // pred_check_branch
        %1018 = sbr.rel (%p1016) target = $region56
      $region55: #{transformer_decoder_forward.17} parent=47 // pred_region
        %v1019 = vld [vmem:[#allocation4] sm:$0xff]
        %v1020 = vld [vmem:[#allocation3] sm:$0xff]
        %1022 = vset.pattern.permute.xlu0 0
        %1023 = vperm.xlu0 %1022, %v1020
        %v1024 = vpop.permute.xlu0 %1023
        %v1026 = vrcp.pop %v1024
        %v1027 = vmul.f32 %v1019, %v1026
        %1028 = vst.msk [vmem:[#allocation4] sm:$0xff] %vm465, %v1027
        %v1029 = vld [vmem:[#allocation4] sm:$0xff]
        %v1030 = vld [vmem:[#allocation3] sm:$0xff]
        %1032 = vset.pattern.permute.xlu0 1
        %1033 = vperm.xlu0 %1032, %v1030
        %v1034 = vpop.permute.xlu0 %1033
        %v1036 = vrcp.pop %v1034
        %v1037 = vmul.f32 %v1029, %v1036
        %1038 = vst.msk [vmem:[#allocation4] sm:$0xff] %vm737, %v1037
        %v1039 = vld [vmem:[#allocation4] sm:$0xff]
        %v1040 = vld [vmem:[#allocation3] sm:$0xff]
        %1042 = vset.pattern.permute.xlu0 2
        %1043 = vperm.xlu0 %1042, %v1040
        %v1044 = vpop.permute.xlu0 %1043
        %v1046 = vrcp.pop %v1044
        %v1047 = vmul.f32 %v1039, %v1046
        %1048 = vst.msk [vmem:[#allocation4] sm:$0xff] %vm875, %v1047
        %v1049 = vld [vmem:[#allocation4] sm:$0xff]
        %v1050 = vld [vmem:[#allocation3] sm:$0xff]
        %1052 = vset.pattern.permute.xlu0 3
        %1053 = vperm.xlu0 %1052, %v1050
        %v1054 = vpop.permute.xlu0 %1053
        %v1056 = vrcp.pop %v1054
        %v1057 = vmul.f32 %v1049, %v1056
        %1058 = vst.msk [vmem:[#allocation4] sm:$0xff] %vm1013, %v1057
        %v1059 = vld [vmem:[#allocation4] sm:$0xff]
        %v1060 = vpack.c.bf16 %v1059, %v1059
        %v1061 = vld [vmem:[%s5] sm:$0xf]
        %v1062 = vld [vmem:[%s5 + $0x4] sm:$0xf]
        %v1063 = vld [vmem:[%s5 + $0x8] sm:$0xf]
        %v1064 = vld [vmem:[%s5 + $0xc] sm:$0xf]
        %v1065 = vld [vmem:[%s6] sm:$0x1]
        %v1067 = vlaneseq
        %v1068 = vshrl.u32 %v1067, 7
        %v1069 = vsub.s32 0, %v1068
        %v1070 = vrot.slane %v1065, %v1069
        %v1076 = vunpack.c.l.b16 %v1061
        %v1077 = vunpack.c.l.b16 %v1062
        %v1078 = vunpack.c.l.b16 %v1063
        %v1079 = vunpack.c.l.b16 %v1064
        %v1080 = vpack.c.b16 %v1077, %v1076
        %v1081 = vpack.c.b16 %v1079, %v1078
        %vm1084 = vcmask 261120
        %v1086 = vsel %vm1084, %v1060, 0
        %1088 = vmatprep.subr.bf16.mxu0 0
        %1089 = vmatpush1.bf16.msra.mxu0 %v1080
        %1090 = vmatprep.subr.bf16.mxu0 0
        %1091 = vmatpush1.bf16.msra.mxu0 %v1081
        %1092 = vmatprep.subr.bf16.mxu0 0
        %1093 = vmatpush1.bf16.msra.mxu0 0
        %1094 = vmatprep.subr.bf16.mxu0 0
        %1095 = vmatpush1.bf16.msra.mxu0 0
        %1096 = vmatprep.subr.bf16.mxu0 0
        %1097 = vmatpush1.bf16.msra.mxu0 0
        %1098 = vmatprep.subr.bf16.mxu0 0
        %1099 = vmatpush1.bf16.msra.mxu0 0
        %1100 = vmatprep.subr.bf16.mxu0 0
        %1101 = vmatpush1.bf16.msra.mxu0 0
        %1102 = vmatprep.subr.bf16.mxu0 0
        %1103 = vmatpush1.bf16.msra.mxu0 0
        %1104 = vmatprep.subr.bf16.mxu0 0
        %1105 = vmatpush1.bf16.msra.mxu0 0
        %1106 = vmatprep.subr.bf16.mxu0 0
        %1107 = vmatpush1.bf16.msra.mxu0 0
        %1108 = vmatprep.subr.bf16.mxu0 0
        %1109 = vmatpush1.bf16.msra.mxu0 0
        %1110 = vmatprep.subr.bf16.mxu0 0
        %1111 = vmatpush1.bf16.msra.mxu0 0
        %1112 = vmatprep.subr.bf16.mxu0 0
        %1113 = vmatpush1.bf16.msra.mxu0 0
        %1114 = vmatprep.subr.bf16.mxu0 0
        %1115 = vmatpush1.bf16.msra.mxu0 0
        %1116 = vmatprep.subr.bf16.mxu0 0
        %1117 = vmatpush1.bf16.msra.mxu0 0
        %1118 = vmatprep.subr.bf16.mxu0 0
        %1119 = vmatpush1.bf16.msra.mxu0 0
        %1120 = vmatprep.mubr.bf16.mxu0 0
        %1121 = vmatmul.mubr.bf16.gmra.mrb[0].mxu0 %v1086
        %v1122 = vpop.f32.mrb[0].mxu0
        %v1123 = vadd.f32 %v1070, %v1122
        %v1124 = vpop.f32.mrb[0].mxu0
        %v1125 = vpop.f32.mrb[0].mxu0
        %v1126 = vpop.f32.mrb[0].mxu0
        %1127 = vdwg.mxu0
        %v1128 = vld [vmem:[%s402] sm:$0xff]
        %v1129 = vadd.f32 %v1123, %v1128
        %1130 = vst.msk [vmem:[%s436] sm:$0xff] %vm1084, %v1129
      $region56: #{transformer_decoder_forward.17} parent=47 // pred_fallthru
        _
      %p1131 = scmp.lt.s32.totalorder %s23, 1
      %s1132 = scalar_select %p1131, %s23, 1
      %p1133 = scmp.lt.s32.totalorder %s24, 0
      %s1134 = scalar_select %p1133, %s24, 0
      %s1135 = sadd.s32 %s1134, %s1132
      %s1136 = smul.addr %s1135, 8
      %s1137 = scalar_lea.vmem %s7, %s1136
      // Predicated region
      $region57: #{transformer_decoder_forward.17} parent=47 // pred_check
        %p1138 = pneg %p239
      $region58: #{transformer_decoder_forward.17} parent=47 // pred_check_branch
        %1140 = sbr.rel (%p1138) target = $region60
      $region59: #{transformer_decoder_forward.17} parent=47 // pred_region
        _
      $region60: #{transformer_decoder_forward.17} parent=47 // pred_fallthru
        _
    $region48: #{transformer_decoder_forward.17} parent=5 // pred_fallthru
      _
    %p1141 = scmp.le.s32.totalorder 2, %s13
    // Predicated region
    $region61: #{transformer_decoder_forward.17} parent=5 // pred_check
      %p1142 = pneg %p1141
    $region62: #{transformer_decoder_forward.17} parent=5 // pred_check_branch
      %1144 = sbr.rel (%p1142) target = $region64
    $region63: #{transformer_decoder_forward.17} parent=5 // pred_region
      %s1145 = ssub.s32 %s13, 2
      // Predicated region
      $region65: #{transformer_decoder_forward.17} parent=63 // pred_check
        %p1146 = pneg %p245
      $region66: #{transformer_decoder_forward.17} parent=63 // pred_check_branch
        %1148 = sbr.rel (%p1146) target = $region68
      $region67: #{transformer_decoder_forward.17} parent=63 // pred_region
        %p1149 = scmp.lt.s32.totalorder %s26, 1
        %s1150 = scalar_select %p1149, %s26, 1
        %p1151 = scmp.lt.s32.totalorder %s27, 0
        %s1152 = scalar_select %p1151, %s27, 0
        %s1153 = sadd.s32 %s1152, %s1150
        %s1154 = smul.addr %s1153, 8
        %s1155 = scalar_lea.vmem %s7, %s1154
      $region68: #{transformer_decoder_forward.17} parent=63 // pred_fallthru
        _
    $region64: #{transformer_decoder_forward.17} parent=5 // pred_fallthru
      _
  $region6: #{transformer_decoder_forward.17} parent=0 // loop_footer
    %s17 = sadd.s32 1, %s13
  $region7: #{transformer_decoder_forward.17} parent=0 // loop_footer_branch
    %12 = sbr.rel target = $region3
  $region8: #{transformer_decoder_forward.17} parent=0 // loop_exit
    _

</llo_original>
